<compile_context>
chip_gen: v6e
topology: v6e:2x2x1
jax: 0.10.0
libtpu: 0.0.40
codegen_flags: <defaults>
</compile_context>

<pallas_src>
import functools

import jax
import jax.numpy as jnp
from jax import lax
from jax.experimental import pallas as pl
from jax.experimental.pallas import tpu as pltpu


# ----------------------------- in-kernel math helpers -----------------------------

def _layer_norm(x, w, b, eps):
    mu = jnp.mean(x, axis=-1, keepdims=True)
    var = jnp.mean(jnp.square(x - mu), axis=-1, keepdims=True)
    return (x - mu) * lax.rsqrt(var + eps) * w + b


def _attention(q, k, v, w_out_t, *, nhead, B, Tq, Skv):
    """Multi-head attention core on batch-folded rows (no masks, eval mode).

    q: (B*Tq, D), k/v: (B*Skv, D), w_out_t: (D, D) already transposed.
    Returns (B*Tq, D); the output projection is folded into the per-head loop so no
    lane-axis concatenation of hd-wide head outputs is ever materialized.
    """
    D = q.shape[-1]
    hd = D // nhead
    scale = float(hd) ** -0.5

    per_batch = []
    for b in range(B):                      # static unroll (B is small)
        q_b = q[b * Tq:(b + 1) * Tq]
        k_b = k[b * Skv:(b + 1) * Skv]
        v_b = v[b * Skv:(b + 1) * Skv]
        acc = None
        for h in range(nhead):              # static unroll over heads
            lo = h * hd
            q_h = q_b[:, lo:lo + hd] * scale
            # q_h @ k_h^T via dot_general contracting the last dims (no explicit transpose).
            s = lax.dot_general(q_h, k_b[:, lo:lo + hd],
                                (((1,), (1,)), ((), ())),
                                preferred_element_type=jnp.float32)            # (Tq, Skv)
            s = s - jnp.max(s, axis=-1, keepdims=True)
            p = jnp.exp(s)
            p = p * pl.reciprocal(jnp.sum(p, axis=-1, keepdims=True), approx=True)
            hv = jnp.dot(p, v_b[:, lo:lo + hd],
                         preferred_element_type=jnp.float32)                   # (Tq, hd)
            contrib = jnp.dot(hv, w_out_t[lo:lo + hd, :],
                              preferred_element_type=jnp.float32)              # (Tq, D)
            acc = contrib if acc is None else acc + contrib
        per_batch.append(acc)
    return jnp.concatenate(per_batch, axis=0)        # rows stay batch-major: r = b*Tq + t


# ----------------------------------- Pallas kernel ---------------------------------

def _decoder_layer_kernel(tgt_ref, mem_ref,
                          sa_wqkv_t, sa_bqkv, sa_wout_t, sa_bout,
                          ca_wq_t, ca_bq, ca_wkv_t, ca_bkv, ca_wout_t, ca_bout,
                          w1_t, b1, w2_t, b2,
                          n1_w, n1_b, n2_w, n2_b, n3_w, n3_b,
                          out_ref, *, nhead, eps):
    B, T, D = tgt_ref.shape
    S = mem_ref.shape[1]

    x = tgt_ref[...].reshape(B * T, D)        # fold batch into the row (sublane) dim
    mem = mem_ref[...].reshape(B * S, D)

    # ---- self-attention block (dropout1 = identity in eval) ----
    qkv = jnp.dot(x, sa_wqkv_t[...], preferred_element_type=jnp.float32) + sa_bqkv[...]
    sa = _attention(qkv[:, :D], qkv[:, D:2 * D], qkv[:, 2 * D:], sa_wout_t[...],
                    nhead=nhead, B=B, Tq=T, Skv=T) + sa_bout[...]
    x = _layer_norm(x + sa, n1_w[...], n1_b[...], eps)

    # ---- cross-attention block (dropout2 = identity) ----
    q = jnp.dot(x, ca_wq_t[...], preferred_element_type=jnp.float32) + ca_bq[...]
    kv = jnp.dot(mem, ca_wkv_t[...], preferred_element_type=jnp.float32) + ca_bkv[...]
    ca = _attention(q, kv[:, :D], kv[:, D:], ca_wout_t[...],
                    nhead=nhead, B=B, Tq=T, Skv=S) + ca_bout[...]
    x = _layer_norm(x + ca, n2_w[...], n2_b[...], eps)

    # ---- feed-forward: linear1 -> relu -> (dropout) -> linear2 -> (dropout3) ----
    h = jnp.maximum(jnp.dot(x, w1_t[...], preferred_element_type=jnp.float32) + b1[...], 0.0)
    ff = jnp.dot(h, w2_t[...], preferred_element_type=jnp.float32) + b2[...]
    x = _layer_norm(x + ff, n3_w[...], n3_b[...], eps)

    out_ref[...] = x.reshape(B, T, D)


# ----------------------------------- host wrapper -----------------------------------

_PARAM_ORDER = ("sa_wqkv_t", "sa_bqkv", "sa_wout_t", "sa_bout",
                "ca_wq_t", "ca_bq", "ca_wkv_t", "ca_bkv", "ca_wout_t", "ca_bout",
                "w1_t", "b1", "w2_t", "b2",
                "n1_w", "n1_b", "n2_w", "n2_b", "n3_w", "n3_b")


def _prepare_params(params):
    """Pre-transpose / pre-split PyTorch-layout parameters once on the host side."""
    D = params["sa_w_out"].shape[0]
    f32 = lambda a: jnp.asarray(a, jnp.float32)
    row = lambda a: f32(a).reshape(1, -1)
    return {
        "sa_wqkv_t": f32(params["sa_w_in"]).T,          # (D, 3D) fused QKV
        "sa_bqkv":   row(params["sa_b_in"]),
        "sa_wout_t": f32(params["sa_w_out"]).T,         # (D, D)
        "sa_bout":   row(params["sa_b_out"]),
        "ca_wq_t":   f32(params["ca_w_in"][:D]).T,      # (D, D)   query projection
        "ca_bq":     row(params["ca_b_in"])[:, :D],
        "ca_wkv_t":  f32(params["ca_w_in"][D:]).T,      # (D, 2D)  fused K/V projection
        "ca_bkv":    row(params["ca_b_in"])[:, D:],
        "ca_wout_t": f32(params["ca_w_out"]).T,
        "ca_bout":   row(params["ca_b_out"]),
        "w1_t": f32(params["w1"]).T, "b1": row(params["b1"]),
        "w2_t": f32(params["w2"]).T, "b2": row(params["b2"]),
        "n1_w": row(params["n1_w"]), "n1_b": row(params["n1_b"]),
        "n2_w": row(params["n2_w"]), "n2_b": row(params["n2_b"]),
        "n3_w": row(params["n3_w"]), "n3_b": row(params["n3_b"]),
    }


def transformer_decoder_layer(tgt, memory, params, *, nhead, eps=1e-5, batch_first=False):
    """Inference forward of nn.TransformerDecoderLayer (no masks, dropout = identity).

    Default (batch_first=False, PyTorch default): tgt (T, B, D), memory (S, B, D).
    Pass batch_first=True with (B, T, D)/(B, S, D) inputs to skip the boundary transposes.
    """
    if batch_first:
        tgt_b, mem_b = tgt, memory
    else:
        tgt_b = jnp.transpose(tgt, (1, 0, 2))      # (B, T, D)
        mem_b = jnp.transpose(memory, (1, 0, 2))   # (B, S, D)

    B, T, D = tgt_b.shape

    prepped = _prepare_params(params)
    param_list = [prepped[k] for k in _PARAM_ORDER]

    kernel = functools.partial(_decoder_layer_kernel, nhead=nhead, eps=eps)
    # Single invocation: no grid; every operand is one whole VMEM-resident block.
    out = pl.pallas_call(
        kernel,
        out_shape=jax.ShapeDtypeStruct((B, T, D), jnp.float32),
        compiler_params=pltpu.CompilerParams(vmem_limit_bytes=32 * 1024 * 1024),
    )(tgt_b.astype(jnp.float32), mem_b.astype(jnp.float32), *param_list)

    if batch_first:
        return out
    return jnp.transpose(out, (1, 0, 2))           # back to (T, B, D)


# ------------------------------- pure-JAX reference --------------------------------

def _ref_forward(tgt, memory, p, *, nhead, eps=1e-5):
    def ln(x, w, b):
        mu = x.mean(-1, keepdims=True)
        var = ((x - mu) ** 2).mean(-1, keepdims=True)
        return (x - mu) / jnp.sqrt(var + eps) * w + b

    def mha(q_in, kv_in, w_in, b_in, w_out, b_out):
        D = q_in.shape[-1]
        hd = D // nhead
        q = q_in @ w_in[:D].T + b_in[0, :D]
        k = kv_in @ w_in[D:2 * D].T + b_in[0, D:2 * D]
        v = kv_in @ w_in[2 * D:].T + b_in[0, 2 * D:]
        T_, B_, _ = q.shape
        S_ = k.shape[0]
        qh = q.reshape(T_, B_, nhead, hd).transpose(1, 2, 0, 3)
        kh = k.reshape(S_, B_, nhead, hd).transpose(1, 2, 0, 3)
        vh = v.reshape(S_, B_, nhead, hd).transpose(1, 2, 0, 3)
        s = jnp.einsum('bhtd,bhsd->bhts', qh, kh) / (hd ** 0.5)
        pm = jax.nn.softmax(s, axis=-1)
        o = jnp.einsum('bhts,bhsd->bhtd', pm, vh)
        o = o.transpose(2, 0, 1, 3).reshape(T_, B_, D)
        return o @ w_out.T + b_out[0]

    x = tgt
    x = ln(x + mha(x, x, p["sa_w_in"], p["sa_b_in"], p["sa_w_out"], p["sa_b_out"]),
           p["n1_w"][0], p["n1_b"][0])
    x = ln(x + mha(x, memory, p["ca_w_in"], p["ca_b_in"], p["ca_w_out"], p["ca_b_out"]),
           p["n2_w"][0], p["n2_b"][0])
    h = jnp.maximum(x @ p["w1"].T + p["b1"][0], 0.0)
    ff = h @ p["w2"].T + p["b2"][0]
    return ln(x + ff, p["n3_w"][0], p["n3_b"][0])


# ---------------------------------------- main --------------------------------------

if __name__ == "__main__":
    d_model = 32
    nhead = 4
    dim_ff = 64
    T, S, B = 8, 8, 2

    key = jax.random.PRNGKey(0)
    ks = jax.random.split(key, 16)

    def w(k, shape, scale=0.1):
        return (scale * jax.random.normal(k, shape)).astype(jnp.float32)

    params = {
        # self-attention (PyTorch MultiheadAttention layout)
        "sa_w_in":  w(ks[0], (3 * d_model, d_model)),
        "sa_b_in":  w(ks[1], (1, 3 * d_model), 0.02),
        "sa_w_out": w(ks[2], (d_model, d_model)),
        "sa_b_out": w(ks[3], (1, d_model), 0.02),
        # cross-attention
        "ca_w_in":  w(ks[4], (3 * d_model, d_model)),
        "ca_b_in":  w(ks[5], (1, 3 * d_model), 0.02),
        "ca_w_out": w(ks[6], (d_model, d_model)),
        "ca_b_out": w(ks[7], (1, d_model), 0.02),
        # feed-forward
        "w1": w(ks[8], (dim_ff, d_model)),
        "b1": w(ks[9], (1, dim_ff), 0.02),
        "w2": w(ks[10], (d_model, dim_ff)),
        "b2": w(ks[11], (1, d_model), 0.02),
        # layer norms (PyTorch default: weight=1, bias=0)
        "n1_w": jnp.ones((1, d_model), jnp.float32), "n1_b": jnp.zeros((1, d_model), jnp.float32),
        "n2_w": jnp.ones((1, d_model), jnp.float32), "n2_b": jnp.zeros((1, d_model), jnp.float32),
        "n3_w": jnp.ones((1, d_model), jnp.float32), "n3_b": jnp.zeros((1, d_model), jnp.float32),
    }

    tgt = jax.random.normal(ks[12], (T, B, d_model), dtype=jnp.float32)
    memory = jax.random.normal(ks[13], (S, B, d_model), dtype=jnp.float32)

    # Default PyTorch seq-first layout.
    out = transformer_decoder_layer(tgt, memory, params, nhead=nhead)
    out = jax.block_until_ready(out)
    assert out.shape == (T, B, d_model)

    # Zero-transpose batch-first path must produce the same numbers.
    out_bf = transformer_decoder_layer(jnp.transpose(tgt, (1, 0, 2)),
                                       jnp.transpose(memory, (1, 0, 2)),
                                       params, nhead=nhead, batch_first=True)
    out_bf = jax.block_until_ready(out_bf)
    assert jnp.allclose(out_bf, jnp.transpose(out, (1, 0, 2)), rtol=1e-6, atol=1e-6)

    # Validate against pure-JAX reference (tolerance loosened slightly for the approx
    # EUP reciprocal used in the softmax denominator).
    ref = _ref_forward(tgt, memory, params, nhead=nhead)
    max_err = float(jnp.max(jnp.abs(out - ref)))
    assert jnp.allclose(out, ref, rtol=5e-3, atol=5e-3), f"mismatch vs reference (max abs err {max_err})"

    print("KERNEL_OK")
</pallas_src>

<mosaic_0001>
module attributes {stable_mosaic.version = 11 : i64} {
  func.func @_decoder_layer_kernel(%arg0: memref<2x8x32xf32, #tpu.memory_space<vmem>>, %arg1: memref<2x8x32xf32, #tpu.memory_space<vmem>>, %arg2: memref<32x96xf32, #tpu.memory_space<vmem>>, %arg3: memref<1x96xf32, #tpu.memory_space<vmem>>, %arg4: memref<32x32xf32, #tpu.memory_space<vmem>>, %arg5: memref<1x32xf32, #tpu.memory_space<vmem>>, %arg6: memref<32x32xf32, #tpu.memory_space<vmem>>, %arg7: memref<1x32xf32, #tpu.memory_space<vmem>>, %arg8: memref<32x64xf32, #tpu.memory_space<vmem>>, %arg9: memref<1x64xf32, #tpu.memory_space<vmem>>, %arg10: memref<32x32xf32, #tpu.memory_space<vmem>>, %arg11: memref<1x32xf32, #tpu.memory_space<vmem>>, %arg12: memref<32x64xf32, #tpu.memory_space<vmem>>, %arg13: memref<1x64xf32, #tpu.memory_space<vmem>>, %arg14: memref<64x32xf32, #tpu.memory_space<vmem>>, %arg15: memref<1x32xf32, #tpu.memory_space<vmem>>, %arg16: memref<1x32xf32, #tpu.memory_space<vmem>>, %arg17: memref<1x32xf32, #tpu.memory_space<vmem>>, %arg18: memref<1x32xf32, #tpu.memory_space<vmem>>, %arg19: memref<1x32xf32, #tpu.memory_space<vmem>>, %arg20: memref<1x32xf32, #tpu.memory_space<vmem>>, %arg21: memref<1x32xf32, #tpu.memory_space<vmem>>, %arg22: memref<2x8x32xf32, #tpu.memory_space<vmem>>) attributes {dimension_semantics = [], scalar_prefetch = 0 : i64, scratch_operands = 0 : i64, tpu.core_type = #tpu.core_type<tc>} {
    %c0 = arith.constant 0 : index
    %c0_0 = arith.constant 0 : index
    %c0_1 = arith.constant 0 : index
    %0 = vector.load %arg0[%c0, %c0_0, %c0_1] : memref<2x8x32xf32, #tpu.memory_space<vmem>>, vector<2x8x32xf32>
    %1 = vector.shape_cast %0 : vector<2x8x32xf32> to vector<16x32xf32>
    %c0_2 = arith.constant 0 : index
    %c0_3 = arith.constant 0 : index
    %c0_4 = arith.constant 0 : index
    %2 = vector.load %arg1[%c0_2, %c0_3, %c0_4] : memref<2x8x32xf32, #tpu.memory_space<vmem>>, vector<2x8x32xf32>
    %3 = vector.shape_cast %2 : vector<2x8x32xf32> to vector<16x32xf32>
    %c0_5 = arith.constant 0 : index
    %c0_6 = arith.constant 0 : index
    %4 = vector.load %arg2[%c0_5, %c0_6] : memref<32x96xf32, #tpu.memory_space<vmem>>, vector<32x96xf32>
    %cst = arith.constant dense<0.000000e+00> : vector<16x96xf32>
    %5 = tpu.matmul %1, %4, %cst {dimension_numbers = #tpu.dot_dimension_numbers<[1], [0], [0], [1], [0, 0, 1, 1], [], []>} : vector<16x32xf32>, vector<32x96xf32>, vector<16x96xf32> -> vector<16x96xf32>
    %c0_7 = arith.constant 0 : index
    %c0_8 = arith.constant 0 : index
    %6 = vector.load %arg3[%c0_7, %c0_8] : memref<1x96xf32, #tpu.memory_space<vmem>>, vector<1x96xf32>
    %7 = vector.broadcast %6 : vector<1x96xf32> to vector<16x96xf32>
    %8 = arith.addf %5, %7 : vector<16x96xf32>
    %9 = vector.extract_strided_slice %8 {offsets = [0, 0], sizes = [16, 32], strides = [1, 1]} : vector<16x96xf32> to vector<16x32xf32>
    %10 = vector.extract_strided_slice %8 {offsets = [0, 32], sizes = [16, 32], strides = [1, 1]} : vector<16x96xf32> to vector<16x32xf32>
    %11 = vector.extract_strided_slice %8 {offsets = [0, 64], sizes = [16, 32], strides = [1, 1]} : vector<16x96xf32> to vector<16x32xf32>
    %c0_9 = arith.constant 0 : index
    %c0_10 = arith.constant 0 : index
    %12 = vector.load %arg4[%c0_9, %c0_10] : memref<32x32xf32, #tpu.memory_space<vmem>>, vector<32x32xf32>
    %13 = vector.extract_strided_slice %9 {offsets = [0, 0], sizes = [8, 32], strides = [1, 1]} : vector<16x32xf32> to vector<8x32xf32>
    %14 = vector.extract_strided_slice %10 {offsets = [0, 0], sizes = [8, 32], strides = [1, 1]} : vector<16x32xf32> to vector<8x32xf32>
    %15 = vector.extract_strided_slice %11 {offsets = [0, 0], sizes = [8, 32], strides = [1, 1]} : vector<16x32xf32> to vector<8x32xf32>
    %16 = vector.extract_strided_slice %13 {offsets = [0, 0], sizes = [8, 8], strides = [1, 1]} : vector<8x32xf32> to vector<8x8xf32>
    %cst_11 = arith.constant 0.353553385 : f32
    %17 = vector.broadcast %cst_11 : f32 to vector<8x8xf32>
    %18 = arith.mulf %16, %17 : vector<8x8xf32>
    %19 = vector.extract_strided_slice %14 {offsets = [0, 0], sizes = [8, 8], strides = [1, 1]} : vector<8x32xf32> to vector<8x8xf32>
    %cst_12 = arith.constant dense<0.000000e+00> : vector<8x8xf32>
    %20 = tpu.matmul %18, %19, %cst_12 {dimension_numbers = #tpu.dot_dimension_numbers<[1], [1], [0], [0], [0, 0, 1, 0], [], []>} : vector<8x8xf32>, vector<8x8xf32>, vector<8x8xf32> -> vector<8x8xf32>
    %cst_13 = arith.constant dense<0xFF800000> : vector<8xf32>
    %21 = vector.multi_reduction <maximumf>, %20, %cst_13 [1] : vector<8x8xf32> to vector<8xf32>
    %22 = vector.shape_cast %21 : vector<8xf32> to vector<8x1xf32>
    %23 = vector.broadcast %22 : vector<8x1xf32> to vector<8x8xf32>
    %24 = arith.subf %20, %23 : vector<8x8xf32>
    %25 = math.exp %24 : vector<8x8xf32>
    %cst_14 = arith.constant dense<0.000000e+00> : vector<8xf32>
    %26 = vector.multi_reduction <add>, %25, %cst_14 [1] : vector<8x8xf32> to vector<8xf32>
    %27 = vector.shape_cast %26 : vector<8xf32> to vector<8x1xf32>
    %28 = tpu.reciprocal %27 {approx = true} : vector<8x1xf32> -> vector<8x1xf32>
    %29 = vector.broadcast %28 : vector<8x1xf32> to vector<8x8xf32>
    %30 = arith.mulf %25, %29 : vector<8x8xf32>
    %31 = vector.extract_strided_slice %15 {offsets = [0, 0], sizes = [8, 8], strides = [1, 1]} : vector<8x32xf32> to vector<8x8xf32>
    %cst_15 = arith.constant dense<0.000000e+00> : vector<8x8xf32>
    %32 = tpu.matmul %30, %31, %cst_15 {dimension_numbers = #tpu.dot_dimension_numbers<[1], [0], [0], [1], [0, 0, 1, 1], [], []>} : vector<8x8xf32>, vector<8x8xf32>, vector<8x8xf32> -> vector<8x8xf32>
    %33 = vector.extract_strided_slice %12 {offsets = [0, 0], sizes = [8, 32], strides = [1, 1]} : vector<32x32xf32> to vector<8x32xf32>
    %cst_16 = arith.constant dense<0.000000e+00> : vector<8x32xf32>
    %34 = tpu.matmul %32, %33, %cst_16 {dimension_numbers = #tpu.dot_dimension_numbers<[1], [0], [0], [1], [0, 0, 1, 1], [], []>} : vector<8x8xf32>, vector<8x32xf32>, vector<8x32xf32> -> vector<8x32xf32>
    %35 = vector.extract_strided_slice %13 {offsets = [0, 8], sizes = [8, 8], strides = [1, 1]} : vector<8x32xf32> to vector<8x8xf32>
    %cst_17 = arith.constant 0.353553385 : f32
    %36 = vector.broadcast %cst_17 : f32 to vector<8x8xf32>
    %37 = arith.mulf %35, %36 : vector<8x8xf32>
    %38 = vector.extract_strided_slice %14 {offsets = [0, 8], sizes = [8, 8], strides = [1, 1]} : vector<8x32xf32> to vector<8x8xf32>
    %cst_18 = arith.constant dense<0.000000e+00> : vector<8x8xf32>
    %39 = tpu.matmul %37, %38, %cst_18 {dimension_numbers = #tpu.dot_dimension_numbers<[1], [1], [0], [0], [0, 0, 1, 0], [], []>} : vector<8x8xf32>, vector<8x8xf32>, vector<8x8xf32> -> vector<8x8xf32>
    %cst_19 = arith.constant dense<0xFF800000> : vector<8xf32>
    %40 = vector.multi_reduction <maximumf>, %39, %cst_19 [1] : vector<8x8xf32> to vector<8xf32>
    %41 = vector.shape_cast %40 : vector<8xf32> to vector<8x1xf32>
    %42 = vector.broadcast %41 : vector<8x1xf32> to vector<8x8xf32>
    %43 = arith.subf %39, %42 : vector<8x8xf32>
    %44 = math.exp %43 : vector<8x8xf32>
    %cst_20 = arith.constant dense<0.000000e+00> : vector<8xf32>
    %45 = vector.multi_reduction <add>, %44, %cst_20 [1] : vector<8x8xf32> to vector<8xf32>
    %46 = vector.shape_cast %45 : vector<8xf32> to vector<8x1xf32>
    %47 = tpu.reciprocal %46 {approx = true} : vector<8x1xf32> -> vector<8x1xf32>
    %48 = vector.broadcast %47 : vector<8x1xf32> to vector<8x8xf32>
    %49 = arith.mulf %44, %48 : vector<8x8xf32>
    %50 = vector.extract_strided_slice %15 {offsets = [0, 8], sizes = [8, 8], strides = [1, 1]} : vector<8x32xf32> to vector<8x8xf32>
    %cst_21 = arith.constant dense<0.000000e+00> : vector<8x8xf32>
    %51 = tpu.matmul %49, %50, %cst_21 {dimension_numbers = #tpu.dot_dimension_numbers<[1], [0], [0], [1], [0, 0, 1, 1], [], []>} : vector<8x8xf32>, vector<8x8xf32>, vector<8x8xf32> -> vector<8x8xf32>
    %52 = vector.extract_strided_slice %12 {offsets = [8, 0], sizes = [8, 32], strides = [1, 1]} : vector<32x32xf32> to vector<8x32xf32>
    %cst_22 = arith.constant dense<0.000000e+00> : vector<8x32xf32>
    %53 = tpu.matmul %51, %52, %cst_22 {dimension_numbers = #tpu.dot_dimension_numbers<[1], [0], [0], [1], [0, 0, 1, 1], [], []>} : vector<8x8xf32>, vector<8x32xf32>, vector<8x32xf32> -> vector<8x32xf32>
    %54 = arith.addf %34, %53 : vector<8x32xf32>
    %55 = vector.extract_strided_slice %13 {offsets = [0, 16], sizes = [8, 8], strides = [1, 1]} : vector<8x32xf32> to vector<8x8xf32>
    %cst_23 = arith.constant 0.353553385 : f32
    %56 = vector.broadcast %cst_23 : f32 to vector<8x8xf32>
    %57 = arith.mulf %55, %56 : vector<8x8xf32>
    %58 = vector.extract_strided_slice %14 {offsets = [0, 16], sizes = [8, 8], strides = [1, 1]} : vector<8x32xf32> to vector<8x8xf32>
    %cst_24 = arith.constant dense<0.000000e+00> : vector<8x8xf32>
    %59 = tpu.matmul %57, %58, %cst_24 {dimension_numbers = #tpu.dot_dimension_numbers<[1], [1], [0], [0], [0, 0, 1, 0], [], []>} : vector<8x8xf32>, vector<8x8xf32>, vector<8x8xf32> -> vector<8x8xf32>
    %cst_25 = arith.constant dense<0xFF800000> : vector<8xf32>
    %60 = vector.multi_reduction <maximumf>, %59, %cst_25 [1] : vector<8x8xf32> to vector<8xf32>
    %61 = vector.shape_cast %60 : vector<8xf32> to vector<8x1xf32>
    %62 = vector.broadcast %61 : vector<8x1xf32> to vector<8x8xf32>
    %63 = arith.subf %59, %62 : vector<8x8xf32>
    %64 = math.exp %63 : vector<8x8xf32>
    %cst_26 = arith.constant dense<0.000000e+00> : vector<8xf32>
    %65 = vector.multi_reduction <add>, %64, %cst_26 [1] : vector<8x8xf32> to vector<8xf32>
    %66 = vector.shape_cast %65 : vector<8xf32> to vector<8x1xf32>
    %67 = tpu.reciprocal %66 {approx = true} : vector<8x1xf32> -> vector<8x1xf32>
    %68 = vector.broadcast %67 : vector<8x1xf32> to vector<8x8xf32>
    %69 = arith.mulf %64, %68 : vector<8x8xf32>
    %70 = vector.extract_strided_slice %15 {offsets = [0, 16], sizes = [8, 8], strides = [1, 1]} : vector<8x32xf32> to vector<8x8xf32>
    %cst_27 = arith.constant dense<0.000000e+00> : vector<8x8xf32>
    %71 = tpu.matmul %69, %70, %cst_27 {dimension_numbers = #tpu.dot_dimension_numbers<[1], [0], [0], [1], [0, 0, 1, 1], [], []>} : vector<8x8xf32>, vector<8x8xf32>, vector<8x8xf32> -> vector<8x8xf32>
    %72 = vector.extract_strided_slice %12 {offsets = [16, 0], sizes = [8, 32], strides = [1, 1]} : vector<32x32xf32> to vector<8x32xf32>
    %cst_28 = arith.constant dense<0.000000e+00> : vector<8x32xf32>
    %73 = tpu.matmul %71, %72, %cst_28 {dimension_numbers = #tpu.dot_dimension_numbers<[1], [0], [0], [1], [0, 0, 1, 1], [], []>} : vector<8x8xf32>, vector<8x32xf32>, vector<8x32xf32> -> vector<8x32xf32>
    %74 = arith.addf %54, %73 : vector<8x32xf32>
    %75 = vector.extract_strided_slice %13 {offsets = [0, 24], sizes = [8, 8], strides = [1, 1]} : vector<8x32xf32> to vector<8x8xf32>
    %cst_29 = arith.constant 0.353553385 : f32
    %76 = vector.broadcast %cst_29 : f32 to vector<8x8xf32>
    %77 = arith.mulf %75, %76 : vector<8x8xf32>
    %78 = vector.extract_strided_slice %14 {offsets = [0, 24], sizes = [8, 8], strides = [1, 1]} : vector<8x32xf32> to vector<8x8xf32>
    %cst_30 = arith.constant dense<0.000000e+00> : vector<8x8xf32>
    %79 = tpu.matmul %77, %78, %cst_30 {dimension_numbers = #tpu.dot_dimension_numbers<[1], [1], [0], [0], [0, 0, 1, 0], [], []>} : vector<8x8xf32>, vector<8x8xf32>, vector<8x8xf32> -> vector<8x8xf32>
    %cst_31 = arith.constant dense<0xFF800000> : vector<8xf32>
    %80 = vector.multi_reduction <maximumf>, %79, %cst_31 [1] : vector<8x8xf32> to vector<8xf32>
    %81 = vector.shape_cast %80 : vector<8xf32> to vector<8x1xf32>
    %82 = vector.broadcast %81 : vector<8x1xf32> to vector<8x8xf32>
    %83 = arith.subf %79, %82 : vector<8x8xf32>
    %84 = math.exp %83 : vector<8x8xf32>
    %cst_32 = arith.constant dense<0.000000e+00> : vector<8xf32>
    %85 = vector.multi_reduction <add>, %84, %cst_32 [1] : vector<8x8xf32> to vector<8xf32>
    %86 = vector.shape_cast %85 : vector<8xf32> to vector<8x1xf32>
    %87 = tpu.reciprocal %86 {approx = true} : vector<8x1xf32> -> vector<8x1xf32>
    %88 = vector.broadcast %87 : vector<8x1xf32> to vector<8x8xf32>
    %89 = arith.mulf %84, %88 : vector<8x8xf32>
    %90 = vector.extract_strided_slice %15 {offsets = [0, 24], sizes = [8, 8], strides = [1, 1]} : vector<8x32xf32> to vector<8x8xf32>
    %cst_33 = arith.constant dense<0.000000e+00> : vector<8x8xf32>
    %91 = tpu.matmul %89, %90, %cst_33 {dimension_numbers = #tpu.dot_dimension_numbers<[1], [0], [0], [1], [0, 0, 1, 1], [], []>} : vector<8x8xf32>, vector<8x8xf32>, vector<8x8xf32> -> vector<8x8xf32>
    %92 = vector.extract_strided_slice %12 {offsets = [24, 0], sizes = [8, 32], strides = [1, 1]} : vector<32x32xf32> to vector<8x32xf32>
    %cst_34 = arith.constant dense<0.000000e+00> : vector<8x32xf32>
    %93 = tpu.matmul %91, %92, %cst_34 {dimension_numbers = #tpu.dot_dimension_numbers<[1], [0], [0], [1], [0, 0, 1, 1], [], []>} : vector<8x8xf32>, vector<8x32xf32>, vector<8x32xf32> -> vector<8x32xf32>
    %94 = arith.addf %74, %93 : vector<8x32xf32>
    %95 = vector.extract_strided_slice %9 {offsets = [8, 0], sizes = [8, 32], strides = [1, 1]} : vector<16x32xf32> to vector<8x32xf32>
    %96 = vector.extract_strided_slice %10 {offsets = [8, 0], sizes = [8, 32], strides = [1, 1]} : vector<16x32xf32> to vector<8x32xf32>
    %97 = vector.extract_strided_slice %11 {offsets = [8, 0], sizes = [8, 32], strides = [1, 1]} : vector<16x32xf32> to vector<8x32xf32>
    %98 = vector.extract_strided_slice %95 {offsets = [0, 0], sizes = [8, 8], strides = [1, 1]} : vector<8x32xf32> to vector<8x8xf32>
    %cst_35 = arith.constant 0.353553385 : f32
    %99 = vector.broadcast %cst_35 : f32 to vector<8x8xf32>
    %100 = arith.mulf %98, %99 : vector<8x8xf32>
    %101 = vector.extract_strided_slice %96 {offsets = [0, 0], sizes = [8, 8], strides = [1, 1]} : vector<8x32xf32> to vector<8x8xf32>
    %cst_36 = arith.constant dense<0.000000e+00> : vector<8x8xf32>
    %102 = tpu.matmul %100, %101, %cst_36 {dimension_numbers = #tpu.dot_dimension_numbers<[1], [1], [0], [0], [0, 0, 1, 0], [], []>} : vector<8x8xf32>, vector<8x8xf32>, vector<8x8xf32> -> vector<8x8xf32>
    %cst_37 = arith.constant dense<0xFF800000> : vector<8xf32>
    %103 = vector.multi_reduction <maximumf>, %102, %cst_37 [1] : vector<8x8xf32> to vector<8xf32>
    %104 = vector.shape_cast %103 : vector<8xf32> to vector<8x1xf32>
    %105 = vector.broadcast %104 : vector<8x1xf32> to vector<8x8xf32>
    %106 = arith.subf %102, %105 : vector<8x8xf32>
    %107 = math.exp %106 : vector<8x8xf32>
    %cst_38 = arith.constant dense<0.000000e+00> : vector<8xf32>
    %108 = vector.multi_reduction <add>, %107, %cst_38 [1] : vector<8x8xf32> to vector<8xf32>
    %109 = vector.shape_cast %108 : vector<8xf32> to vector<8x1xf32>
    %110 = tpu.reciprocal %109 {approx = true} : vector<8x1xf32> -> vector<8x1xf32>
    %111 = vector.broadcast %110 : vector<8x1xf32> to vector<8x8xf32>
    %112 = arith.mulf %107, %111 : vector<8x8xf32>
    %113 = vector.extract_strided_slice %97 {offsets = [0, 0], sizes = [8, 8], strides = [1, 1]} : vector<8x32xf32> to vector<8x8xf32>
    %cst_39 = arith.constant dense<0.000000e+00> : vector<8x8xf32>
    %114 = tpu.matmul %112, %113, %cst_39 {dimension_numbers = #tpu.dot_dimension_numbers<[1], [0], [0], [1], [0, 0, 1, 1], [], []>} : vector<8x8xf32>, vector<8x8xf32>, vector<8x8xf32> -> vector<8x8xf32>
    %115 = vector.extract_strided_slice %12 {offsets = [0, 0], sizes = [8, 32], strides = [1, 1]} : vector<32x32xf32> to vector<8x32xf32>
    %cst_40 = arith.constant dense<0.000000e+00> : vector<8x32xf32>
    %116 = tpu.matmul %114, %115, %cst_40 {dimension_numbers = #tpu.dot_dimension_numbers<[1], [0], [0], [1], [0, 0, 1, 1], [], []>} : vector<8x8xf32>, vector<8x32xf32>, vector<8x32xf32> -> vector<8x32xf32>
    %117 = vector.extract_strided_slice %95 {offsets = [0, 8], sizes = [8, 8], strides = [1, 1]} : vector<8x32xf32> to vector<8x8xf32>
    %cst_41 = arith.constant 0.353553385 : f32
    %118 = vector.broadcast %cst_41 : f32 to vector<8x8xf32>
    %119 = arith.mulf %117, %118 : vector<8x8xf32>
    %120 = vector.extract_strided_slice %96 {offsets = [0, 8], sizes = [8, 8], strides = [1, 1]} : vector<8x32xf32> to vector<8x8xf32>
    %cst_42 = arith.constant dense<0.000000e+00> : vector<8x8xf32>
    %121 = tpu.matmul %119, %120, %cst_42 {dimension_numbers = #tpu.dot_dimension_numbers<[1], [1], [0], [0], [0, 0, 1, 0], [], []>} : vector<8x8xf32>, vector<8x8xf32>, vector<8x8xf32> -> vector<8x8xf32>
    %cst_43 = arith.constant dense<0xFF800000> : vector<8xf32>
    %122 = vector.multi_reduction <maximumf>, %121, %cst_43 [1] : vector<8x8xf32> to vector<8xf32>
    %123 = vector.shape_cast %122 : vector<8xf32> to vector<8x1xf32>
    %124 = vector.broadcast %123 : vector<8x1xf32> to vector<8x8xf32>
    %125 = arith.subf %121, %124 : vector<8x8xf32>
    %126 = math.exp %125 : vector<8x8xf32>
    %cst_44 = arith.constant dense<0.000000e+00> : vector<8xf32>
    %127 = vector.multi_reduction <add>, %126, %cst_44 [1] : vector<8x8xf32> to vector<8xf32>
    %128 = vector.shape_cast %127 : vector<8xf32> to vector<8x1xf32>
    %129 = tpu.reciprocal %128 {approx = true} : vector<8x1xf32> -> vector<8x1xf32>
    %130 = vector.broadcast %129 : vector<8x1xf32> to vector<8x8xf32>
    %131 = arith.mulf %126, %130 : vector<8x8xf32>
    %132 = vector.extract_strided_slice %97 {offsets = [0, 8], sizes = [8, 8], strides = [1, 1]} : vector<8x32xf32> to vector<8x8xf32>
    %cst_45 = arith.constant dense<0.000000e+00> : vector<8x8xf32>
    %133 = tpu.matmul %131, %132, %cst_45 {dimension_numbers = #tpu.dot_dimension_numbers<[1], [0], [0], [1], [0, 0, 1, 1], [], []>} : vector<8x8xf32>, vector<8x8xf32>, vector<8x8xf32> -> vector<8x8xf32>
    %134 = vector.extract_strided_slice %12 {offsets = [8, 0], sizes = [8, 32], strides = [1, 1]} : vector<32x32xf32> to vector<8x32xf32>
    %cst_46 = arith.constant dense<0.000000e+00> : vector<8x32xf32>
    %135 = tpu.matmul %133, %134, %cst_46 {dimension_numbers = #tpu.dot_dimension_numbers<[1], [0], [0], [1], [0, 0, 1, 1], [], []>} : vector<8x8xf32>, vector<8x32xf32>, vector<8x32xf32> -> vector<8x32xf32>
    %136 = arith.addf %116, %135 : vector<8x32xf32>
    %137 = vector.extract_strided_slice %95 {offsets = [0, 16], sizes = [8, 8], strides = [1, 1]} : vector<8x32xf32> to vector<8x8xf32>
    %cst_47 = arith.constant 0.353553385 : f32
    %138 = vector.broadcast %cst_47 : f32 to vector<8x8xf32>
    %139 = arith.mulf %137, %138 : vector<8x8xf32>
    %140 = vector.extract_strided_slice %96 {offsets = [0, 16], sizes = [8, 8], strides = [1, 1]} : vector<8x32xf32> to vector<8x8xf32>
    %cst_48 = arith.constant dense<0.000000e+00> : vector<8x8xf32>
    %141 = tpu.matmul %139, %140, %cst_48 {dimension_numbers = #tpu.dot_dimension_numbers<[1], [1], [0], [0], [0, 0, 1, 0], [], []>} : vector<8x8xf32>, vector<8x8xf32>, vector<8x8xf32> -> vector<8x8xf32>
    %cst_49 = arith.constant dense<0xFF800000> : vector<8xf32>
    %142 = vector.multi_reduction <maximumf>, %141, %cst_49 [1] : vector<8x8xf32> to vector<8xf32>
    %143 = vector.shape_cast %142 : vector<8xf32> to vector<8x1xf32>
    %144 = vector.broadcast %143 : vector<8x1xf32> to vector<8x8xf32>
    %145 = arith.subf %141, %144 : vector<8x8xf32>
    %146 = math.exp %145 : vector<8x8xf32>
    %cst_50 = arith.constant dense<0.000000e+00> : vector<8xf32>
    %147 = vector.multi_reduction <add>, %146, %cst_50 [1] : vector<8x8xf32> to vector<8xf32>
    %148 = vector.shape_cast %147 : vector<8xf32> to vector<8x1xf32>
    %149 = tpu.reciprocal %148 {approx = true} : vector<8x1xf32> -> vector<8x1xf32>
    %150 = vector.broadcast %149 : vector<8x1xf32> to vector<8x8xf32>
    %151 = arith.mulf %146, %150 : vector<8x8xf32>
    %152 = vector.extract_strided_slice %97 {offsets = [0, 16], sizes = [8, 8], strides = [1, 1]} : vector<8x32xf32> to vector<8x8xf32>
    %cst_51 = arith.constant dense<0.000000e+00> : vector<8x8xf32>
    %153 = tpu.matmul %151, %152, %cst_51 {dimension_numbers = #tpu.dot_dimension_numbers<[1], [0], [0], [1], [0, 0, 1, 1], [], []>} : vector<8x8xf32>, vector<8x8xf32>, vector<8x8xf32> -> vector<8x8xf32>
    %154 = vector.extract_strided_slice %12 {offsets = [16, 0], sizes = [8, 32], strides = [1, 1]} : vector<32x32xf32> to vector<8x32xf32>
    %cst_52 = arith.constant dense<0.000000e+00> : vector<8x32xf32>
    %155 = tpu.matmul %153, %154, %cst_52 {dimension_numbers = #tpu.dot_dimension_numbers<[1], [0], [0], [1], [0, 0, 1, 1], [], []>} : vector<8x8xf32>, vector<8x32xf32>, vector<8x32xf32> -> vector<8x32xf32>
    %156 = arith.addf %136, %155 : vector<8x32xf32>
    %157 = vector.extract_strided_slice %95 {offsets = [0, 24], sizes = [8, 8], strides = [1, 1]} : vector<8x32xf32> to vector<8x8xf32>
    %cst_53 = arith.constant 0.353553385 : f32
    %158 = vector.broadcast %cst_53 : f32 to vector<8x8xf32>
    %159 = arith.mulf %157, %158 : vector<8x8xf32>
    %160 = vector.extract_strided_slice %96 {offsets = [0, 24], sizes = [8, 8], strides = [1, 1]} : vector<8x32xf32> to vector<8x8xf32>
    %cst_54 = arith.constant dense<0.000000e+00> : vector<8x8xf32>
    %161 = tpu.matmul %159, %160, %cst_54 {dimension_numbers = #tpu.dot_dimension_numbers<[1], [1], [0], [0], [0, 0, 1, 0], [], []>} : vector<8x8xf32>, vector<8x8xf32>, vector<8x8xf32> -> vector<8x8xf32>
    %cst_55 = arith.constant dense<0xFF800000> : vector<8xf32>
    %162 = vector.multi_reduction <maximumf>, %161, %cst_55 [1] : vector<8x8xf32> to vector<8xf32>
    %163 = vector.shape_cast %162 : vector<8xf32> to vector<8x1xf32>
    %164 = vector.broadcast %163 : vector<8x1xf32> to vector<8x8xf32>
    %165 = arith.subf %161, %164 : vector<8x8xf32>
    %166 = math.exp %165 : vector<8x8xf32>
    %cst_56 = arith.constant dense<0.000000e+00> : vector<8xf32>
    %167 = vector.multi_reduction <add>, %166, %cst_56 [1] : vector<8x8xf32> to vector<8xf32>
    %168 = vector.shape_cast %167 : vector<8xf32> to vector<8x1xf32>
    %169 = tpu.reciprocal %168 {approx = true} : vector<8x1xf32> -> vector<8x1xf32>
    %170 = vector.broadcast %169 : vector<8x1xf32> to vector<8x8xf32>
    %171 = arith.mulf %166, %170 : vector<8x8xf32>
    %172 = vector.extract_strided_slice %97 {offsets = [0, 24], sizes = [8, 8], strides = [1, 1]} : vector<8x32xf32> to vector<8x8xf32>
    %cst_57 = arith.constant dense<0.000000e+00> : vector<8x8xf32>
    %173 = tpu.matmul %171, %172, %cst_57 {dimension_numbers = #tpu.dot_dimension_numbers<[1], [0], [0], [1], [0, 0, 1, 1], [], []>} : vector<8x8xf32>, vector<8x8xf32>, vector<8x8xf32> -> vector<8x8xf32>
    %174 = vector.extract_strided_slice %12 {offsets = [24, 0], sizes = [8, 32], strides = [1, 1]} : vector<32x32xf32> to vector<8x32xf32>
    %cst_58 = arith.constant dense<0.000000e+00> : vector<8x32xf32>
    %175 = tpu.matmul %173, %174, %cst_58 {dimension_numbers = #tpu.dot_dimension_numbers<[1], [0], [0], [1], [0, 0, 1, 1], [], []>} : vector<8x8xf32>, vector<8x32xf32>, vector<8x32xf32> -> vector<8x32xf32>
    %176 = arith.addf %156, %175 : vector<8x32xf32>
    %177 = tpu.concatenate %94, %176 in 0 : vector<8x32xf32>, vector<8x32xf32> -> vector<16x32xf32>
    %c0_59 = arith.constant 0 : index
    %c0_60 = arith.constant 0 : index
    %178 = vector.load %arg5[%c0_59, %c0_60] : memref<1x32xf32, #tpu.memory_space<vmem>>, vector<1x32xf32>
    %179 = vector.broadcast %178 : vector<1x32xf32> to vector<16x32xf32>
    %180 = arith.addf %177, %179 : vector<16x32xf32>
    %181 = arith.addf %1, %180 : vector<16x32xf32>
    %c0_61 = arith.constant 0 : index
    %c0_62 = arith.constant 0 : index
    %182 = vector.load %arg16[%c0_61, %c0_62] : memref<1x32xf32, #tpu.memory_space<vmem>>, vector<1x32xf32>
    %c0_63 = arith.constant 0 : index
    %c0_64 = arith.constant 0 : index
    %183 = vector.load %arg17[%c0_63, %c0_64] : memref<1x32xf32, #tpu.memory_space<vmem>>, vector<1x32xf32>
    %cst_65 = arith.constant dense<0.000000e+00> : vector<16xf32>
    %184 = vector.multi_reduction <add>, %181, %cst_65 [1] : vector<16x32xf32> to vector<16xf32>
    %185 = vector.shape_cast %184 : vector<16xf32> to vector<16x1xf32>
    %cst_66 = arith.constant 3.200000e+01 : f32
    %186 = vector.broadcast %cst_66 : f32 to vector<16x1xf32>
    %187 = arith.divf %185, %186 : vector<16x1xf32>
    %188 = vector.broadcast %187 : vector<16x1xf32> to vector<16x32xf32>
    %189 = arith.subf %181, %188 : vector<16x32xf32>
    %190 = arith.mulf %189, %189 : vector<16x32xf32>
    %cst_67 = arith.constant dense<0.000000e+00> : vector<16xf32>
    %191 = vector.multi_reduction <add>, %190, %cst_67 [1] : vector<16x32xf32> to vector<16xf32>
    %192 = vector.shape_cast %191 : vector<16xf32> to vector<16x1xf32>
    %cst_68 = arith.constant 3.200000e+01 : f32
    %193 = vector.broadcast %cst_68 : f32 to vector<16x1xf32>
    %194 = arith.divf %192, %193 : vector<16x1xf32>
    %195 = vector.broadcast %187 : vector<16x1xf32> to vector<16x32xf32>
    %196 = arith.subf %181, %195 : vector<16x32xf32>
    %cst_69 = arith.constant 9.99999974E-6 : f32
    %197 = vector.broadcast %cst_69 : f32 to vector<16x1xf32>
    %198 = arith.addf %194, %197 : vector<16x1xf32>
    %199 = math.rsqrt %198 : vector<16x1xf32>
    %200 = vector.broadcast %199 : vector<16x1xf32> to vector<16x32xf32>
    %201 = arith.mulf %196, %200 : vector<16x32xf32>
    %202 = vector.broadcast %182 : vector<1x32xf32> to vector<16x32xf32>
    %203 = arith.mulf %201, %202 : vector<16x32xf32>
    %204 = vector.broadcast %183 : vector<1x32xf32> to vector<16x32xf32>
    %205 = arith.addf %203, %204 : vector<16x32xf32>
    %c0_70 = arith.constant 0 : index
    %c0_71 = arith.constant 0 : index
    %206 = vector.load %arg6[%c0_70, %c0_71] : memref<32x32xf32, #tpu.memory_space<vmem>>, vector<32x32xf32>
    %cst_72 = arith.constant dense<0.000000e+00> : vector<16x32xf32>
    %207 = tpu.matmul %205, %206, %cst_72 {dimension_numbers = #tpu.dot_dimension_numbers<[1], [0], [0], [1], [0, 0, 1, 1], [], []>} : vector<16x32xf32>, vector<32x32xf32>, vector<16x32xf32> -> vector<16x32xf32>
    %c0_73 = arith.constant 0 : index
    %c0_74 = arith.constant 0 : index
    %208 = vector.load %arg7[%c0_73, %c0_74] : memref<1x32xf32, #tpu.memory_space<vmem>>, vector<1x32xf32>
    %209 = vector.broadcast %208 : vector<1x32xf32> to vector<16x32xf32>
    %210 = arith.addf %207, %209 : vector<16x32xf32>
    %c0_75 = arith.constant 0 : index
    %c0_76 = arith.constant 0 : index
    %211 = vector.load %arg8[%c0_75, %c0_76] : memref<32x64xf32, #tpu.memory_space<vmem>>, vector<32x64xf32>
    %cst_77 = arith.constant dense<0.000000e+00> : vector<16x64xf32>
    %212 = tpu.matmul %3, %211, %cst_77 {dimension_numbers = #tpu.dot_dimension_numbers<[1], [0], [0], [1], [0, 0, 1, 1], [], []>} : vector<16x32xf32>, vector<32x64xf32>, vector<16x64xf32> -> vector<16x64xf32>
    %c0_78 = arith.constant 0 : index
    %c0_79 = arith.constant 0 : index
    %213 = vector.load %arg9[%c0_78, %c0_79] : memref<1x64xf32, #tpu.memory_space<vmem>>, vector<1x64xf32>
    %214 = vector.broadcast %213 : vector<1x64xf32> to vector<16x64xf32>
    %215 = arith.addf %212, %214 : vector<16x64xf32>
    %216 = vector.extract_strided_slice %215 {offsets = [0, 0], sizes = [16, 32], strides = [1, 1]} : vector<16x64xf32> to vector<16x32xf32>
    %217 = vector.extract_strided_slice %215 {offsets = [0, 32], sizes = [16, 32], strides = [1, 1]} : vector<16x64xf32> to vector<16x32xf32>
    %c0_80 = arith.constant 0 : index
    %c0_81 = arith.constant 0 : index
    %218 = vector.load %arg10[%c0_80, %c0_81] : memref<32x32xf32, #tpu.memory_space<vmem>>, vector<32x32xf32>
    %219 = vector.extract_strided_slice %210 {offsets = [0, 0], sizes = [8, 32], strides = [1, 1]} : vector<16x32xf32> to vector<8x32xf32>
    %220 = vector.extract_strided_slice %216 {offsets = [0, 0], sizes = [8, 32], strides = [1, 1]} : vector<16x32xf32> to vector<8x32xf32>
    %221 = vector.extract_strided_slice %217 {offsets = [0, 0], sizes = [8, 32], strides = [1, 1]} : vector<16x32xf32> to vector<8x32xf32>
    %222 = vector.extract_strided_slice %219 {offsets = [0, 0], sizes = [8, 8], strides = [1, 1]} : vector<8x32xf32> to vector<8x8xf32>
    %cst_82 = arith.constant 0.353553385 : f32
    %223 = vector.broadcast %cst_82 : f32 to vector<8x8xf32>
    %224 = arith.mulf %222, %223 : vector<8x8xf32>
    %225 = vector.extract_strided_slice %220 {offsets = [0, 0], sizes = [8, 8], strides = [1, 1]} : vector<8x32xf32> to vector<8x8xf32>
    %cst_83 = arith.constant dense<0.000000e+00> : vector<8x8xf32>
    %226 = tpu.matmul %224, %225, %cst_83 {dimension_numbers = #tpu.dot_dimension_numbers<[1], [1], [0], [0], [0, 0, 1, 0], [], []>} : vector<8x8xf32>, vector<8x8xf32>, vector<8x8xf32> -> vector<8x8xf32>
    %cst_84 = arith.constant dense<0xFF800000> : vector<8xf32>
    %227 = vector.multi_reduction <maximumf>, %226, %cst_84 [1] : vector<8x8xf32> to vector<8xf32>
    %228 = vector.shape_cast %227 : vector<8xf32> to vector<8x1xf32>
    %229 = vector.broadcast %228 : vector<8x1xf32> to vector<8x8xf32>
    %230 = arith.subf %226, %229 : vector<8x8xf32>
    %231 = math.exp %230 : vector<8x8xf32>
    %cst_85 = arith.constant dense<0.000000e+00> : vector<8xf32>
    %232 = vector.multi_reduction <add>, %231, %cst_85 [1] : vector<8x8xf32> to vector<8xf32>
    %233 = vector.shape_cast %232 : vector<8xf32> to vector<8x1xf32>
    %234 = tpu.reciprocal %233 {approx = true} : vector<8x1xf32> -> vector<8x1xf32>
    %235 = vector.broadcast %234 : vector<8x1xf32> to vector<8x8xf32>
    %236 = arith.mulf %231, %235 : vector<8x8xf32>
    %237 = vector.extract_strided_slice %221 {offsets = [0, 0], sizes = [8, 8], strides = [1, 1]} : vector<8x32xf32> to vector<8x8xf32>
    %cst_86 = arith.constant dense<0.000000e+00> : vector<8x8xf32>
    %238 = tpu.matmul %236, %237, %cst_86 {dimension_numbers = #tpu.dot_dimension_numbers<[1], [0], [0], [1], [0, 0, 1, 1], [], []>} : vector<8x8xf32>, vector<8x8xf32>, vector<8x8xf32> -> vector<8x8xf32>
    %239 = vector.extract_strided_slice %218 {offsets = [0, 0], sizes = [8, 32], strides = [1, 1]} : vector<32x32xf32> to vector<8x32xf32>
    %cst_87 = arith.constant dense<0.000000e+00> : vector<8x32xf32>
    %240 = tpu.matmul %238, %239, %cst_87 {dimension_numbers = #tpu.dot_dimension_numbers<[1], [0], [0], [1], [0, 0, 1, 1], [], []>} : vector<8x8xf32>, vector<8x32xf32>, vector<8x32xf32> -> vector<8x32xf32>
    %241 = vector.extract_strided_slice %219 {offsets = [0, 8], sizes = [8, 8], strides = [1, 1]} : vector<8x32xf32> to vector<8x8xf32>
    %cst_88 = arith.constant 0.353553385 : f32
    %242 = vector.broadcast %cst_88 : f32 to vector<8x8xf32>
    %243 = arith.mulf %241, %242 : vector<8x8xf32>
    %244 = vector.extract_strided_slice %220 {offsets = [0, 8], sizes = [8, 8], strides = [1, 1]} : vector<8x32xf32> to vector<8x8xf32>
    %cst_89 = arith.constant dense<0.000000e+00> : vector<8x8xf32>
    %245 = tpu.matmul %243, %244, %cst_89 {dimension_numbers = #tpu.dot_dimension_numbers<[1], [1], [0], [0], [0, 0, 1, 0], [], []>} : vector<8x8xf32>, vector<8x8xf32>, vector<8x8xf32> -> vector<8x8xf32>
    %cst_90 = arith.constant dense<0xFF800000> : vector<8xf32>
    %246 = vector.multi_reduction <maximumf>, %245, %cst_90 [1] : vector<8x8xf32> to vector<8xf32>
    %247 = vector.shape_cast %246 : vector<8xf32> to vector<8x1xf32>
    %248 = vector.broadcast %247 : vector<8x1xf32> to vector<8x8xf32>
    %249 = arith.subf %245, %248 : vector<8x8xf32>
    %250 = math.exp %249 : vector<8x8xf32>
    %cst_91 = arith.constant dense<0.000000e+00> : vector<8xf32>
    %251 = vector.multi_reduction <add>, %250, %cst_91 [1] : vector<8x8xf32> to vector<8xf32>
    %252 = vector.shape_cast %251 : vector<8xf32> to vector<8x1xf32>
    %253 = tpu.reciprocal %252 {approx = true} : vector<8x1xf32> -> vector<8x1xf32>
    %254 = vector.broadcast %253 : vector<8x1xf32> to vector<8x8xf32>
    %255 = arith.mulf %250, %254 : vector<8x8xf32>
    %256 = vector.extract_strided_slice %221 {offsets = [0, 8], sizes = [8, 8], strides = [1, 1]} : vector<8x32xf32> to vector<8x8xf32>
    %cst_92 = arith.constant dense<0.000000e+00> : vector<8x8xf32>
    %257 = tpu.matmul %255, %256, %cst_92 {dimension_numbers = #tpu.dot_dimension_numbers<[1], [0], [0], [1], [0, 0, 1, 1], [], []>} : vector<8x8xf32>, vector<8x8xf32>, vector<8x8xf32> -> vector<8x8xf32>
    %258 = vector.extract_strided_slice %218 {offsets = [8, 0], sizes = [8, 32], strides = [1, 1]} : vector<32x32xf32> to vector<8x32xf32>
    %cst_93 = arith.constant dense<0.000000e+00> : vector<8x32xf32>
    %259 = tpu.matmul %257, %258, %cst_93 {dimension_numbers = #tpu.dot_dimension_numbers<[1], [0], [0], [1], [0, 0, 1, 1], [], []>} : vector<8x8xf32>, vector<8x32xf32>, vector<8x32xf32> -> vector<8x32xf32>
    %260 = arith.addf %240, %259 : vector<8x32xf32>
    %261 = vector.extract_strided_slice %219 {offsets = [0, 16], sizes = [8, 8], strides = [1, 1]} : vector<8x32xf32> to vector<8x8xf32>
    %cst_94 = arith.constant 0.353553385 : f32
    %262 = vector.broadcast %cst_94 : f32 to vector<8x8xf32>
    %263 = arith.mulf %261, %262 : vector<8x8xf32>
    %264 = vector.extract_strided_slice %220 {offsets = [0, 16], sizes = [8, 8], strides = [1, 1]} : vector<8x32xf32> to vector<8x8xf32>
    %cst_95 = arith.constant dense<0.000000e+00> : vector<8x8xf32>
    %265 = tpu.matmul %263, %264, %cst_95 {dimension_numbers = #tpu.dot_dimension_numbers<[1], [1], [0], [0], [0, 0, 1, 0], [], []>} : vector<8x8xf32>, vector<8x8xf32>, vector<8x8xf32> -> vector<8x8xf32>
    %cst_96 = arith.constant dense<0xFF800000> : vector<8xf32>
    %266 = vector.multi_reduction <maximumf>, %265, %cst_96 [1] : vector<8x8xf32> to vector<8xf32>
    %267 = vector.shape_cast %266 : vector<8xf32> to vector<8x1xf32>
    %268 = vector.broadcast %267 : vector<8x1xf32> to vector<8x8xf32>
    %269 = arith.subf %265, %268 : vector<8x8xf32>
    %270 = math.exp %269 : vector<8x8xf32>
    %cst_97 = arith.constant dense<0.000000e+00> : vector<8xf32>
    %271 = vector.multi_reduction <add>, %270, %cst_97 [1] : vector<8x8xf32> to vector<8xf32>
    %272 = vector.shape_cast %271 : vector<8xf32> to vector<8x1xf32>
    %273 = tpu.reciprocal %272 {approx = true} : vector<8x1xf32> -> vector<8x1xf32>
    %274 = vector.broadcast %273 : vector<8x1xf32> to vector<8x8xf32>
    %275 = arith.mulf %270, %274 : vector<8x8xf32>
    %276 = vector.extract_strided_slice %221 {offsets = [0, 16], sizes = [8, 8], strides = [1, 1]} : vector<8x32xf32> to vector<8x8xf32>
    %cst_98 = arith.constant dense<0.000000e+00> : vector<8x8xf32>
    %277 = tpu.matmul %275, %276, %cst_98 {dimension_numbers = #tpu.dot_dimension_numbers<[1], [0], [0], [1], [0, 0, 1, 1], [], []>} : vector<8x8xf32>, vector<8x8xf32>, vector<8x8xf32> -> vector<8x8xf32>
    %278 = vector.extract_strided_slice %218 {offsets = [16, 0], sizes = [8, 32], strides = [1, 1]} : vector<32x32xf32> to vector<8x32xf32>
    %cst_99 = arith.constant dense<0.000000e+00> : vector<8x32xf32>
    %279 = tpu.matmul %277, %278, %cst_99 {dimension_numbers = #tpu.dot_dimension_numbers<[1], [0], [0], [1], [0, 0, 1, 1], [], []>} : vector<8x8xf32>, vector<8x32xf32>, vector<8x32xf32> -> vector<8x32xf32>
    %280 = arith.addf %260, %279 : vector<8x32xf32>
    %281 = vector.extract_strided_slice %219 {offsets = [0, 24], sizes = [8, 8], strides = [1, 1]} : vector<8x32xf32> to vector<8x8xf32>
    %cst_100 = arith.constant 0.353553385 : f32
    %282 = vector.broadcast %cst_100 : f32 to vector<8x8xf32>
    %283 = arith.mulf %281, %282 : vector<8x8xf32>
    %284 = vector.extract_strided_slice %220 {offsets = [0, 24], sizes = [8, 8], strides = [1, 1]} : vector<8x32xf32> to vector<8x8xf32>
    %cst_101 = arith.constant dense<0.000000e+00> : vector<8x8xf32>
    %285 = tpu.matmul %283, %284, %cst_101 {dimension_numbers = #tpu.dot_dimension_numbers<[1], [1], [0], [0], [0, 0, 1, 0], [], []>} : vector<8x8xf32>, vector<8x8xf32>, vector<8x8xf32> -> vector<8x8xf32>
    %cst_102 = arith.constant dense<0xFF800000> : vector<8xf32>
    %286 = vector.multi_reduction <maximumf>, %285, %cst_102 [1] : vector<8x8xf32> to vector<8xf32>
    %287 = vector.shape_cast %286 : vector<8xf32> to vector<8x1xf32>
    %288 = vector.broadcast %287 : vector<8x1xf32> to vector<8x8xf32>
    %289 = arith.subf %285, %288 : vector<8x8xf32>
    %290 = math.exp %289 : vector<8x8xf32>
    %cst_103 = arith.constant dense<0.000000e+00> : vector<8xf32>
    %291 = vector.multi_reduction <add>, %290, %cst_103 [1] : vector<8x8xf32> to vector<8xf32>
    %292 = vector.shape_cast %291 : vector<8xf32> to vector<8x1xf32>
    %293 = tpu.reciprocal %292 {approx = true} : vector<8x1xf32> -> vector<8x1xf32>
    %294 = vector.broadcast %293 : vector<8x1xf32> to vector<8x8xf32>
    %295 = arith.mulf %290, %294 : vector<8x8xf32>
    %296 = vector.extract_strided_slice %221 {offsets = [0, 24], sizes = [8, 8], strides = [1, 1]} : vector<8x32xf32> to vector<8x8xf32>
    %cst_104 = arith.constant dense<0.000000e+00> : vector<8x8xf32>
    %297 = tpu.matmul %295, %296, %cst_104 {dimension_numbers = #tpu.dot_dimension_numbers<[1], [0], [0], [1], [0, 0, 1, 1], [], []>} : vector<8x8xf32>, vector<8x8xf32>, vector<8x8xf32> -> vector<8x8xf32>
    %298 = vector.extract_strided_slice %218 {offsets = [24, 0], sizes = [8, 32], strides = [1, 1]} : vector<32x32xf32> to vector<8x32xf32>
    %cst_105 = arith.constant dense<0.000000e+00> : vector<8x32xf32>
    %299 = tpu.matmul %297, %298, %cst_105 {dimension_numbers = #tpu.dot_dimension_numbers<[1], [0], [0], [1], [0, 0, 1, 1], [], []>} : vector<8x8xf32>, vector<8x32xf32>, vector<8x32xf32> -> vector<8x32xf32>
    %300 = arith.addf %280, %299 : vector<8x32xf32>
    %301 = vector.extract_strided_slice %210 {offsets = [8, 0], sizes = [8, 32], strides = [1, 1]} : vector<16x32xf32> to vector<8x32xf32>
    %302 = vector.extract_strided_slice %216 {offsets = [8, 0], sizes = [8, 32], strides = [1, 1]} : vector<16x32xf32> to vector<8x32xf32>
    %303 = vector.extract_strided_slice %217 {offsets = [8, 0], sizes = [8, 32], strides = [1, 1]} : vector<16x32xf32> to vector<8x32xf32>
    %304 = vector.extract_strided_slice %301 {offsets = [0, 0], sizes = [8, 8], strides = [1, 1]} : vector<8x32xf32> to vector<8x8xf32>
    %cst_106 = arith.constant 0.353553385 : f32
    %305 = vector.broadcast %cst_106 : f32 to vector<8x8xf32>
    %306 = arith.mulf %304, %305 : vector<8x8xf32>
    %307 = vector.extract_strided_slice %302 {offsets = [0, 0], sizes = [8, 8], strides = [1, 1]} : vector<8x32xf32> to vector<8x8xf32>
    %cst_107 = arith.constant dense<0.000000e+00> : vector<8x8xf32>
    %308 = tpu.matmul %306, %307, %cst_107 {dimension_numbers = #tpu.dot_dimension_numbers<[1], [1], [0], [0], [0, 0, 1, 0], [], []>} : vector<8x8xf32>, vector<8x8xf32>, vector<8x8xf32> -> vector<8x8xf32>
    %cst_108 = arith.constant dense<0xFF800000> : vector<8xf32>
    %309 = vector.multi_reduction <maximumf>, %308, %cst_108 [1] : vector<8x8xf32> to vector<8xf32>
    %310 = vector.shape_cast %309 : vector<8xf32> to vector<8x1xf32>
    %311 = vector.broadcast %310 : vector<8x1xf32> to vector<8x8xf32>
    %312 = arith.subf %308, %311 : vector<8x8xf32>
    %313 = math.exp %312 : vector<8x8xf32>
    %cst_109 = arith.constant dense<0.000000e+00> : vector<8xf32>
    %314 = vector.multi_reduction <add>, %313, %cst_109 [1] : vector<8x8xf32> to vector<8xf32>
    %315 = vector.shape_cast %314 : vector<8xf32> to vector<8x1xf32>
    %316 = tpu.reciprocal %315 {approx = true} : vector<8x1xf32> -> vector<8x1xf32>
    %317 = vector.broadcast %316 : vector<8x1xf32> to vector<8x8xf32>
    %318 = arith.mulf %313, %317 : vector<8x8xf32>
    %319 = vector.extract_strided_slice %303 {offsets = [0, 0], sizes = [8, 8], strides = [1, 1]} : vector<8x32xf32> to vector<8x8xf32>
    %cst_110 = arith.constant dense<0.000000e+00> : vector<8x8xf32>
    %320 = tpu.matmul %318, %319, %cst_110 {dimension_numbers = #tpu.dot_dimension_numbers<[1], [0], [0], [1], [0, 0, 1, 1], [], []>} : vector<8x8xf32>, vector<8x8xf32>, vector<8x8xf32> -> vector<8x8xf32>
    %321 = vector.extract_strided_slice %218 {offsets = [0, 0], sizes = [8, 32], strides = [1, 1]} : vector<32x32xf32> to vector<8x32xf32>
    %cst_111 = arith.constant dense<0.000000e+00> : vector<8x32xf32>
    %322 = tpu.matmul %320, %321, %cst_111 {dimension_numbers = #tpu.dot_dimension_numbers<[1], [0], [0], [1], [0, 0, 1, 1], [], []>} : vector<8x8xf32>, vector<8x32xf32>, vector<8x32xf32> -> vector<8x32xf32>
    %323 = vector.extract_strided_slice %301 {offsets = [0, 8], sizes = [8, 8], strides = [1, 1]} : vector<8x32xf32> to vector<8x8xf32>
    %cst_112 = arith.constant 0.353553385 : f32
    %324 = vector.broadcast %cst_112 : f32 to vector<8x8xf32>
    %325 = arith.mulf %323, %324 : vector<8x8xf32>
    %326 = vector.extract_strided_slice %302 {offsets = [0, 8], sizes = [8, 8], strides = [1, 1]} : vector<8x32xf32> to vector<8x8xf32>
    %cst_113 = arith.constant dense<0.000000e+00> : vector<8x8xf32>
    %327 = tpu.matmul %325, %326, %cst_113 {dimension_numbers = #tpu.dot_dimension_numbers<[1], [1], [0], [0], [0, 0, 1, 0], [], []>} : vector<8x8xf32>, vector<8x8xf32>, vector<8x8xf32> -> vector<8x8xf32>
    %cst_114 = arith.constant dense<0xFF800000> : vector<8xf32>
    %328 = vector.multi_reduction <maximumf>, %327, %cst_114 [1] : vector<8x8xf32> to vector<8xf32>
    %329 = vector.shape_cast %328 : vector<8xf32> to vector<8x1xf32>
    %330 = vector.broadcast %329 : vector<8x1xf32> to vector<8x8xf32>
    %331 = arith.subf %327, %330 : vector<8x8xf32>
    %332 = math.exp %331 : vector<8x8xf32>
    %cst_115 = arith.constant dense<0.000000e+00> : vector<8xf32>
    %333 = vector.multi_reduction <add>, %332, %cst_115 [1] : vector<8x8xf32> to vector<8xf32>
    %334 = vector.shape_cast %333 : vector<8xf32> to vector<8x1xf32>
    %335 = tpu.reciprocal %334 {approx = true} : vector<8x1xf32> -> vector<8x1xf32>
    %336 = vector.broadcast %335 : vector<8x1xf32> to vector<8x8xf32>
    %337 = arith.mulf %332, %336 : vector<8x8xf32>
    %338 = vector.extract_strided_slice %303 {offsets = [0, 8], sizes = [8, 8], strides = [1, 1]} : vector<8x32xf32> to vector<8x8xf32>
    %cst_116 = arith.constant dense<0.000000e+00> : vector<8x8xf32>
    %339 = tpu.matmul %337, %338, %cst_116 {dimension_numbers = #tpu.dot_dimension_numbers<[1], [0], [0], [1], [0, 0, 1, 1], [], []>} : vector<8x8xf32>, vector<8x8xf32>, vector<8x8xf32> -> vector<8x8xf32>
    %340 = vector.extract_strided_slice %218 {offsets = [8, 0], sizes = [8, 32], strides = [1, 1]} : vector<32x32xf32> to vector<8x32xf32>
    %cst_117 = arith.constant dense<0.000000e+00> : vector<8x32xf32>
    %341 = tpu.matmul %339, %340, %cst_117 {dimension_numbers = #tpu.dot_dimension_numbers<[1], [0], [0], [1], [0, 0, 1, 1], [], []>} : vector<8x8xf32>, vector<8x32xf32>, vector<8x32xf32> -> vector<8x32xf32>
    %342 = arith.addf %322, %341 : vector<8x32xf32>
    %343 = vector.extract_strided_slice %301 {offsets = [0, 16], sizes = [8, 8], strides = [1, 1]} : vector<8x32xf32> to vector<8x8xf32>
    %cst_118 = arith.constant 0.353553385 : f32
    %344 = vector.broadcast %cst_118 : f32 to vector<8x8xf32>
    %345 = arith.mulf %343, %344 : vector<8x8xf32>
    %346 = vector.extract_strided_slice %302 {offsets = [0, 16], sizes = [8, 8], strides = [1, 1]} : vector<8x32xf32> to vector<8x8xf32>
    %cst_119 = arith.constant dense<0.000000e+00> : vector<8x8xf32>
    %347 = tpu.matmul %345, %346, %cst_119 {dimension_numbers = #tpu.dot_dimension_numbers<[1], [1], [0], [0], [0, 0, 1, 0], [], []>} : vector<8x8xf32>, vector<8x8xf32>, vector<8x8xf32> -> vector<8x8xf32>
    %cst_120 = arith.constant dense<0xFF800000> : vector<8xf32>
    %348 = vector.multi_reduction <maximumf>, %347, %cst_120 [1] : vector<8x8xf32> to vector<8xf32>
    %349 = vector.shape_cast %348 : vector<8xf32> to vector<8x1xf32>
    %350 = vector.broadcast %349 : vector<8x1xf32> to vector<8x8xf32>
    %351 = arith.subf %347, %350 : vector<8x8xf32>
    %352 = math.exp %351 : vector<8x8xf32>
    %cst_121 = arith.constant dense<0.000000e+00> : vector<8xf32>
    %353 = vector.multi_reduction <add>, %352, %cst_121 [1] : vector<8x8xf32> to vector<8xf32>
    %354 = vector.shape_cast %353 : vector<8xf32> to vector<8x1xf32>
    %355 = tpu.reciprocal %354 {approx = true} : vector<8x1xf32> -> vector<8x1xf32>
    %356 = vector.broadcast %355 : vector<8x1xf32> to vector<8x8xf32>
    %357 = arith.mulf %352, %356 : vector<8x8xf32>
    %358 = vector.extract_strided_slice %303 {offsets = [0, 16], sizes = [8, 8], strides = [1, 1]} : vector<8x32xf32> to vector<8x8xf32>
    %cst_122 = arith.constant dense<0.000000e+00> : vector<8x8xf32>
    %359 = tpu.matmul %357, %358, %cst_122 {dimension_numbers = #tpu.dot_dimension_numbers<[1], [0], [0], [1], [0, 0, 1, 1], [], []>} : vector<8x8xf32>, vector<8x8xf32>, vector<8x8xf32> -> vector<8x8xf32>
    %360 = vector.extract_strided_slice %218 {offsets = [16, 0], sizes = [8, 32], strides = [1, 1]} : vector<32x32xf32> to vector<8x32xf32>
    %cst_123 = arith.constant dense<0.000000e+00> : vector<8x32xf32>
    %361 = tpu.matmul %359, %360, %cst_123 {dimension_numbers = #tpu.dot_dimension_numbers<[1], [0], [0], [1], [0, 0, 1, 1], [], []>} : vector<8x8xf32>, vector<8x32xf32>, vector<8x32xf32> -> vector<8x32xf32>
    %362 = arith.addf %342, %361 : vector<8x32xf32>
    %363 = vector.extract_strided_slice %301 {offsets = [0, 24], sizes = [8, 8], strides = [1, 1]} : vector<8x32xf32> to vector<8x8xf32>
    %cst_124 = arith.constant 0.353553385 : f32
    %364 = vector.broadcast %cst_124 : f32 to vector<8x8xf32>
    %365 = arith.mulf %363, %364 : vector<8x8xf32>
    %366 = vector.extract_strided_slice %302 {offsets = [0, 24], sizes = [8, 8], strides = [1, 1]} : vector<8x32xf32> to vector<8x8xf32>
    %cst_125 = arith.constant dense<0.000000e+00> : vector<8x8xf32>
    %367 = tpu.matmul %365, %366, %cst_125 {dimension_numbers = #tpu.dot_dimension_numbers<[1], [1], [0], [0], [0, 0, 1, 0], [], []>} : vector<8x8xf32>, vector<8x8xf32>, vector<8x8xf32> -> vector<8x8xf32>
    %cst_126 = arith.constant dense<0xFF800000> : vector<8xf32>
    %368 = vector.multi_reduction <maximumf>, %367, %cst_126 [1] : vector<8x8xf32> to vector<8xf32>
    %369 = vector.shape_cast %368 : vector<8xf32> to vector<8x1xf32>
    %370 = vector.broadcast %369 : vector<8x1xf32> to vector<8x8xf32>
    %371 = arith.subf %367, %370 : vector<8x8xf32>
    %372 = math.exp %371 : vector<8x8xf32>
    %cst_127 = arith.constant dense<0.000000e+00> : vector<8xf32>
    %373 = vector.multi_reduction <add>, %372, %cst_127 [1] : vector<8x8xf32> to vector<8xf32>
    %374 = vector.shape_cast %373 : vector<8xf32> to vector<8x1xf32>
    %375 = tpu.reciprocal %374 {approx = true} : vector<8x1xf32> -> vector<8x1xf32>
    %376 = vector.broadcast %375 : vector<8x1xf32> to vector<8x8xf32>
    %377 = arith.mulf %372, %376 : vector<8x8xf32>
    %378 = vector.extract_strided_slice %303 {offsets = [0, 24], sizes = [8, 8], strides = [1, 1]} : vector<8x32xf32> to vector<8x8xf32>
    %cst_128 = arith.constant dense<0.000000e+00> : vector<8x8xf32>
    %379 = tpu.matmul %377, %378, %cst_128 {dimension_numbers = #tpu.dot_dimension_numbers<[1], [0], [0], [1], [0, 0, 1, 1], [], []>} : vector<8x8xf32>, vector<8x8xf32>, vector<8x8xf32> -> vector<8x8xf32>
    %380 = vector.extract_strided_slice %218 {offsets = [24, 0], sizes = [8, 32], strides = [1, 1]} : vector<32x32xf32> to vector<8x32xf32>
    %cst_129 = arith.constant dense<0.000000e+00> : vector<8x32xf32>
    %381 = tpu.matmul %379, %380, %cst_129 {dimension_numbers = #tpu.dot_dimension_numbers<[1], [0], [0], [1], [0, 0, 1, 1], [], []>} : vector<8x8xf32>, vector<8x32xf32>, vector<8x32xf32> -> vector<8x32xf32>
    %382 = arith.addf %362, %381 : vector<8x32xf32>
    %383 = tpu.concatenate %300, %382 in 0 : vector<8x32xf32>, vector<8x32xf32> -> vector<16x32xf32>
    %c0_130 = arith.constant 0 : index
    %c0_131 = arith.constant 0 : index
    %384 = vector.load %arg11[%c0_130, %c0_131] : memref<1x32xf32, #tpu.memory_space<vmem>>, vector<1x32xf32>
    %385 = vector.broadcast %384 : vector<1x32xf32> to vector<16x32xf32>
    %386 = arith.addf %383, %385 : vector<16x32xf32>
    %387 = arith.addf %205, %386 : vector<16x32xf32>
    %c0_132 = arith.constant 0 : index
    %c0_133 = arith.constant 0 : index
    %388 = vector.load %arg18[%c0_132, %c0_133] : memref<1x32xf32, #tpu.memory_space<vmem>>, vector<1x32xf32>
    %c0_134 = arith.constant 0 : index
    %c0_135 = arith.constant 0 : index
    %389 = vector.load %arg19[%c0_134, %c0_135] : memref<1x32xf32, #tpu.memory_space<vmem>>, vector<1x32xf32>
    %cst_136 = arith.constant dense<0.000000e+00> : vector<16xf32>
    %390 = vector.multi_reduction <add>, %387, %cst_136 [1] : vector<16x32xf32> to vector<16xf32>
    %391 = vector.shape_cast %390 : vector<16xf32> to vector<16x1xf32>
    %cst_137 = arith.constant 3.200000e+01 : f32
    %392 = vector.broadcast %cst_137 : f32 to vector<16x1xf32>
    %393 = arith.divf %391, %392 : vector<16x1xf32>
    %394 = vector.broadcast %393 : vector<16x1xf32> to vector<16x32xf32>
    %395 = arith.subf %387, %394 : vector<16x32xf32>
    %396 = arith.mulf %395, %395 : vector<16x32xf32>
    %cst_138 = arith.constant dense<0.000000e+00> : vector<16xf32>
    %397 = vector.multi_reduction <add>, %396, %cst_138 [1] : vector<16x32xf32> to vector<16xf32>
    %398 = vector.shape_cast %397 : vector<16xf32> to vector<16x1xf32>
    %cst_139 = arith.constant 3.200000e+01 : f32
    %399 = vector.broadcast %cst_139 : f32 to vector<16x1xf32>
    %400 = arith.divf %398, %399 : vector<16x1xf32>
    %401 = vector.broadcast %393 : vector<16x1xf32> to vector<16x32xf32>
    %402 = arith.subf %387, %401 : vector<16x32xf32>
    %cst_140 = arith.constant 9.99999974E-6 : f32
    %403 = vector.broadcast %cst_140 : f32 to vector<16x1xf32>
    %404 = arith.addf %400, %403 : vector<16x1xf32>
    %405 = math.rsqrt %404 : vector<16x1xf32>
    %406 = vector.broadcast %405 : vector<16x1xf32> to vector<16x32xf32>
    %407 = arith.mulf %402, %406 : vector<16x32xf32>
    %408 = vector.broadcast %388 : vector<1x32xf32> to vector<16x32xf32>
    %409 = arith.mulf %407, %408 : vector<16x32xf32>
    %410 = vector.broadcast %389 : vector<1x32xf32> to vector<16x32xf32>
    %411 = arith.addf %409, %410 : vector<16x32xf32>
    %c0_141 = arith.constant 0 : index
    %c0_142 = arith.constant 0 : index
    %412 = vector.load %arg12[%c0_141, %c0_142] : memref<32x64xf32, #tpu.memory_space<vmem>>, vector<32x64xf32>
    %cst_143 = arith.constant dense<0.000000e+00> : vector<16x64xf32>
    %413 = tpu.matmul %411, %412, %cst_143 {dimension_numbers = #tpu.dot_dimension_numbers<[1], [0], [0], [1], [0, 0, 1, 1], [], []>} : vector<16x32xf32>, vector<32x64xf32>, vector<16x64xf32> -> vector<16x64xf32>
    %c0_144 = arith.constant 0 : index
    %c0_145 = arith.constant 0 : index
    %414 = vector.load %arg13[%c0_144, %c0_145] : memref<1x64xf32, #tpu.memory_space<vmem>>, vector<1x64xf32>
    %415 = vector.broadcast %414 : vector<1x64xf32> to vector<16x64xf32>
    %416 = arith.addf %413, %415 : vector<16x64xf32>
    %cst_146 = arith.constant 0.000000e+00 : f32
    %417 = vector.broadcast %cst_146 : f32 to vector<16x64xf32>
    %418 = arith.maximumf %416, %417 : vector<16x64xf32>
    %c0_147 = arith.constant 0 : index
    %c0_148 = arith.constant 0 : index
    %419 = vector.load %arg14[%c0_147, %c0_148] : memref<64x32xf32, #tpu.memory_space<vmem>>, vector<64x32xf32>
    %cst_149 = arith.constant dense<0.000000e+00> : vector<16x32xf32>
    %420 = tpu.matmul %418, %419, %cst_149 {dimension_numbers = #tpu.dot_dimension_numbers<[1], [0], [0], [1], [0, 0, 1, 1], [], []>} : vector<16x64xf32>, vector<64x32xf32>, vector<16x32xf32> -> vector<16x32xf32>
    %c0_150 = arith.constant 0 : index
    %c0_151 = arith.constant 0 : index
    %421 = vector.load %arg15[%c0_150, %c0_151] : memref<1x32xf32, #tpu.memory_space<vmem>>, vector<1x32xf32>
    %422 = vector.broadcast %421 : vector<1x32xf32> to vector<16x32xf32>
    %423 = arith.addf %420, %422 : vector<16x32xf32>
    %424 = arith.addf %411, %423 : vector<16x32xf32>
    %c0_152 = arith.constant 0 : index
    %c0_153 = arith.constant 0 : index
    %425 = vector.load %arg20[%c0_152, %c0_153] : memref<1x32xf32, #tpu.memory_space<vmem>>, vector<1x32xf32>
    %c0_154 = arith.constant 0 : index
    %c0_155 = arith.constant 0 : index
    %426 = vector.load %arg21[%c0_154, %c0_155] : memref<1x32xf32, #tpu.memory_space<vmem>>, vector<1x32xf32>
    %cst_156 = arith.constant dense<0.000000e+00> : vector<16xf32>
    %427 = vector.multi_reduction <add>, %424, %cst_156 [1] : vector<16x32xf32> to vector<16xf32>
    %428 = vector.shape_cast %427 : vector<16xf32> to vector<16x1xf32>
    %cst_157 = arith.constant 3.200000e+01 : f32
    %429 = vector.broadcast %cst_157 : f32 to vector<16x1xf32>
    %430 = arith.divf %428, %429 : vector<16x1xf32>
    %431 = vector.broadcast %430 : vector<16x1xf32> to vector<16x32xf32>
    %432 = arith.subf %424, %431 : vector<16x32xf32>
    %433 = arith.mulf %432, %432 : vector<16x32xf32>
    %cst_158 = arith.constant dense<0.000000e+00> : vector<16xf32>
    %434 = vector.multi_reduction <add>, %433, %cst_158 [1] : vector<16x32xf32> to vector<16xf32>
    %435 = vector.shape_cast %434 : vector<16xf32> to vector<16x1xf32>
    %cst_159 = arith.constant 3.200000e+01 : f32
    %436 = vector.broadcast %cst_159 : f32 to vector<16x1xf32>
    %437 = arith.divf %435, %436 : vector<16x1xf32>
    %438 = vector.broadcast %430 : vector<16x1xf32> to vector<16x32xf32>
    %439 = arith.subf %424, %438 : vector<16x32xf32>
    %cst_160 = arith.constant 9.99999974E-6 : f32
    %440 = vector.broadcast %cst_160 : f32 to vector<16x1xf32>
    %441 = arith.addf %437, %440 : vector<16x1xf32>
    %442 = math.rsqrt %441 : vector<16x1xf32>
    %443 = vector.broadcast %442 : vector<16x1xf32> to vector<16x32xf32>
    %444 = arith.mulf %439, %443 : vector<16x32xf32>
    %445 = vector.broadcast %425 : vector<1x32xf32> to vector<16x32xf32>
    %446 = arith.mulf %444, %445 : vector<16x32xf32>
    %447 = vector.broadcast %426 : vector<1x32xf32> to vector<16x32xf32>
    %448 = arith.addf %446, %447 : vector<16x32xf32>
    %449 = vector.shape_cast %448 : vector<16x32xf32> to vector<2x8x32xf32>
    %c0_161 = arith.constant 0 : index
    %c0_162 = arith.constant 0 : index
    %c0_163 = arith.constant 0 : index
    %450 = vector.load %arg22[%c0_161, %c0_162, %c0_163] : memref<2x8x32xf32, #tpu.memory_space<vmem>>, vector<2x8x32xf32>
    tpu.vector_store %arg22[%c0_161, %c0_162, %c0_163], %449 {strides = array<i32>} : memref<2x8x32xf32, #tpu.memory_space<vmem>>, vector<2x8x32xf32>,
    return
  }
}

</mosaic_0001>

<llo_original>
// kernel: tpu_custom_call.1
$region0: #{tpu_custom_call.1}
  #allocation0 [shape = 'u32[]', space=smem, size = 0x4, offset = 0x4, fixed_abs, tag = 'smem constant byte address 0x4 - core index']
  #allocation1 [shape = 'u32[144,128]{1,0:T(1,128)}', space=vmem, size = 0x12000, scoped, tag = 'internal scratch']
  %s0 = inlined_call_operand.hbm [shape: f32[2,8,32], index: 0, kind: input, shape index: {}]
  %s1 = inlined_call_operand.hbm [shape: f32[2,8,32], index: 1, kind: input, shape index: {}]
  %s2 = inlined_call_operand.vmem [shape: f32[32,96], index: 2, kind: input, shape index: {}]
  %s3 = inlined_call_operand.vmem [shape: f32[1,96], index: 3, kind: input, shape index: {}]
  %s4 = inlined_call_operand.vmem [shape: f32[32,32], index: 4, kind: input, shape index: {}]
  %s5 = inlined_call_operand.vmem [shape: f32[1,32], index: 5, kind: input, shape index: {}]
  %s6 = inlined_call_operand.vmem [shape: f32[32,32], index: 6, kind: input, shape index: {}]
  %s7 = inlined_call_operand.vmem [shape: f32[1,32], index: 7, kind: input, shape index: {}]
  %s8 = inlined_call_operand.hbm [shape: f32[32,64], index: 8, kind: input, shape index: {}]
  %s9 = inlined_call_operand.vmem [shape: f32[1,64], index: 9, kind: input, shape index: {}]
  %s10 = inlined_call_operand.hbm [shape: f32[32,32], index: 10, kind: input, shape index: {}]
  %s11 = inlined_call_operand.vmem [shape: f32[1,32], index: 11, kind: input, shape index: {}]
  %s12 = inlined_call_operand.hbm [shape: f32[32,64], index: 12, kind: input, shape index: {}]
  %s13 = inlined_call_operand.vmem [shape: f32[1,64], index: 13, kind: input, shape index: {}]
  %s14 = inlined_call_operand.vmem [shape: f32[64,32], index: 14, kind: input, shape index: {}]
  %s15 = inlined_call_operand.vmem [shape: f32[1,32], index: 15, kind: input, shape index: {}]
  %s16 = inlined_call_operand.vmem [shape: f32[1,32], index: 16, kind: input, shape index: {}]
  %s17 = inlined_call_operand.vmem [shape: f32[1,32], index: 17, kind: input, shape index: {}]
  %s18 = inlined_call_operand.vmem [shape: f32[1,32], index: 18, kind: input, shape index: {}]
  %s19 = inlined_call_operand.vmem [shape: f32[1,32], index: 19, kind: input, shape index: {}]
  %s20 = inlined_call_operand.vmem [shape: f32[1,32], index: 20, kind: input, shape index: {}]
  %s21 = inlined_call_operand.vmem [shape: f32[1,32], index: 21, kind: input, shape index: {}]
  %s22 = inlined_call_operand.hbm [shape: f32[2,8,32], index: 22, kind: output, shape index: {}]
  %s23 = sld [smem:[#allocation0]]
  $region118: #{tpu_custom_call.1} parent=0
    _
  %s25 = ssub.s32 1, %s23
  %s26 = scalar_select 0, %s25, %s23
  $region1: #{tpu_custom_call.1} parent=0
    #allocation2 [shape = 'u8[8192]{0}', space=vmem, size = 0x2000, scoped, tag = 'input window, operand 0, single buffered']
    #allocation3 [shape = 's32[1]{0}', space=sflag, size = 0x4, scoped, tag = 'scoped memory for tpu_custom_call.1']
    #allocation4 [shape = 's32[1]{0}', space=sflag, size = 0x4, scoped, tag = 'scoped memory for tpu_custom_call.1']
    #allocation5 [shape = 'u8[8192]{0}', space=vmem, size = 0x2000, scoped, tag = 'input window, operand 1, single buffered']
    #allocation6 [shape = 's32[1]{0}', space=sflag, size = 0x4, scoped, tag = 'scoped memory for tpu_custom_call.1']
    #allocation7 [shape = 'u8[16384]{0}', space=vmem, size = 0x4000, scoped, tag = 'input window, operand 8, single buffered']
    #allocation8 [shape = 'u8[16384]{0}', space=vmem, size = 0x4000, scoped, tag = 'input window, operand 10, single buffered']
    #allocation9 [shape = 's32[1]{0}', space=sflag, size = 0x4, scoped, tag = 'scoped memory for tpu_custom_call.1']
    #allocation10 [shape = 'u8[16384]{0}', space=vmem, size = 0x4000, scoped, tag = 'input window, operand 12, single buffered']
    #allocation11 [shape = 'u8[8192]{0}', space=vmem, size = 0x2000, scoped, tag = 'output window, operand 0, single buffered']
    %27 = vsyncpa [#allocation3], 0
    %28 = vsyncpa [#allocation6], 0
    %29 = vsyncpa [#allocation9], 0
    %30 = vsyncpa [#allocation4], 0
    // Predicated region
    $region2: #{tpu_custom_call.1} parent=1 // pred_check
      _
    $region3: #{tpu_custom_call.1} parent=1 // pred_check_branch
      %32 = sbr.rel (0) target = $region5
    $region4: #{tpu_custom_call.1} parent=1 // pred_region
      %s34 = ssub.s32 256, 256
      %35 = vsyncadd [#allocation3], %s34
      %s36 = sshll.u32 [#allocation2], 4
      %s37 = int_to_ptr.vmem [resolvable:$true] %s36
      %42 = dma.hbm_to_vmem [thread:$0]  %s0, 256, %s37, [#allocation3], 128, 128, 8
    $region5: #{tpu_custom_call.1} parent=1 // pred_fallthru
      _
    // Predicated region
    $region6: #{tpu_custom_call.1} parent=1 // pred_check
      _
    $region7: #{tpu_custom_call.1} parent=1 // pred_check_branch
      %44 = sbr.rel (0) target = $region9
    $region8: #{tpu_custom_call.1} parent=1 // pred_region
      %s46 = ssub.s32 256, 256
      %47 = vsyncadd [#allocation6], %s46
      %s48 = sshll.u32 [#allocation5], 4
      %s49 = int_to_ptr.vmem [resolvable:$true] %s48
      %54 = dma.hbm_to_vmem [thread:$0]  %s1, 256, %s49, [#allocation6], 128, 128, 8
    $region9: #{tpu_custom_call.1} parent=1 // pred_fallthru
      _
    // Predicated region
    $region10: #{tpu_custom_call.1} parent=1 // pred_check
      _
    $region11: #{tpu_custom_call.1} parent=1 // pred_check_branch
      %56 = sbr.rel (0) target = $region13
    $region12: #{tpu_custom_call.1} parent=1 // pred_region
      _
    $region13: #{tpu_custom_call.1} parent=1 // pred_fallthru
      _
    // Predicated region
    $region14: #{tpu_custom_call.1} parent=1 // pred_check
      _
    $region15: #{tpu_custom_call.1} parent=1 // pred_check_branch
      %58 = sbr.rel (0) target = $region17
    $region16: #{tpu_custom_call.1} parent=1 // pred_region
      _
    $region17: #{tpu_custom_call.1} parent=1 // pred_fallthru
      _
    // Predicated region
    $region18: #{tpu_custom_call.1} parent=1 // pred_check
      _
    $region19: #{tpu_custom_call.1} parent=1 // pred_check_branch
      %60 = sbr.rel (0) target = $region21
    $region20: #{tpu_custom_call.1} parent=1 // pred_region
      _
    $region21: #{tpu_custom_call.1} parent=1 // pred_fallthru
      _
    // Predicated region
    $region22: #{tpu_custom_call.1} parent=1 // pred_check
      _
    $region23: #{tpu_custom_call.1} parent=1 // pred_check_branch
      %62 = sbr.rel (0) target = $region25
    $region24: #{tpu_custom_call.1} parent=1 // pred_region
      _
    $region25: #{tpu_custom_call.1} parent=1 // pred_fallthru
      _
    // Predicated region
    $region26: #{tpu_custom_call.1} parent=1 // pred_check
      _
    $region27: #{tpu_custom_call.1} parent=1 // pred_check_branch
      %64 = sbr.rel (0) target = $region29
    $region28: #{tpu_custom_call.1} parent=1 // pred_region
      _
    $region29: #{tpu_custom_call.1} parent=1 // pred_fallthru
      _
    // Predicated region
    $region30: #{tpu_custom_call.1} parent=1 // pred_check
      _
    $region31: #{tpu_custom_call.1} parent=1 // pred_check_branch
      %66 = sbr.rel (0) target = $region33
    $region32: #{tpu_custom_call.1} parent=1 // pred_region
      _
    $region33: #{tpu_custom_call.1} parent=1 // pred_fallthru
      _
    // Predicated region
    $region34: #{tpu_custom_call.1} parent=1 // pred_check
      _
    $region35: #{tpu_custom_call.1} parent=1 // pred_check_branch
      %68 = sbr.rel (0) target = $region37
    $region36: #{tpu_custom_call.1} parent=1 // pred_region
      %s70 = ssub.s32 512, 512
      %71 = vsyncadd [#allocation6], %s70
      %s72 = sshll.u32 [#allocation7], 4
      %s73 = int_to_ptr.vmem [resolvable:$true] %s72
      %78 = dma.hbm_to_vmem [thread:$0]  %s8, 512, %s73, [#allocation6], 128, 128, 8
    $region37: #{tpu_custom_call.1} parent=1 // pred_fallthru
      _
    // Predicated region
    $region38: #{tpu_custom_call.1} parent=1 // pred_check
      _
    $region39: #{tpu_custom_call.1} parent=1 // pred_check_branch
      %80 = sbr.rel (0) target = $region41
    $region40: #{tpu_custom_call.1} parent=1 // pred_region
      _
    $region41: #{tpu_custom_call.1} parent=1 // pred_fallthru
      _
    // Predicated region
    $region42: #{tpu_custom_call.1} parent=1 // pred_check
      _
    $region43: #{tpu_custom_call.1} parent=1 // pred_check_branch
      %82 = sbr.rel (0) target = $region45
    $region44: #{tpu_custom_call.1} parent=1 // pred_region
      %s84 = ssub.s32 512, 512
      %85 = vsyncadd [#allocation9], %s84
      %s86 = sshll.u32 [#allocation8], 4
      %s87 = int_to_ptr.vmem [resolvable:$true] %s86
      %92 = dma.hbm_to_vmem [thread:$0]  %s10, 512, %s87, [#allocation9], 128, 128, 8
    $region45: #{tpu_custom_call.1} parent=1 // pred_fallthru
      _
    // Predicated region
    $region46: #{tpu_custom_call.1} parent=1 // pred_check
      _
    $region47: #{tpu_custom_call.1} parent=1 // pred_check_branch
      %94 = sbr.rel (0) target = $region49
    $region48: #{tpu_custom_call.1} parent=1 // pred_region
      _
    $region49: #{tpu_custom_call.1} parent=1 // pred_fallthru
      _
    // Predicated region
    $region50: #{tpu_custom_call.1} parent=1 // pred_check
      _
    $region51: #{tpu_custom_call.1} parent=1 // pred_check_branch
      %96 = sbr.rel (0) target = $region53
    $region52: #{tpu_custom_call.1} parent=1 // pred_region
      %s98 = ssub.s32 512, 512
      %99 = vsyncadd [#allocation9], %s98
      %s100 = sshll.u32 [#allocation10], 4
      %s101 = int_to_ptr.vmem [resolvable:$true] %s100
      %106 = dma.hbm_to_vmem [thread:$0]  %s12, 512, %s101, [#allocation9], 128, 128, 8
    $region53: #{tpu_custom_call.1} parent=1 // pred_fallthru
      _
    // Predicated region
    $region54: #{tpu_custom_call.1} parent=1 // pred_check
      _
    $region55: #{tpu_custom_call.1} parent=1 // pred_check_branch
      %108 = sbr.rel (0) target = $region57
    $region56: #{tpu_custom_call.1} parent=1 // pred_region
      _
    $region57: #{tpu_custom_call.1} parent=1 // pred_fallthru
      _
    // Predicated region
    $region58: #{tpu_custom_call.1} parent=1 // pred_check
      _
    $region59: #{tpu_custom_call.1} parent=1 // pred_check_branch
      %110 = sbr.rel (0) target = $region61
    $region60: #{tpu_custom_call.1} parent=1 // pred_region
      _
    $region61: #{tpu_custom_call.1} parent=1 // pred_fallthru
      _
    // Predicated region
    $region62: #{tpu_custom_call.1} parent=1 // pred_check
      _
    $region63: #{tpu_custom_call.1} parent=1 // pred_check_branch
      %112 = sbr.rel (0) target = $region65
    $region64: #{tpu_custom_call.1} parent=1 // pred_region
      _
    $region65: #{tpu_custom_call.1} parent=1 // pred_fallthru
      _
    // Predicated region
    $region66: #{tpu_custom_call.1} parent=1 // pred_check
      _
    $region67: #{tpu_custom_call.1} parent=1 // pred_check_branch
      %114 = sbr.rel (0) target = $region69
    $region68: #{tpu_custom_call.1} parent=1 // pred_region
      _
    $region69: #{tpu_custom_call.1} parent=1 // pred_fallthru
      _
    // Predicated region
    $region70: #{tpu_custom_call.1} parent=1 // pred_check
      _
    $region71: #{tpu_custom_call.1} parent=1 // pred_check_branch
      %116 = sbr.rel (0) target = $region73
    $region72: #{tpu_custom_call.1} parent=1 // pred_region
      _
    $region73: #{tpu_custom_call.1} parent=1 // pred_fallthru
      _
    // Predicated region
    $region74: #{tpu_custom_call.1} parent=1 // pred_check
      _
    $region75: #{tpu_custom_call.1} parent=1 // pred_check_branch
      %118 = sbr.rel (0) target = $region77
    $region76: #{tpu_custom_call.1} parent=1 // pred_region
      _
    $region77: #{tpu_custom_call.1} parent=1 // pred_fallthru
      _
    // Predicated region
    $region78: #{tpu_custom_call.1} parent=1 // pred_check
      _
    $region79: #{tpu_custom_call.1} parent=1 // pred_check_branch
      %120 = sbr.rel (0) target = $region81
    $region80: #{tpu_custom_call.1} parent=1 // pred_region
      _
    $region81: #{tpu_custom_call.1} parent=1 // pred_fallthru
      _
    // Predicated region
    $region82: #{tpu_custom_call.1} parent=1 // pred_check
      _
    $region83: #{tpu_custom_call.1} parent=1 // pred_check_branch
      %122 = sbr.rel (0) target = $region85
    $region84: #{tpu_custom_call.1} parent=1 // pred_region
      _
    $region85: #{tpu_custom_call.1} parent=1 // pred_fallthru
      _
    // Predicated region
    $region86: #{tpu_custom_call.1} parent=1 // pred_check
      _
    $region87: #{tpu_custom_call.1} parent=1 // pred_check_branch
      %124 = sbr.rel (0) target = $region89
    $region88: #{tpu_custom_call.1} parent=1 // pred_region
      _
    $region89: #{tpu_custom_call.1} parent=1 // pred_fallthru
      _
    // Predicated region
    $region90: #{tpu_custom_call.1} parent=1 // pred_check
      _
    $region91: #{tpu_custom_call.1} parent=1 // pred_check_branch
      %126 = sbr.rel (0) target = $region93
    $region92: #{tpu_custom_call.1} parent=1 // pred_region
      %127 = dma.done [#allocation3], 256
    $region93: #{tpu_custom_call.1} parent=1 // pred_fallthru
      _
    // Predicated region
    $region94: #{tpu_custom_call.1} parent=1 // pred_check
      _
    $region95: #{tpu_custom_call.1} parent=1 // pred_check_branch
      %129 = sbr.rel (0) target = $region97
    $region96: #{tpu_custom_call.1} parent=1 // pred_region
      %130 = dma.done [#allocation6], 256
    $region97: #{tpu_custom_call.1} parent=1 // pred_fallthru
      _
    // Predicated region
    $region98: #{tpu_custom_call.1} parent=1 // pred_check
      _
    $region99: #{tpu_custom_call.1} parent=1 // pred_check_branch
      %132 = sbr.rel (0) target = $region101
    $region100: #{tpu_custom_call.1} parent=1 // pred_region
      %133 = dma.done [#allocation6], 512
    $region101: #{tpu_custom_call.1} parent=1 // pred_fallthru
      _
    // Predicated region
    $region102: #{tpu_custom_call.1} parent=1 // pred_check
      _
    $region103: #{tpu_custom_call.1} parent=1 // pred_check_branch
      %135 = sbr.rel (0) target = $region105
    $region104: #{tpu_custom_call.1} parent=1 // pred_region
      %136 = dma.done [#allocation9], 512
    $region105: #{tpu_custom_call.1} parent=1 // pred_fallthru
      _
    // Predicated region
    $region106: #{tpu_custom_call.1} parent=1 // pred_check
      _
    $region107: #{tpu_custom_call.1} parent=1 // pred_check_branch
      %138 = sbr.rel (0) target = $region109
    $region108: #{tpu_custom_call.1} parent=1 // pred_region
      %139 = dma.done [#allocation9], 512
    $region109: #{tpu_custom_call.1} parent=1 // pred_fallthru
      _
    %v140 = vld [vmem:[#allocation2] sm:$0xff]
    %v141 = vld [vmem:[#allocation2 + $0x8] sm:$0xff]
    %v142 = vld [vmem:[#allocation5] sm:$0xff]
    %v143 = vld [vmem:[#allocation5 + $0x8] sm:$0xff]
    %v144 = vld [vmem:[%s2] sm:$0xff]
    %v145 = vld [vmem:[%s2 + $0x8] sm:$0xff]
    %v146 = vld [vmem:[%s2 + $0x10] sm:$0xff]
    %v147 = vld [vmem:[%s2 + $0x18] sm:$0xff]
    %v148 = vld [vmem:[%s3] sm:$0x1]
    %v150 = vlaneseq
    %v151 = vshrl.u32 %v150, 7
    %v152 = vsub.s32 0, %v151
    %v153 = vrot.slane %v148, %v152
    %vm155 = vcmask 261120
    %v157 = vsel %vm155, %v140, 0
    %v160 = vsel %vm155, %v141, 0
    %162 = vmatprep.subr.mxu0 0.0
    %163 = vmatpush1.msra.mxu0 0.0
    %164 = vmatprep.subr.mxu0 0.0
    %165 = vmatpush1.msra.mxu0 0.0
    %166 = vmatprep.subr.mxu0 0.0
    %167 = vmatpush1.msra.mxu0 0.0
    %168 = vmatprep.subr.mxu0 0.0
    %169 = vmatpush1.msra.mxu0 0.0
    %170 = vmatprep.subr.mxu0 0.0
    %171 = vmatpush1.msra.mxu0 0.0
    %172 = vmatprep.subr.mxu0 0.0
    %173 = vmatpush1.msra.mxu0 0.0
    %174 = vmatprep.subr.mxu0 0.0
    %175 = vmatpush1.msra.mxu0 0.0
    %176 = vmatprep.subr.mxu0 0.0
    %177 = vmatpush1.msra.mxu0 0.0
    %178 = vmatprep.subr.mxu0 0.0
    %179 = vmatpush1.msra.mxu0 0.0
    %180 = vmatprep.subr.mxu0 0.0
    %181 = vmatpush1.msra.mxu0 0.0
    %182 = vmatprep.subr.mxu0 0.0
    %183 = vmatpush1.msra.mxu0 0.0
    %184 = vmatprep.subr.mxu0 0.0
    %185 = vmatpush1.msra.mxu0 0.0
    %186 = vmatprep.subr.mxu0 0.0
    %187 = vmatpush1.msra.mxu0 %v147
    %188 = vmatprep.subr.mxu0 0.0
    %189 = vmatpush1.msra.mxu0 %v146
    %190 = vmatprep.subr.mxu0 0.0
    %191 = vmatpush1.msra.mxu0 %v145
    %192 = vmatprep.subr.mxu0 0.0
    %193 = vmatpush1.msra.mxu0 %v144
    %194 = vmatprep.subr.mxu0 0.0
    %195 = vmatpush2.msra.mxu0 0.0
    %196 = vmatprep.subr.mxu0 0.0
    %197 = vmatpush2.msra.mxu0 0.0
    %198 = vmatprep.subr.mxu0 0.0
    %199 = vmatpush2.msra.mxu0 0.0
    %200 = vmatprep.subr.mxu0 0.0
    %201 = vmatpush2.msra.mxu0 0.0
    %202 = vmatprep.subr.mxu0 0.0
    %203 = vmatpush2.msra.mxu0 0.0
    %204 = vmatprep.subr.mxu0 0.0
    %205 = vmatpush2.msra.mxu0 0.0
    %206 = vmatprep.subr.mxu0 0.0
    %207 = vmatpush2.msra.mxu0 0.0
    %208 = vmatprep.subr.mxu0 0.0
    %209 = vmatpush2.msra.mxu0 0.0
    %210 = vmatprep.subr.mxu0 0.0
    %211 = vmatpush2.msra.mxu0 0.0
    %212 = vmatprep.subr.mxu0 0.0
    %213 = vmatpush2.msra.mxu0 0.0
    %214 = vmatprep.subr.mxu0 0.0
    %215 = vmatpush2.msra.mxu0 0.0
    %216 = vmatprep.subr.mxu0 0.0
    %217 = vmatpush2.msra.mxu0 0.0
    %218 = vmatprep.subr.mxu0 0.0
    %219 = vmatpush2.msra.mxu0 0.0
    %220 = vmatprep.subr.mxu0 0.0
    %221 = vmatpush2.msra.mxu0 0.0
    %222 = vmatprep.subr.mxu0 0.0
    %223 = vmatpush2.msra.mxu0 0.0
    %224 = vmatprep.subr.mxu0 0.0
    %225 = vmatpush2.msra.mxu0 0.0
    %226 = vmatprep.mubr.f32.mxu0 0.0
    %227 = vmatmul.mubr.f32.gmra.mxu0 %v157
    %v228 = vpop.f32.mrf.mxu0
    %v229 = vadd.f32 %v153, %v228
    %v230 = vpop.f32.mrf.mxu0
    %231 = vmatprep.mubr.f32.mxu0 0.0
    %232 = vmatmul.mubr.f32.gmra.mxu0 %v160
    %v233 = vpop.f32.mrf.mxu0
    %v234 = vadd.f32 %v153, %v233
    %v235 = vpop.f32.mrf.mxu0
    %236 = vdwg.mxu0
    %v237 = vld [vmem:[%s4] sm:$0xff]
    %v238 = vld [vmem:[%s4 + $0x8] sm:$0xff]
    %v239 = vld [vmem:[%s4 + $0x10] sm:$0xff]
    %v240 = vld [vmem:[%s4 + $0x18] sm:$0xff]
    %v241 = vmul.f32 %v229, 0.35355338
    %243 = vrot.lane.b32.xlu0 %v229, 96
    %v244 = vpop.permute.xlu0 %243
    %vm245 = vcmask 64512
    %v247 = vsel %vm245, %v241, 0
    %v249 = vsel %vm245, %v244, 0
    %251 = vmatprep.subr.mxu0 0.0
    %252 = vmatpush1.xpose.msra.mxu0 0.0
    %253 = vmatprep.subr.mxu0 0.0
    %254 = vmatpush1.xpose.msra.mxu0 0.0
    %255 = vmatprep.subr.mxu0 0.0
    %256 = vmatpush1.xpose.msra.mxu0 0.0
    %257 = vmatprep.subr.mxu0 0.0
    %258 = vmatpush1.xpose.msra.mxu0 0.0
    %259 = vmatprep.subr.mxu0 0.0
    %260 = vmatpush1.xpose.msra.mxu0 0.0
    %261 = vmatprep.subr.mxu0 0.0
    %262 = vmatpush1.xpose.msra.mxu0 0.0
    %263 = vmatprep.subr.mxu0 0.0
    %264 = vmatpush1.xpose.msra.mxu0 0.0
    %265 = vmatprep.subr.mxu0 0.0
    %266 = vmatpush1.xpose.msra.mxu0 0.0
    %267 = vmatprep.subr.mxu0 0.0
    %268 = vmatpush1.xpose.msra.mxu0 0.0
    %269 = vmatprep.subr.mxu0 0.0
    %270 = vmatpush1.xpose.msra.mxu0 0.0
    %271 = vmatprep.subr.mxu0 0.0
    %272 = vmatpush1.xpose.msra.mxu0 0.0
    %273 = vmatprep.subr.mxu0 0.0
    %274 = vmatpush1.xpose.msra.mxu0 0.0
    %275 = vmatprep.subr.mxu0 0.0
    %276 = vmatpush1.xpose.msra.mxu0 0.0
    %277 = vmatprep.subr.mxu0 0.0
    %278 = vmatpush1.xpose.msra.mxu0 0.0
    %279 = vmatprep.subr.mxu0 0.0
    %280 = vmatpush1.xpose.msra.mxu0 0.0
    %281 = vmatprep.subr.mxu0 0.0
    %282 = vmatpush1.xpose.msra.mxu0 %v249
    %283 = vmatprep.subr.mxu0 0.0
    %284 = vmatpush2.xpose.msra.mxu0 0.0
    %285 = vmatprep.subr.mxu0 0.0
    %286 = vmatpush2.xpose.msra.mxu0 0.0
    %287 = vmatprep.subr.mxu0 0.0
    %288 = vmatpush2.xpose.msra.mxu0 0.0
    %289 = vmatprep.subr.mxu0 0.0
    %290 = vmatpush2.xpose.msra.mxu0 0.0
    %291 = vmatprep.subr.mxu0 0.0
    %292 = vmatpush2.xpose.msra.mxu0 0.0
    %293 = vmatprep.subr.mxu0 0.0
    %294 = vmatpush2.xpose.msra.mxu0 0.0
    %295 = vmatprep.subr.mxu0 0.0
    %296 = vmatpush2.xpose.msra.mxu0 0.0
    %297 = vmatprep.subr.mxu0 0.0
    %298 = vmatpush2.xpose.msra.mxu0 0.0
    %299 = vmatprep.subr.mxu0 0.0
    %300 = vmatpush2.xpose.msra.mxu0 0.0
    %301 = vmatprep.subr.mxu0 0.0
    %302 = vmatpush2.xpose.msra.mxu0 0.0
    %303 = vmatprep.subr.mxu0 0.0
    %304 = vmatpush2.xpose.msra.mxu0 0.0
    %305 = vmatprep.subr.mxu0 0.0
    %306 = vmatpush2.xpose.msra.mxu0 0.0
    %307 = vmatprep.subr.mxu0 0.0
    %308 = vmatpush2.xpose.msra.mxu0 0.0
    %309 = vmatprep.subr.mxu0 0.0
    %310 = vmatpush2.xpose.msra.mxu0 0.0
    %311 = vmatprep.subr.mxu0 0.0
    %312 = vmatpush2.xpose.msra.mxu0 0.0
    %313 = vmatprep.subr.mxu0 0.0
    %314 = vmatpush2.xpose.msra.mxu0 0.0
    %315 = vmatprep.mubr.f32.mxu0 0.0
    %316 = vmatmul.mubr.f32.gmra.mxu0 %v247
    %v317 = vpop.f32.mrf.mxu0
    %v318 = vadd.f32 0.0, %v317
    %v319 = vpop.f32.mrf.mxu0
    %320 = vdwg.mxu0
    %v321 = vsel %vm245, %v318, -inf
    %322 = vmax.xlane.f32.xlu0 %v321
    %v323 = vpop.xlane.xlu0 %322
    %v324 = vsub.f32 %v318, %v323
    %v325 = vmul.f32 %v324, 1.442695
    %v326 = vpow.pop %v325
    %v327 = vsel %vm245, %v326, 0.0
    %328 = vadd.xlane.f32.xlu0 %v327
    %v329 = vpop.xlane.xlu0 %328
    %v330 = vrcp.pop %v329
    %v331 = vmul.f32 %v326, %v330
    %332 = vrot.lane.b32.xlu0 %v229, 64
    %v333 = vpop.permute.xlu0 %332
    %v336 = vsel %vm245, %v331, 0
    %338 = vmatprep.subr.mxu0 0.0
    %339 = vmatpush1.msra.mxu0 0.0
    %340 = vmatprep.subr.mxu0 0.0
    %341 = vmatpush1.msra.mxu0 0.0
    %342 = vmatprep.subr.mxu0 0.0
    %343 = vmatpush1.msra.mxu0 0.0
    %344 = vmatprep.subr.mxu0 0.0
    %345 = vmatpush1.msra.mxu0 0.0
    %346 = vmatprep.subr.mxu0 0.0
    %347 = vmatpush1.msra.mxu0 0.0
    %348 = vmatprep.subr.mxu0 0.0
    %349 = vmatpush1.msra.mxu0 0.0
    %350 = vmatprep.subr.mxu0 0.0
    %351 = vmatpush1.msra.mxu0 0.0
    %352 = vmatprep.subr.mxu0 0.0
    %353 = vmatpush1.msra.mxu0 0.0
    %354 = vmatprep.subr.mxu0 0.0
    %355 = vmatpush1.msra.mxu0 0.0
    %356 = vmatprep.subr.mxu0 0.0
    %357 = vmatpush1.msra.mxu0 0.0
    %358 = vmatprep.subr.mxu0 0.0
    %359 = vmatpush1.msra.mxu0 0.0
    %360 = vmatprep.subr.mxu0 0.0
    %361 = vmatpush1.msra.mxu0 0.0
    %362 = vmatprep.subr.mxu0 0.0
    %363 = vmatpush1.msra.mxu0 0.0
    %364 = vmatprep.subr.mxu0 0.0
    %365 = vmatpush1.msra.mxu0 0.0
    %366 = vmatprep.subr.mxu0 0.0
    %367 = vmatpush1.msra.mxu0 0.0
    %368 = vmatprep.subr.mxu0 0.0
    %369 = vmatpush1.msra.mxu0 %v333
    %370 = vmatprep.subr.mxu0 0.0
    %371 = vmatpush2.msra.mxu0 0.0
    %372 = vmatprep.subr.mxu0 0.0
    %373 = vmatpush2.msra.mxu0 0.0
    %374 = vmatprep.subr.mxu0 0.0
    %375 = vmatpush2.msra.mxu0 0.0
    %376 = vmatprep.subr.mxu0 0.0
    %377 = vmatpush2.msra.mxu0 0.0
    %378 = vmatprep.subr.mxu0 0.0
    %379 = vmatpush2.msra.mxu0 0.0
    %380 = vmatprep.subr.mxu0 0.0
    %381 = vmatpush2.msra.mxu0 0.0
    %382 = vmatprep.subr.mxu0 0.0
    %383 = vmatpush2.msra.mxu0 0.0
    %384 = vmatprep.subr.mxu0 0.0
    %385 = vmatpush2.msra.mxu0 0.0
    %386 = vmatprep.subr.mxu0 0.0
    %387 = vmatpush2.msra.mxu0 0.0
    %388 = vmatprep.subr.mxu0 0.0
    %389 = vmatpush2.msra.mxu0 0.0
    %390 = vmatprep.subr.mxu0 0.0
    %391 = vmatpush2.msra.mxu0 0.0
    %392 = vmatprep.subr.mxu0 0.0
    %393 = vmatpush2.msra.mxu0 0.0
    %394 = vmatprep.subr.mxu0 0.0
    %395 = vmatpush2.msra.mxu0 0.0
    %396 = vmatprep.subr.mxu0 0.0
    %397 = vmatpush2.msra.mxu0 0.0
    %398 = vmatprep.subr.mxu0 0.0
    %399 = vmatpush2.msra.mxu0 0.0
    %400 = vmatprep.subr.mxu0 0.0
    %401 = vmatpush2.msra.mxu0 0.0
    %402 = vmatprep.mubr.f32.mxu0 0.0
    %403 = vmatmul.mubr.f32.gmra.mxu0 %v336
    %v404 = vpop.f32.mrf.mxu0
    %v405 = vadd.f32 0.0, %v404
    %v406 = vpop.f32.mrf.mxu0
    %407 = vdwg.mxu0
    %408 = vrot.lane.b32.xlu0 %v241, 120
    %v409 = vpop.permute.xlu0 %408
    %410 = vrot.lane.b32.xlu0 %v229, 88
    %v411 = vpop.permute.xlu0 %410
    %v412 = vsel %vm245, %v409, 0
    %v414 = vsel %vm245, %v411, 0
    %416 = vmatprep.subr.mxu0 0.0
    %417 = vmatpush1.xpose.msra.mxu0 0.0
    %418 = vmatprep.subr.mxu0 0.0
    %419 = vmatpush1.xpose.msra.mxu0 0.0
    %420 = vmatprep.subr.mxu0 0.0
    %421 = vmatpush1.xpose.msra.mxu0 0.0
    %422 = vmatprep.subr.mxu0 0.0
    %423 = vmatpush1.xpose.msra.mxu0 0.0
    %424 = vmatprep.subr.mxu0 0.0
    %425 = vmatpush1.xpose.msra.mxu0 0.0
    %426 = vmatprep.subr.mxu0 0.0
    %427 = vmatpush1.xpose.msra.mxu0 0.0
    %428 = vmatprep.subr.mxu0 0.0
    %429 = vmatpush1.xpose.msra.mxu0 0.0
    %430 = vmatprep.subr.mxu0 0.0
    %431 = vmatpush1.xpose.msra.mxu0 0.0
    %432 = vmatprep.subr.mxu0 0.0
    %433 = vmatpush1.xpose.msra.mxu0 0.0
    %434 = vmatprep.subr.mxu0 0.0
    %435 = vmatpush1.xpose.msra.mxu0 0.0
    %436 = vmatprep.subr.mxu0 0.0
    %437 = vmatpush1.xpose.msra.mxu0 0.0
    %438 = vmatprep.subr.mxu0 0.0
    %439 = vmatpush1.xpose.msra.mxu0 0.0
    %440 = vmatprep.subr.mxu0 0.0
    %441 = vmatpush1.xpose.msra.mxu0 0.0
    %442 = vmatprep.subr.mxu0 0.0
    %443 = vmatpush1.xpose.msra.mxu0 0.0
    %444 = vmatprep.subr.mxu0 0.0
    %445 = vmatpush1.xpose.msra.mxu0 0.0
    %446 = vmatprep.subr.mxu0 0.0
    %447 = vmatpush1.xpose.msra.mxu0 %v414
    %448 = vmatprep.subr.mxu0 0.0
    %449 = vmatpush2.xpose.msra.mxu0 0.0
    %450 = vmatprep.subr.mxu0 0.0
    %451 = vmatpush2.xpose.msra.mxu0 0.0
    %452 = vmatprep.subr.mxu0 0.0
    %453 = vmatpush2.xpose.msra.mxu0 0.0
    %454 = vmatprep.subr.mxu0 0.0
    %455 = vmatpush2.xpose.msra.mxu0 0.0
    %456 = vmatprep.subr.mxu0 0.0
    %457 = vmatpush2.xpose.msra.mxu0 0.0
    %458 = vmatprep.subr.mxu0 0.0
    %459 = vmatpush2.xpose.msra.mxu0 0.0
    %460 = vmatprep.subr.mxu0 0.0
    %461 = vmatpush2.xpose.msra.mxu0 0.0
    %462 = vmatprep.subr.mxu0 0.0
    %463 = vmatpush2.xpose.msra.mxu0 0.0
    %464 = vmatprep.subr.mxu0 0.0
    %465 = vmatpush2.xpose.msra.mxu0 0.0
    %466 = vmatprep.subr.mxu0 0.0
    %467 = vmatpush2.xpose.msra.mxu0 0.0
    %468 = vmatprep.subr.mxu0 0.0
    %469 = vmatpush2.xpose.msra.mxu0 0.0
    %470 = vmatprep.subr.mxu0 0.0
    %471 = vmatpush2.xpose.msra.mxu0 0.0
    %472 = vmatprep.subr.mxu0 0.0
    %473 = vmatpush2.xpose.msra.mxu0 0.0
    %474 = vmatprep.subr.mxu0 0.0
    %475 = vmatpush2.xpose.msra.mxu0 0.0
    %476 = vmatprep.subr.mxu0 0.0
    %477 = vmatpush2.xpose.msra.mxu0 0.0
    %478 = vmatprep.subr.mxu0 0.0
    %479 = vmatpush2.xpose.msra.mxu0 0.0
    %480 = vmatprep.mubr.f32.mxu0 0.0
    %481 = vmatmul.mubr.f32.gmra.mxu0 %v412
    %v482 = vpop.f32.mrf.mxu0
    %v483 = vadd.f32 0.0, %v482
    %v484 = vpop.f32.mrf.mxu0
    %485 = vdwg.mxu0
    %v486 = vsel %vm245, %v483, -inf
    %487 = vmax.xlane.f32.xlu0 %v486
    %v488 = vpop.xlane.xlu0 %487
    %v489 = vsub.f32 %v483, %v488
    %v490 = vmul.f32 %v489, 1.442695
    %v491 = vpow.pop %v490
    %v492 = vsel %vm245, %v491, 0.0
    %493 = vadd.xlane.f32.xlu0 %v492
    %v494 = vpop.xlane.xlu0 %493
    %v495 = vrcp.pop %v494
    %v496 = vmul.f32 %v491, %v495
    %497 = vrot.lane.b32.xlu0 %v229, 56
    %v498 = vpop.permute.xlu0 %497
    %v501 = vsel %vm245, %v496, 0
    %503 = vmatprep.subr.mxu0 0.0
    %504 = vmatpush1.msra.mxu0 0.0
    %505 = vmatprep.subr.mxu0 0.0
    %506 = vmatpush1.msra.mxu0 0.0
    %507 = vmatprep.subr.mxu0 0.0
    %508 = vmatpush1.msra.mxu0 0.0
    %509 = vmatprep.subr.mxu0 0.0
    %510 = vmatpush1.msra.mxu0 0.0
    %511 = vmatprep.subr.mxu0 0.0
    %512 = vmatpush1.msra.mxu0 0.0
    %513 = vmatprep.subr.mxu0 0.0
    %514 = vmatpush1.msra.mxu0 0.0
    %515 = vmatprep.subr.mxu0 0.0
    %516 = vmatpush1.msra.mxu0 0.0
    %517 = vmatprep.subr.mxu0 0.0
    %518 = vmatpush1.msra.mxu0 0.0
    %519 = vmatprep.subr.mxu0 0.0
    %520 = vmatpush1.msra.mxu0 0.0
    %521 = vmatprep.subr.mxu0 0.0
    %522 = vmatpush1.msra.mxu0 0.0
    %523 = vmatprep.subr.mxu0 0.0
    %524 = vmatpush1.msra.mxu0 0.0
    %525 = vmatprep.subr.mxu0 0.0
    %526 = vmatpush1.msra.mxu0 0.0
    %527 = vmatprep.subr.mxu0 0.0
    %528 = vmatpush1.msra.mxu0 0.0
    %529 = vmatprep.subr.mxu0 0.0
    %530 = vmatpush1.msra.mxu0 0.0
    %531 = vmatprep.subr.mxu0 0.0
    %532 = vmatpush1.msra.mxu0 0.0
    %533 = vmatprep.subr.mxu0 0.0
    %534 = vmatpush1.msra.mxu0 %v498
    %535 = vmatprep.subr.mxu0 0.0
    %536 = vmatpush2.msra.mxu0 0.0
    %537 = vmatprep.subr.mxu0 0.0
    %538 = vmatpush2.msra.mxu0 0.0
    %539 = vmatprep.subr.mxu0 0.0
    %540 = vmatpush2.msra.mxu0 0.0
    %541 = vmatprep.subr.mxu0 0.0
    %542 = vmatpush2.msra.mxu0 0.0
    %543 = vmatprep.subr.mxu0 0.0
    %544 = vmatpush2.msra.mxu0 0.0
    %545 = vmatprep.subr.mxu0 0.0
    %546 = vmatpush2.msra.mxu0 0.0
    %547 = vmatprep.subr.mxu0 0.0
    %548 = vmatpush2.msra.mxu0 0.0
    %549 = vmatprep.subr.mxu0 0.0
    %550 = vmatpush2.msra.mxu0 0.0
    %551 = vmatprep.subr.mxu0 0.0
    %552 = vmatpush2.msra.mxu0 0.0
    %553 = vmatprep.subr.mxu0 0.0
    %554 = vmatpush2.msra.mxu0 0.0
    %555 = vmatprep.subr.mxu0 0.0
    %556 = vmatpush2.msra.mxu0 0.0
    %557 = vmatprep.subr.mxu0 0.0
    %558 = vmatpush2.msra.mxu0 0.0
    %559 = vmatprep.subr.mxu0 0.0
    %560 = vmatpush2.msra.mxu0 0.0
    %561 = vmatprep.subr.mxu0 0.0
    %562 = vmatpush2.msra.mxu0 0.0
    %563 = vmatprep.subr.mxu0 0.0
    %564 = vmatpush2.msra.mxu0 0.0
    %565 = vmatprep.subr.mxu0 0.0
    %566 = vmatpush2.msra.mxu0 0.0
    %567 = vmatprep.mubr.f32.mxu0 0.0
    %568 = vmatmul.mubr.f32.gmra.mxu0 %v501
    %v569 = vpop.f32.mrf.mxu0
    %v570 = vadd.f32 0.0, %v569
    %v571 = vpop.f32.mrf.mxu0
    %572 = vdwg.mxu0
    %v574 = vsel %vm245, %v570, 0
    %576 = vmatprep.subr.mxu0 0.0
    %577 = vmatpush1.msra.mxu0 0.0
    %578 = vmatprep.subr.mxu0 0.0
    %579 = vmatpush1.msra.mxu0 0.0
    %580 = vmatprep.subr.mxu0 0.0
    %581 = vmatpush1.msra.mxu0 0.0
    %582 = vmatprep.subr.mxu0 0.0
    %583 = vmatpush1.msra.mxu0 0.0
    %584 = vmatprep.subr.mxu0 0.0
    %585 = vmatpush1.msra.mxu0 0.0
    %586 = vmatprep.subr.mxu0 0.0
    %587 = vmatpush1.msra.mxu0 0.0
    %588 = vmatprep.subr.mxu0 0.0
    %589 = vmatpush1.msra.mxu0 0.0
    %590 = vmatprep.subr.mxu0 0.0
    %591 = vmatpush1.msra.mxu0 0.0
    %592 = vmatprep.subr.mxu0 0.0
    %593 = vmatpush1.msra.mxu0 0.0
    %594 = vmatprep.subr.mxu0 0.0
    %595 = vmatpush1.msra.mxu0 0.0
    %596 = vmatprep.subr.mxu0 0.0
    %597 = vmatpush1.msra.mxu0 0.0
    %598 = vmatprep.subr.mxu0 0.0
    %599 = vmatpush1.msra.mxu0 0.0
    %600 = vmatprep.subr.mxu0 0.0
    %601 = vmatpush1.msra.mxu0 0.0
    %602 = vmatprep.subr.mxu0 0.0
    %603 = vmatpush1.msra.mxu0 0.0
    %604 = vmatprep.subr.mxu0 0.0
    %605 = vmatpush1.msra.mxu0 0.0
    %606 = vmatprep.subr.mxu0 0.0
    %607 = vmatpush1.msra.mxu0 %v238
    %608 = vmatprep.subr.mxu0 0.0
    %609 = vmatpush2.msra.mxu0 0.0
    %610 = vmatprep.subr.mxu0 0.0
    %611 = vmatpush2.msra.mxu0 0.0
    %612 = vmatprep.subr.mxu0 0.0
    %613 = vmatpush2.msra.mxu0 0.0
    %614 = vmatprep.subr.mxu0 0.0
    %615 = vmatpush2.msra.mxu0 0.0
    %616 = vmatprep.subr.mxu0 0.0
    %617 = vmatpush2.msra.mxu0 0.0
    %618 = vmatprep.subr.mxu0 0.0
    %619 = vmatpush2.msra.mxu0 0.0
    %620 = vmatprep.subr.mxu0 0.0
    %621 = vmatpush2.msra.mxu0 0.0
    %622 = vmatprep.subr.mxu0 0.0
    %623 = vmatpush2.msra.mxu0 0.0
    %624 = vmatprep.subr.mxu0 0.0
    %625 = vmatpush2.msra.mxu0 0.0
    %626 = vmatprep.subr.mxu0 0.0
    %627 = vmatpush2.msra.mxu0 0.0
    %628 = vmatprep.subr.mxu0 0.0
    %629 = vmatpush2.msra.mxu0 0.0
    %630 = vmatprep.subr.mxu0 0.0
    %631 = vmatpush2.msra.mxu0 0.0
    %632 = vmatprep.subr.mxu0 0.0
    %633 = vmatpush2.msra.mxu0 0.0
    %634 = vmatprep.subr.mxu0 0.0
    %635 = vmatpush2.msra.mxu0 0.0
    %636 = vmatprep.subr.mxu0 0.0
    %637 = vmatpush2.msra.mxu0 0.0
    %638 = vmatprep.subr.mxu0 0.0
    %639 = vmatpush2.msra.mxu0 0.0
    %640 = vmatprep.mubr.f32.mxu0 0.0
    %641 = vmatmul.mubr.f32.gmra.mxu0 %v574
    %v642 = vpop.f32.mrf.mxu0
    %v643 = vadd.f32 0.0, %v642
    %v644 = vpop.f32.mrf.mxu0
    %645 = vdwg.mxu0
    %v647 = vsel %vm245, %v405, 0
    %649 = vmatprep.subr.mxu0 0.0
    %650 = vmatpush1.msra.mxu0 0.0
    %651 = vmatprep.subr.mxu0 0.0
    %652 = vmatpush1.msra.mxu0 0.0
    %653 = vmatprep.subr.mxu0 0.0
    %654 = vmatpush1.msra.mxu0 0.0
    %655 = vmatprep.subr.mxu0 0.0
    %656 = vmatpush1.msra.mxu0 0.0
    %657 = vmatprep.subr.mxu0 0.0
    %658 = vmatpush1.msra.mxu0 0.0
    %659 = vmatprep.subr.mxu0 0.0
    %660 = vmatpush1.msra.mxu0 0.0
    %661 = vmatprep.subr.mxu0 0.0
    %662 = vmatpush1.msra.mxu0 0.0
    %663 = vmatprep.subr.mxu0 0.0
    %664 = vmatpush1.msra.mxu0 0.0
    %665 = vmatprep.subr.mxu0 0.0
    %666 = vmatpush1.msra.mxu0 0.0
    %667 = vmatprep.subr.mxu0 0.0
    %668 = vmatpush1.msra.mxu0 0.0
    %669 = vmatprep.subr.mxu0 0.0
    %670 = vmatpush1.msra.mxu0 0.0
    %671 = vmatprep.subr.mxu0 0.0
    %672 = vmatpush1.msra.mxu0 0.0
    %673 = vmatprep.subr.mxu0 0.0
    %674 = vmatpush1.msra.mxu0 0.0
    %675 = vmatprep.subr.mxu0 0.0
    %676 = vmatpush1.msra.mxu0 0.0
    %677 = vmatprep.subr.mxu0 0.0
    %678 = vmatpush1.msra.mxu0 0.0
    %679 = vmatprep.subr.mxu0 0.0
    %680 = vmatpush1.msra.mxu0 %v237
    %681 = vmatprep.subr.mxu0 0.0
    %682 = vmatpush2.msra.mxu0 0.0
    %683 = vmatprep.subr.mxu0 0.0
    %684 = vmatpush2.msra.mxu0 0.0
    %685 = vmatprep.subr.mxu0 0.0
    %686 = vmatpush2.msra.mxu0 0.0
    %687 = vmatprep.subr.mxu0 0.0
    %688 = vmatpush2.msra.mxu0 0.0
    %689 = vmatprep.subr.mxu0 0.0
    %690 = vmatpush2.msra.mxu0 0.0
    %691 = vmatprep.subr.mxu0 0.0
    %692 = vmatpush2.msra.mxu0 0.0
    %693 = vmatprep.subr.mxu0 0.0
    %694 = vmatpush2.msra.mxu0 0.0
    %695 = vmatprep.subr.mxu0 0.0
    %696 = vmatpush2.msra.mxu0 0.0
    %697 = vmatprep.subr.mxu0 0.0
    %698 = vmatpush2.msra.mxu0 0.0
    %699 = vmatprep.subr.mxu0 0.0
    %700 = vmatpush2.msra.mxu0 0.0
    %701 = vmatprep.subr.mxu0 0.0
    %702 = vmatpush2.msra.mxu0 0.0
    %703 = vmatprep.subr.mxu0 0.0
    %704 = vmatpush2.msra.mxu0 0.0
    %705 = vmatprep.subr.mxu0 0.0
    %706 = vmatpush2.msra.mxu0 0.0
    %707 = vmatprep.subr.mxu0 0.0
    %708 = vmatpush2.msra.mxu0 0.0
    %709 = vmatprep.subr.mxu0 0.0
    %710 = vmatpush2.msra.mxu0 0.0
    %711 = vmatprep.subr.mxu0 0.0
    %712 = vmatpush2.msra.mxu0 0.0
    %713 = vmatprep.mubr.f32.mxu0 0.0
    %714 = vmatmul.mubr.f32.gmra.mxu0 %v647
    %v715 = vpop.f32.mrf.mxu0
    %v716 = vadd.f32 %v643, %v715
    %v717 = vpop.f32.mrf.mxu0
    %718 = vdwg.mxu0
    %719 = vrot.lane.b32.xlu0 %v241, 112
    %v720 = vpop.permute.xlu0 %719
    %721 = vrot.lane.b32.xlu0 %v229, 80
    %v722 = vpop.permute.xlu0 %721
    %v723 = vsel %vm245, %v720, 0
    %v725 = vsel %vm245, %v722, 0
    %727 = vmatprep.subr.mxu0 0.0
    %728 = vmatpush1.xpose.msra.mxu0 0.0
    %729 = vmatprep.subr.mxu0 0.0
    %730 = vmatpush1.xpose.msra.mxu0 0.0
    %731 = vmatprep.subr.mxu0 0.0
    %732 = vmatpush1.xpose.msra.mxu0 0.0
    %733 = vmatprep.subr.mxu0 0.0
    %734 = vmatpush1.xpose.msra.mxu0 0.0
    %735 = vmatprep.subr.mxu0 0.0
    %736 = vmatpush1.xpose.msra.mxu0 0.0
    %737 = vmatprep.subr.mxu0 0.0
    %738 = vmatpush1.xpose.msra.mxu0 0.0
    %739 = vmatprep.subr.mxu0 0.0
    %740 = vmatpush1.xpose.msra.mxu0 0.0
    %741 = vmatprep.subr.mxu0 0.0
    %742 = vmatpush1.xpose.msra.mxu0 0.0
    %743 = vmatprep.subr.mxu0 0.0
    %744 = vmatpush1.xpose.msra.mxu0 0.0
    %745 = vmatprep.subr.mxu0 0.0
    %746 = vmatpush1.xpose.msra.mxu0 0.0
    %747 = vmatprep.subr.mxu0 0.0
    %748 = vmatpush1.xpose.msra.mxu0 0.0
    %749 = vmatprep.subr.mxu0 0.0
    %750 = vmatpush1.xpose.msra.mxu0 0.0
    %751 = vmatprep.subr.mxu0 0.0
    %752 = vmatpush1.xpose.msra.mxu0 0.0
    %753 = vmatprep.subr.mxu0 0.0
    %754 = vmatpush1.xpose.msra.mxu0 0.0
    %755 = vmatprep.subr.mxu0 0.0
    %756 = vmatpush1.xpose.msra.mxu0 0.0
    %757 = vmatprep.subr.mxu0 0.0
    %758 = vmatpush1.xpose.msra.mxu0 %v725
    %759 = vmatprep.subr.mxu0 0.0
    %760 = vmatpush2.xpose.msra.mxu0 0.0
    %761 = vmatprep.subr.mxu0 0.0
    %762 = vmatpush2.xpose.msra.mxu0 0.0
    %763 = vmatprep.subr.mxu0 0.0
    %764 = vmatpush2.xpose.msra.mxu0 0.0
    %765 = vmatprep.subr.mxu0 0.0
    %766 = vmatpush2.xpose.msra.mxu0 0.0
    %767 = vmatprep.subr.mxu0 0.0
    %768 = vmatpush2.xpose.msra.mxu0 0.0
    %769 = vmatprep.subr.mxu0 0.0
    %770 = vmatpush2.xpose.msra.mxu0 0.0
    %771 = vmatprep.subr.mxu0 0.0
    %772 = vmatpush2.xpose.msra.mxu0 0.0
    %773 = vmatprep.subr.mxu0 0.0
    %774 = vmatpush2.xpose.msra.mxu0 0.0
    %775 = vmatprep.subr.mxu0 0.0
    %776 = vmatpush2.xpose.msra.mxu0 0.0
    %777 = vmatprep.subr.mxu0 0.0
    %778 = vmatpush2.xpose.msra.mxu0 0.0
    %779 = vmatprep.subr.mxu0 0.0
    %780 = vmatpush2.xpose.msra.mxu0 0.0
    %781 = vmatprep.subr.mxu0 0.0
    %782 = vmatpush2.xpose.msra.mxu0 0.0
    %783 = vmatprep.subr.mxu0 0.0
    %784 = vmatpush2.xpose.msra.mxu0 0.0
    %785 = vmatprep.subr.mxu0 0.0
    %786 = vmatpush2.xpose.msra.mxu0 0.0
    %787 = vmatprep.subr.mxu0 0.0
    %788 = vmatpush2.xpose.msra.mxu0 0.0
    %789 = vmatprep.subr.mxu0 0.0
    %790 = vmatpush2.xpose.msra.mxu0 0.0
    %791 = vmatprep.mubr.f32.mxu0 0.0
    %792 = vmatmul.mubr.f32.gmra.mxu0 %v723
    %v793 = vpop.f32.mrf.mxu0
    %v794 = vadd.f32 0.0, %v793
    %v795 = vpop.f32.mrf.mxu0
    %796 = vdwg.mxu0
    %v797 = vsel %vm245, %v794, -inf
    %798 = vmax.xlane.f32.xlu0 %v797
    %v799 = vpop.xlane.xlu0 %798
    %v800 = vsub.f32 %v794, %v799
    %v801 = vmul.f32 %v800, 1.442695
    %v802 = vpow.pop %v801
    %v803 = vsel %vm245, %v802, 0.0
    %804 = vadd.xlane.f32.xlu0 %v803
    %v805 = vpop.xlane.xlu0 %804
    %v806 = vrcp.pop %v805
    %v807 = vmul.f32 %v802, %v806
    %808 = vrot.lane.b32.xlu0 %v229, 48
    %v809 = vpop.permute.xlu0 %808
    %v812 = vsel %vm245, %v807, 0
    %814 = vmatprep.subr.mxu0 0.0
    %815 = vmatpush1.msra.mxu0 0.0
    %816 = vmatprep.subr.mxu0 0.0
    %817 = vmatpush1.msra.mxu0 0.0
    %818 = vmatprep.subr.mxu0 0.0
    %819 = vmatpush1.msra.mxu0 0.0
    %820 = vmatprep.subr.mxu0 0.0
    %821 = vmatpush1.msra.mxu0 0.0
    %822 = vmatprep.subr.mxu0 0.0
    %823 = vmatpush1.msra.mxu0 0.0
    %824 = vmatprep.subr.mxu0 0.0
    %825 = vmatpush1.msra.mxu0 0.0
    %826 = vmatprep.subr.mxu0 0.0
    %827 = vmatpush1.msra.mxu0 0.0
    %828 = vmatprep.subr.mxu0 0.0
    %829 = vmatpush1.msra.mxu0 0.0
    %830 = vmatprep.subr.mxu0 0.0
    %831 = vmatpush1.msra.mxu0 0.0
    %832 = vmatprep.subr.mxu0 0.0
    %833 = vmatpush1.msra.mxu0 0.0
    %834 = vmatprep.subr.mxu0 0.0
    %835 = vmatpush1.msra.mxu0 0.0
    %836 = vmatprep.subr.mxu0 0.0
    %837 = vmatpush1.msra.mxu0 0.0
    %838 = vmatprep.subr.mxu0 0.0
    %839 = vmatpush1.msra.mxu0 0.0
    %840 = vmatprep.subr.mxu0 0.0
    %841 = vmatpush1.msra.mxu0 0.0
    %842 = vmatprep.subr.mxu0 0.0
    %843 = vmatpush1.msra.mxu0 0.0
    %844 = vmatprep.subr.mxu0 0.0
    %845 = vmatpush1.msra.mxu0 %v809
    %846 = vmatprep.subr.mxu0 0.0
    %847 = vmatpush2.msra.mxu0 0.0
    %848 = vmatprep.subr.mxu0 0.0
    %849 = vmatpush2.msra.mxu0 0.0
    %850 = vmatprep.subr.mxu0 0.0
    %851 = vmatpush2.msra.mxu0 0.0
    %852 = vmatprep.subr.mxu0 0.0
    %853 = vmatpush2.msra.mxu0 0.0
    %854 = vmatprep.subr.mxu0 0.0
    %855 = vmatpush2.msra.mxu0 0.0
    %856 = vmatprep.subr.mxu0 0.0
    %857 = vmatpush2.msra.mxu0 0.0
    %858 = vmatprep.subr.mxu0 0.0
    %859 = vmatpush2.msra.mxu0 0.0
    %860 = vmatprep.subr.mxu0 0.0
    %861 = vmatpush2.msra.mxu0 0.0
    %862 = vmatprep.subr.mxu0 0.0
    %863 = vmatpush2.msra.mxu0 0.0
    %864 = vmatprep.subr.mxu0 0.0
    %865 = vmatpush2.msra.mxu0 0.0
    %866 = vmatprep.subr.mxu0 0.0
    %867 = vmatpush2.msra.mxu0 0.0
    %868 = vmatprep.subr.mxu0 0.0
    %869 = vmatpush2.msra.mxu0 0.0
    %870 = vmatprep.subr.mxu0 0.0
    %871 = vmatpush2.msra.mxu0 0.0
    %872 = vmatprep.subr.mxu0 0.0
    %873 = vmatpush2.msra.mxu0 0.0
    %874 = vmatprep.subr.mxu0 0.0
    %875 = vmatpush2.msra.mxu0 0.0
    %876 = vmatprep.subr.mxu0 0.0
    %877 = vmatpush2.msra.mxu0 0.0
    %878 = vmatprep.mubr.f32.mxu0 0.0
    %879 = vmatmul.mubr.f32.gmra.mxu0 %v812
    %v880 = vpop.f32.mrf.mxu0
    %v881 = vadd.f32 0.0, %v880
    %v882 = vpop.f32.mrf.mxu0
    %883 = vdwg.mxu0
    %v885 = vsel %vm245, %v881, 0
    %887 = vmatprep.subr.mxu0 0.0
    %888 = vmatpush1.msra.mxu0 0.0
    %889 = vmatprep.subr.mxu0 0.0
    %890 = vmatpush1.msra.mxu0 0.0
    %891 = vmatprep.subr.mxu0 0.0
    %892 = vmatpush1.msra.mxu0 0.0
    %893 = vmatprep.subr.mxu0 0.0
    %894 = vmatpush1.msra.mxu0 0.0
    %895 = vmatprep.subr.mxu0 0.0
    %896 = vmatpush1.msra.mxu0 0.0
    %897 = vmatprep.subr.mxu0 0.0
    %898 = vmatpush1.msra.mxu0 0.0
    %899 = vmatprep.subr.mxu0 0.0
    %900 = vmatpush1.msra.mxu0 0.0
    %901 = vmatprep.subr.mxu0 0.0
    %902 = vmatpush1.msra.mxu0 0.0
    %903 = vmatprep.subr.mxu0 0.0
    %904 = vmatpush1.msra.mxu0 0.0
    %905 = vmatprep.subr.mxu0 0.0
    %906 = vmatpush1.msra.mxu0 0.0
    %907 = vmatprep.subr.mxu0 0.0
    %908 = vmatpush1.msra.mxu0 0.0
    %909 = vmatprep.subr.mxu0 0.0
    %910 = vmatpush1.msra.mxu0 0.0
    %911 = vmatprep.subr.mxu0 0.0
    %912 = vmatpush1.msra.mxu0 0.0
    %913 = vmatprep.subr.mxu0 0.0
    %914 = vmatpush1.msra.mxu0 0.0
    %915 = vmatprep.subr.mxu0 0.0
    %916 = vmatpush1.msra.mxu0 0.0
    %917 = vmatprep.subr.mxu0 0.0
    %918 = vmatpush1.msra.mxu0 %v239
    %919 = vmatprep.subr.mxu0 0.0
    %920 = vmatpush2.msra.mxu0 0.0
    %921 = vmatprep.subr.mxu0 0.0
    %922 = vmatpush2.msra.mxu0 0.0
    %923 = vmatprep.subr.mxu0 0.0
    %924 = vmatpush2.msra.mxu0 0.0
    %925 = vmatprep.subr.mxu0 0.0
    %926 = vmatpush2.msra.mxu0 0.0
    %927 = vmatprep.subr.mxu0 0.0
    %928 = vmatpush2.msra.mxu0 0.0
    %929 = vmatprep.subr.mxu0 0.0
    %930 = vmatpush2.msra.mxu0 0.0
    %931 = vmatprep.subr.mxu0 0.0
    %932 = vmatpush2.msra.mxu0 0.0
    %933 = vmatprep.subr.mxu0 0.0
    %934 = vmatpush2.msra.mxu0 0.0
    %935 = vmatprep.subr.mxu0 0.0
    %936 = vmatpush2.msra.mxu0 0.0
    %937 = vmatprep.subr.mxu0 0.0
    %938 = vmatpush2.msra.mxu0 0.0
    %939 = vmatprep.subr.mxu0 0.0
    %940 = vmatpush2.msra.mxu0 0.0
    %941 = vmatprep.subr.mxu0 0.0
    %942 = vmatpush2.msra.mxu0 0.0
    %943 = vmatprep.subr.mxu0 0.0
    %944 = vmatpush2.msra.mxu0 0.0
    %945 = vmatprep.subr.mxu0 0.0
    %946 = vmatpush2.msra.mxu0 0.0
    %947 = vmatprep.subr.mxu0 0.0
    %948 = vmatpush2.msra.mxu0 0.0
    %949 = vmatprep.subr.mxu0 0.0
    %950 = vmatpush2.msra.mxu0 0.0
    %951 = vmatprep.mubr.f32.mxu0 0.0
    %952 = vmatmul.mubr.f32.gmra.mxu0 %v885
    %v953 = vpop.f32.mrf.mxu0
    %v954 = vadd.f32 0.0, %v953
    %v955 = vpop.f32.mrf.mxu0
    %956 = vdwg.mxu0
    %v957 = vadd.f32 %v716, %v954
    %958 = vrot.lane.b32.xlu0 %v241, 104
    %v959 = vpop.permute.xlu0 %958
    %960 = vrot.lane.b32.xlu0 %v229, 72
    %v961 = vpop.permute.xlu0 %960
    %v962 = vsel %vm245, %v959, 0
    %v964 = vsel %vm245, %v961, 0
    %966 = vmatprep.subr.mxu0 0.0
    %967 = vmatpush1.xpose.msra.mxu0 0.0
    %968 = vmatprep.subr.mxu0 0.0
    %969 = vmatpush1.xpose.msra.mxu0 0.0
    %970 = vmatprep.subr.mxu0 0.0
    %971 = vmatpush1.xpose.msra.mxu0 0.0
    %972 = vmatprep.subr.mxu0 0.0
    %973 = vmatpush1.xpose.msra.mxu0 0.0
    %974 = vmatprep.subr.mxu0 0.0
    %975 = vmatpush1.xpose.msra.mxu0 0.0
    %976 = vmatprep.subr.mxu0 0.0
    %977 = vmatpush1.xpose.msra.mxu0 0.0
    %978 = vmatprep.subr.mxu0 0.0
    %979 = vmatpush1.xpose.msra.mxu0 0.0
    %980 = vmatprep.subr.mxu0 0.0
    %981 = vmatpush1.xpose.msra.mxu0 0.0
    %982 = vmatprep.subr.mxu0 0.0
    %983 = vmatpush1.xpose.msra.mxu0 0.0
    %984 = vmatprep.subr.mxu0 0.0
    %985 = vmatpush1.xpose.msra.mxu0 0.0
    %986 = vmatprep.subr.mxu0 0.0
    %987 = vmatpush1.xpose.msra.mxu0 0.0
    %988 = vmatprep.subr.mxu0 0.0
    %989 = vmatpush1.xpose.msra.mxu0 0.0
    %990 = vmatprep.subr.mxu0 0.0
    %991 = vmatpush1.xpose.msra.mxu0 0.0
    %992 = vmatprep.subr.mxu0 0.0
    %993 = vmatpush1.xpose.msra.mxu0 0.0
    %994 = vmatprep.subr.mxu0 0.0
    %995 = vmatpush1.xpose.msra.mxu0 0.0
    %996 = vmatprep.subr.mxu0 0.0
    %997 = vmatpush1.xpose.msra.mxu0 %v964
    %998 = vmatprep.subr.mxu0 0.0
    %999 = vmatpush2.xpose.msra.mxu0 0.0
    %1000 = vmatprep.subr.mxu0 0.0
    %1001 = vmatpush2.xpose.msra.mxu0 0.0
    %1002 = vmatprep.subr.mxu0 0.0
    %1003 = vmatpush2.xpose.msra.mxu0 0.0
    %1004 = vmatprep.subr.mxu0 0.0
    %1005 = vmatpush2.xpose.msra.mxu0 0.0
    %1006 = vmatprep.subr.mxu0 0.0
    %1007 = vmatpush2.xpose.msra.mxu0 0.0
    %1008 = vmatprep.subr.mxu0 0.0
    %1009 = vmatpush2.xpose.msra.mxu0 0.0
    %1010 = vmatprep.subr.mxu0 0.0
    %1011 = vmatpush2.xpose.msra.mxu0 0.0
    %1012 = vmatprep.subr.mxu0 0.0
    %1013 = vmatpush2.xpose.msra.mxu0 0.0
    %1014 = vmatprep.subr.mxu0 0.0
    %1015 = vmatpush2.xpose.msra.mxu0 0.0
    %1016 = vmatprep.subr.mxu0 0.0
    %1017 = vmatpush2.xpose.msra.mxu0 0.0
    %1018 = vmatprep.subr.mxu0 0.0
    %1019 = vmatpush2.xpose.msra.mxu0 0.0
    %1020 = vmatprep.subr.mxu0 0.0
    %1021 = vmatpush2.xpose.msra.mxu0 0.0
    %1022 = vmatprep.subr.mxu0 0.0
    %1023 = vmatpush2.xpose.msra.mxu0 0.0
    %1024 = vmatprep.subr.mxu0 0.0
    %1025 = vmatpush2.xpose.msra.mxu0 0.0
    %1026 = vmatprep.subr.mxu0 0.0
    %1027 = vmatpush2.xpose.msra.mxu0 0.0
    %1028 = vmatprep.subr.mxu0 0.0
    %1029 = vmatpush2.xpose.msra.mxu0 0.0
    %1030 = vmatprep.mubr.f32.mxu0 0.0
    %1031 = vmatmul.mubr.f32.gmra.mxu0 %v962
    %v1032 = vpop.f32.mrf.mxu0
    %v1033 = vadd.f32 0.0, %v1032
    %v1034 = vpop.f32.mrf.mxu0
    %1035 = vdwg.mxu0
    %v1036 = vsel %vm245, %v1033, -inf
    %1037 = vmax.xlane.f32.xlu0 %v1036
    %v1038 = vpop.xlane.xlu0 %1037
    %v1039 = vsub.f32 %v1033, %v1038
    %v1040 = vmul.f32 %v1039, 1.442695
    %v1041 = vpow.pop %v1040
    %v1042 = vsel %vm245, %v1041, 0.0
    %1043 = vadd.xlane.f32.xlu0 %v1042
    %v1044 = vpop.xlane.xlu0 %1043
    %v1045 = vrcp.pop %v1044
    %v1046 = vmul.f32 %v1041, %v1045
    %1047 = vrot.lane.b32.xlu0 %v229, 40
    %v1048 = vpop.permute.xlu0 %1047
    %v1051 = vsel %vm245, %v1046, 0
    %1053 = vmatprep.subr.mxu0 0.0
    %1054 = vmatpush1.msra.mxu0 0.0
    %1055 = vmatprep.subr.mxu0 0.0
    %1056 = vmatpush1.msra.mxu0 0.0
    %1057 = vmatprep.subr.mxu0 0.0
    %1058 = vmatpush1.msra.mxu0 0.0
    %1059 = vmatprep.subr.mxu0 0.0
    %1060 = vmatpush1.msra.mxu0 0.0
    %1061 = vmatprep.subr.mxu0 0.0
    %1062 = vmatpush1.msra.mxu0 0.0
    %1063 = vmatprep.subr.mxu0 0.0
    %1064 = vmatpush1.msra.mxu0 0.0
    %1065 = vmatprep.subr.mxu0 0.0
    %1066 = vmatpush1.msra.mxu0 0.0
    %1067 = vmatprep.subr.mxu0 0.0
    %1068 = vmatpush1.msra.mxu0 0.0
    %1069 = vmatprep.subr.mxu0 0.0
    %1070 = vmatpush1.msra.mxu0 0.0
    %1071 = vmatprep.subr.mxu0 0.0
    %1072 = vmatpush1.msra.mxu0 0.0
    %1073 = vmatprep.subr.mxu0 0.0
    %1074 = vmatpush1.msra.mxu0 0.0
    %1075 = vmatprep.subr.mxu0 0.0
    %1076 = vmatpush1.msra.mxu0 0.0
    %1077 = vmatprep.subr.mxu0 0.0
    %1078 = vmatpush1.msra.mxu0 0.0
    %1079 = vmatprep.subr.mxu0 0.0
    %1080 = vmatpush1.msra.mxu0 0.0
    %1081 = vmatprep.subr.mxu0 0.0
    %1082 = vmatpush1.msra.mxu0 0.0
    %1083 = vmatprep.subr.mxu0 0.0
    %1084 = vmatpush1.msra.mxu0 %v1048
    %1085 = vmatprep.subr.mxu0 0.0
    %1086 = vmatpush2.msra.mxu0 0.0
    %1087 = vmatprep.subr.mxu0 0.0
    %1088 = vmatpush2.msra.mxu0 0.0
    %1089 = vmatprep.subr.mxu0 0.0
    %1090 = vmatpush2.msra.mxu0 0.0
    %1091 = vmatprep.subr.mxu0 0.0
    %1092 = vmatpush2.msra.mxu0 0.0
    %1093 = vmatprep.subr.mxu0 0.0
    %1094 = vmatpush2.msra.mxu0 0.0
    %1095 = vmatprep.subr.mxu0 0.0
    %1096 = vmatpush2.msra.mxu0 0.0
    %1097 = vmatprep.subr.mxu0 0.0
    %1098 = vmatpush2.msra.mxu0 0.0
    %1099 = vmatprep.subr.mxu0 0.0
    %1100 = vmatpush2.msra.mxu0 0.0
    %1101 = vmatprep.subr.mxu0 0.0
    %1102 = vmatpush2.msra.mxu0 0.0
    %1103 = vmatprep.subr.mxu0 0.0
    %1104 = vmatpush2.msra.mxu0 0.0
    %1105 = vmatprep.subr.mxu0 0.0
    %1106 = vmatpush2.msra.mxu0 0.0
    %1107 = vmatprep.subr.mxu0 0.0
    %1108 = vmatpush2.msra.mxu0 0.0
    %1109 = vmatprep.subr.mxu0 0.0
    %1110 = vmatpush2.msra.mxu0 0.0
    %1111 = vmatprep.subr.mxu0 0.0
    %1112 = vmatpush2.msra.mxu0 0.0
    %1113 = vmatprep.subr.mxu0 0.0
    %1114 = vmatpush2.msra.mxu0 0.0
    %1115 = vmatprep.subr.mxu0 0.0
    %1116 = vmatpush2.msra.mxu0 0.0
    %1117 = vmatprep.mubr.f32.mxu0 0.0
    %1118 = vmatmul.mubr.f32.gmra.mxu0 %v1051
    %v1119 = vpop.f32.mrf.mxu0
    %v1120 = vadd.f32 0.0, %v1119
    %v1121 = vpop.f32.mrf.mxu0
    %1122 = vdwg.mxu0
    %v1124 = vsel %vm245, %v1120, 0
    %1126 = vmatprep.subr.mxu0 0.0
    %1127 = vmatpush1.msra.mxu0 0.0
    %1128 = vmatprep.subr.mxu0 0.0
    %1129 = vmatpush1.msra.mxu0 0.0
    %1130 = vmatprep.subr.mxu0 0.0
    %1131 = vmatpush1.msra.mxu0 0.0
    %1132 = vmatprep.subr.mxu0 0.0
    %1133 = vmatpush1.msra.mxu0 0.0
    %1134 = vmatprep.subr.mxu0 0.0
    %1135 = vmatpush1.msra.mxu0 0.0
    %1136 = vmatprep.subr.mxu0 0.0
    %1137 = vmatpush1.msra.mxu0 0.0
    %1138 = vmatprep.subr.mxu0 0.0
    %1139 = vmatpush1.msra.mxu0 0.0
    %1140 = vmatprep.subr.mxu0 0.0
    %1141 = vmatpush1.msra.mxu0 0.0
    %1142 = vmatprep.subr.mxu0 0.0
    %1143 = vmatpush1.msra.mxu0 0.0
    %1144 = vmatprep.subr.mxu0 0.0
    %1145 = vmatpush1.msra.mxu0 0.0
    %1146 = vmatprep.subr.mxu0 0.0
    %1147 = vmatpush1.msra.mxu0 0.0
    %1148 = vmatprep.subr.mxu0 0.0
    %1149 = vmatpush1.msra.mxu0 0.0
    %1150 = vmatprep.subr.mxu0 0.0
    %1151 = vmatpush1.msra.mxu0 0.0
    %1152 = vmatprep.subr.mxu0 0.0
    %1153 = vmatpush1.msra.mxu0 0.0
    %1154 = vmatprep.subr.mxu0 0.0
    %1155 = vmatpush1.msra.mxu0 0.0
    %1156 = vmatprep.subr.mxu0 0.0
    %1157 = vmatpush1.msra.mxu0 %v240
    %1158 = vmatprep.subr.mxu0 0.0
    %1159 = vmatpush2.msra.mxu0 0.0
    %1160 = vmatprep.subr.mxu0 0.0
    %1161 = vmatpush2.msra.mxu0 0.0
    %1162 = vmatprep.subr.mxu0 0.0
    %1163 = vmatpush2.msra.mxu0 0.0
    %1164 = vmatprep.subr.mxu0 0.0
    %1165 = vmatpush2.msra.mxu0 0.0
    %1166 = vmatprep.subr.mxu0 0.0
    %1167 = vmatpush2.msra.mxu0 0.0
    %1168 = vmatprep.subr.mxu0 0.0
    %1169 = vmatpush2.msra.mxu0 0.0
    %1170 = vmatprep.subr.mxu0 0.0
    %1171 = vmatpush2.msra.mxu0 0.0
    %1172 = vmatprep.subr.mxu0 0.0
    %1173 = vmatpush2.msra.mxu0 0.0
    %1174 = vmatprep.subr.mxu0 0.0
    %1175 = vmatpush2.msra.mxu0 0.0
    %1176 = vmatprep.subr.mxu0 0.0
    %1177 = vmatpush2.msra.mxu0 0.0
    %1178 = vmatprep.subr.mxu0 0.0
    %1179 = vmatpush2.msra.mxu0 0.0
    %1180 = vmatprep.subr.mxu0 0.0
    %1181 = vmatpush2.msra.mxu0 0.0
    %1182 = vmatprep.subr.mxu0 0.0
    %1183 = vmatpush2.msra.mxu0 0.0
    %1184 = vmatprep.subr.mxu0 0.0
    %1185 = vmatpush2.msra.mxu0 0.0
    %1186 = vmatprep.subr.mxu0 0.0
    %1187 = vmatpush2.msra.mxu0 0.0
    %1188 = vmatprep.subr.mxu0 0.0
    %1189 = vmatpush2.msra.mxu0 0.0
    %1190 = vmatprep.mubr.f32.mxu0 0.0
    %1191 = vmatmul.mubr.f32.gmra.mxu0 %v1124
    %v1192 = vpop.f32.mrf.mxu0
    %v1193 = vadd.f32 0.0, %v1192
    %v1194 = vpop.f32.mrf.mxu0
    %1195 = vdwg.mxu0
    %v1196 = vadd.f32 %v957, %v1193
    %v1197 = vmul.f32 %v234, 0.35355338
    %1199 = vrot.lane.b32.xlu0 %v234, 96
    %v1200 = vpop.permute.xlu0 %1199
    %v1202 = vsel %vm245, %v1197, 0
    %v1204 = vsel %vm245, %v1200, 0
    %1206 = vmatprep.subr.mxu0 0.0
    %1207 = vmatpush1.xpose.msra.mxu0 0.0
    %1208 = vmatprep.subr.mxu0 0.0
    %1209 = vmatpush1.xpose.msra.mxu0 0.0
    %1210 = vmatprep.subr.mxu0 0.0
    %1211 = vmatpush1.xpose.msra.mxu0 0.0
    %1212 = vmatprep.subr.mxu0 0.0
    %1213 = vmatpush1.xpose.msra.mxu0 0.0
    %1214 = vmatprep.subr.mxu0 0.0
    %1215 = vmatpush1.xpose.msra.mxu0 0.0
    %1216 = vmatprep.subr.mxu0 0.0
    %1217 = vmatpush1.xpose.msra.mxu0 0.0
    %1218 = vmatprep.subr.mxu0 0.0
    %1219 = vmatpush1.xpose.msra.mxu0 0.0
    %1220 = vmatprep.subr.mxu0 0.0
    %1221 = vmatpush1.xpose.msra.mxu0 0.0
    %1222 = vmatprep.subr.mxu0 0.0
    %1223 = vmatpush1.xpose.msra.mxu0 0.0
    %1224 = vmatprep.subr.mxu0 0.0
    %1225 = vmatpush1.xpose.msra.mxu0 0.0
    %1226 = vmatprep.subr.mxu0 0.0
    %1227 = vmatpush1.xpose.msra.mxu0 0.0
    %1228 = vmatprep.subr.mxu0 0.0
    %1229 = vmatpush1.xpose.msra.mxu0 0.0
    %1230 = vmatprep.subr.mxu0 0.0
    %1231 = vmatpush1.xpose.msra.mxu0 0.0
    %1232 = vmatprep.subr.mxu0 0.0
    %1233 = vmatpush1.xpose.msra.mxu0 0.0
    %1234 = vmatprep.subr.mxu0 0.0
    %1235 = vmatpush1.xpose.msra.mxu0 0.0
    %1236 = vmatprep.subr.mxu0 0.0
    %1237 = vmatpush1.xpose.msra.mxu0 %v1204
    %1238 = vmatprep.subr.mxu0 0.0
    %1239 = vmatpush2.xpose.msra.mxu0 0.0
    %1240 = vmatprep.subr.mxu0 0.0
    %1241 = vmatpush2.xpose.msra.mxu0 0.0
    %1242 = vmatprep.subr.mxu0 0.0
    %1243 = vmatpush2.xpose.msra.mxu0 0.0
    %1244 = vmatprep.subr.mxu0 0.0
    %1245 = vmatpush2.xpose.msra.mxu0 0.0
    %1246 = vmatprep.subr.mxu0 0.0
    %1247 = vmatpush2.xpose.msra.mxu0 0.0
    %1248 = vmatprep.subr.mxu0 0.0
    %1249 = vmatpush2.xpose.msra.mxu0 0.0
    %1250 = vmatprep.subr.mxu0 0.0
    %1251 = vmatpush2.xpose.msra.mxu0 0.0
    %1252 = vmatprep.subr.mxu0 0.0
    %1253 = vmatpush2.xpose.msra.mxu0 0.0
    %1254 = vmatprep.subr.mxu0 0.0
    %1255 = vmatpush2.xpose.msra.mxu0 0.0
    %1256 = vmatprep.subr.mxu0 0.0
    %1257 = vmatpush2.xpose.msra.mxu0 0.0
    %1258 = vmatprep.subr.mxu0 0.0
    %1259 = vmatpush2.xpose.msra.mxu0 0.0
    %1260 = vmatprep.subr.mxu0 0.0
    %1261 = vmatpush2.xpose.msra.mxu0 0.0
    %1262 = vmatprep.subr.mxu0 0.0
    %1263 = vmatpush2.xpose.msra.mxu0 0.0
    %1264 = vmatprep.subr.mxu0 0.0
    %1265 = vmatpush2.xpose.msra.mxu0 0.0
    %1266 = vmatprep.subr.mxu0 0.0
    %1267 = vmatpush2.xpose.msra.mxu0 0.0
    %1268 = vmatprep.subr.mxu0 0.0
    %1269 = vmatpush2.xpose.msra.mxu0 0.0
    %1270 = vmatprep.mubr.f32.mxu0 0.0
    %1271 = vmatmul.mubr.f32.gmra.mxu0 %v1202
    %v1272 = vpop.f32.mrf.mxu0
    %v1273 = vadd.f32 0.0, %v1272
    %v1274 = vpop.f32.mrf.mxu0
    %1275 = vdwg.mxu0
    %v1276 = vsel %vm245, %v1273, -inf
    %1277 = vmax.xlane.f32.xlu0 %v1276
    %v1278 = vpop.xlane.xlu0 %1277
    %v1279 = vsub.f32 %v1273, %v1278
    %v1280 = vmul.f32 %v1279, 1.442695
    %v1281 = vpow.pop %v1280
    %v1282 = vsel %vm245, %v1281, 0.0
    %1283 = vadd.xlane.f32.xlu0 %v1282
    %v1284 = vpop.xlane.xlu0 %1283
    %v1285 = vrcp.pop %v1284
    %v1286 = vmul.f32 %v1281, %v1285
    %1287 = vrot.lane.b32.xlu0 %v234, 64
    %v1288 = vpop.permute.xlu0 %1287
    %v1291 = vsel %vm245, %v1286, 0
    %1293 = vmatprep.subr.mxu0 0.0
    %1294 = vmatpush1.msra.mxu0 0.0
    %1295 = vmatprep.subr.mxu0 0.0
    %1296 = vmatpush1.msra.mxu0 0.0
    %1297 = vmatprep.subr.mxu0 0.0
    %1298 = vmatpush1.msra.mxu0 0.0
    %1299 = vmatprep.subr.mxu0 0.0
    %1300 = vmatpush1.msra.mxu0 0.0
    %1301 = vmatprep.subr.mxu0 0.0
    %1302 = vmatpush1.msra.mxu0 0.0
    %1303 = vmatprep.subr.mxu0 0.0
    %1304 = vmatpush1.msra.mxu0 0.0
    %1305 = vmatprep.subr.mxu0 0.0
    %1306 = vmatpush1.msra.mxu0 0.0
    %1307 = vmatprep.subr.mxu0 0.0
    %1308 = vmatpush1.msra.mxu0 0.0
    %1309 = vmatprep.subr.mxu0 0.0
    %1310 = vmatpush1.msra.mxu0 0.0
    %1311 = vmatprep.subr.mxu0 0.0
    %1312 = vmatpush1.msra.mxu0 0.0
    %1313 = vmatprep.subr.mxu0 0.0
    %1314 = vmatpush1.msra.mxu0 0.0
    %1315 = vmatprep.subr.mxu0 0.0
    %1316 = vmatpush1.msra.mxu0 0.0
    %1317 = vmatprep.subr.mxu0 0.0
    %1318 = vmatpush1.msra.mxu0 0.0
    %1319 = vmatprep.subr.mxu0 0.0
    %1320 = vmatpush1.msra.mxu0 0.0
    %1321 = vmatprep.subr.mxu0 0.0
    %1322 = vmatpush1.msra.mxu0 0.0
    %1323 = vmatprep.subr.mxu0 0.0
    %1324 = vmatpush1.msra.mxu0 %v1288
    %1325 = vmatprep.subr.mxu0 0.0
    %1326 = vmatpush2.msra.mxu0 0.0
    %1327 = vmatprep.subr.mxu0 0.0
    %1328 = vmatpush2.msra.mxu0 0.0
    %1329 = vmatprep.subr.mxu0 0.0
    %1330 = vmatpush2.msra.mxu0 0.0
    %1331 = vmatprep.subr.mxu0 0.0
    %1332 = vmatpush2.msra.mxu0 0.0
    %1333 = vmatprep.subr.mxu0 0.0
    %1334 = vmatpush2.msra.mxu0 0.0
    %1335 = vmatprep.subr.mxu0 0.0
    %1336 = vmatpush2.msra.mxu0 0.0
    %1337 = vmatprep.subr.mxu0 0.0
    %1338 = vmatpush2.msra.mxu0 0.0
    %1339 = vmatprep.subr.mxu0 0.0
    %1340 = vmatpush2.msra.mxu0 0.0
    %1341 = vmatprep.subr.mxu0 0.0
    %1342 = vmatpush2.msra.mxu0 0.0
    %1343 = vmatprep.subr.mxu0 0.0
    %1344 = vmatpush2.msra.mxu0 0.0
    %1345 = vmatprep.subr.mxu0 0.0
    %1346 = vmatpush2.msra.mxu0 0.0
    %1347 = vmatprep.subr.mxu0 0.0
    %1348 = vmatpush2.msra.mxu0 0.0
    %1349 = vmatprep.subr.mxu0 0.0
    %1350 = vmatpush2.msra.mxu0 0.0
    %1351 = vmatprep.subr.mxu0 0.0
    %1352 = vmatpush2.msra.mxu0 0.0
    %1353 = vmatprep.subr.mxu0 0.0
    %1354 = vmatpush2.msra.mxu0 0.0
    %1355 = vmatprep.subr.mxu0 0.0
    %1356 = vmatpush2.msra.mxu0 0.0
    %1357 = vmatprep.mubr.f32.mxu0 0.0
    %1358 = vmatmul.mubr.f32.gmra.mxu0 %v1291
    %v1359 = vpop.f32.mrf.mxu0
    %v1360 = vadd.f32 0.0, %v1359
    %v1361 = vpop.f32.mrf.mxu0
    %1362 = vdwg.mxu0
    %1363 = vrot.lane.b32.xlu0 %v1197, 120
    %v1364 = vpop.permute.xlu0 %1363
    %1365 = vrot.lane.b32.xlu0 %v234, 88
    %v1366 = vpop.permute.xlu0 %1365
    %v1367 = vsel %vm245, %v1364, 0
    %v1369 = vsel %vm245, %v1366, 0
    %1371 = vmatprep.subr.mxu0 0.0
    %1372 = vmatpush1.xpose.msra.mxu0 0.0
    %1373 = vmatprep.subr.mxu0 0.0
    %1374 = vmatpush1.xpose.msra.mxu0 0.0
    %1375 = vmatprep.subr.mxu0 0.0
    %1376 = vmatpush1.xpose.msra.mxu0 0.0
    %1377 = vmatprep.subr.mxu0 0.0
    %1378 = vmatpush1.xpose.msra.mxu0 0.0
    %1379 = vmatprep.subr.mxu0 0.0
    %1380 = vmatpush1.xpose.msra.mxu0 0.0
    %1381 = vmatprep.subr.mxu0 0.0
    %1382 = vmatpush1.xpose.msra.mxu0 0.0
    %1383 = vmatprep.subr.mxu0 0.0
    %1384 = vmatpush1.xpose.msra.mxu0 0.0
    %1385 = vmatprep.subr.mxu0 0.0
    %1386 = vmatpush1.xpose.msra.mxu0 0.0
    %1387 = vmatprep.subr.mxu0 0.0
    %1388 = vmatpush1.xpose.msra.mxu0 0.0
    %1389 = vmatprep.subr.mxu0 0.0
    %1390 = vmatpush1.xpose.msra.mxu0 0.0
    %1391 = vmatprep.subr.mxu0 0.0
    %1392 = vmatpush1.xpose.msra.mxu0 0.0
    %1393 = vmatprep.subr.mxu0 0.0
    %1394 = vmatpush1.xpose.msra.mxu0 0.0
    %1395 = vmatprep.subr.mxu0 0.0
    %1396 = vmatpush1.xpose.msra.mxu0 0.0
    %1397 = vmatprep.subr.mxu0 0.0
    %1398 = vmatpush1.xpose.msra.mxu0 0.0
    %1399 = vmatprep.subr.mxu0 0.0
    %1400 = vmatpush1.xpose.msra.mxu0 0.0
    %1401 = vmatprep.subr.mxu0 0.0
    %1402 = vmatpush1.xpose.msra.mxu0 %v1369
    %1403 = vmatprep.subr.mxu0 0.0
    %1404 = vmatpush2.xpose.msra.mxu0 0.0
    %1405 = vmatprep.subr.mxu0 0.0
    %1406 = vmatpush2.xpose.msra.mxu0 0.0
    %1407 = vmatprep.subr.mxu0 0.0
    %1408 = vmatpush2.xpose.msra.mxu0 0.0
    %1409 = vmatprep.subr.mxu0 0.0
    %1410 = vmatpush2.xpose.msra.mxu0 0.0
    %1411 = vmatprep.subr.mxu0 0.0
    %1412 = vmatpush2.xpose.msra.mxu0 0.0
    %1413 = vmatprep.subr.mxu0 0.0
    %1414 = vmatpush2.xpose.msra.mxu0 0.0
    %1415 = vmatprep.subr.mxu0 0.0
    %1416 = vmatpush2.xpose.msra.mxu0 0.0
    %1417 = vmatprep.subr.mxu0 0.0
    %1418 = vmatpush2.xpose.msra.mxu0 0.0
    %1419 = vmatprep.subr.mxu0 0.0
    %1420 = vmatpush2.xpose.msra.mxu0 0.0
    %1421 = vmatprep.subr.mxu0 0.0
    %1422 = vmatpush2.xpose.msra.mxu0 0.0
    %1423 = vmatprep.subr.mxu0 0.0
    %1424 = vmatpush2.xpose.msra.mxu0 0.0
    %1425 = vmatprep.subr.mxu0 0.0
    %1426 = vmatpush2.xpose.msra.mxu0 0.0
    %1427 = vmatprep.subr.mxu0 0.0
    %1428 = vmatpush2.xpose.msra.mxu0 0.0
    %1429 = vmatprep.subr.mxu0 0.0
    %1430 = vmatpush2.xpose.msra.mxu0 0.0
    %1431 = vmatprep.subr.mxu0 0.0
    %1432 = vmatpush2.xpose.msra.mxu0 0.0
    %1433 = vmatprep.subr.mxu0 0.0
    %1434 = vmatpush2.xpose.msra.mxu0 0.0
    %1435 = vmatprep.mubr.f32.mxu0 0.0
    %1436 = vmatmul.mubr.f32.gmra.mxu0 %v1367
    %v1437 = vpop.f32.mrf.mxu0
    %v1438 = vadd.f32 0.0, %v1437
    %v1439 = vpop.f32.mrf.mxu0
    %1440 = vdwg.mxu0
    %v1441 = vsel %vm245, %v1438, -inf
    %1442 = vmax.xlane.f32.xlu0 %v1441
    %v1443 = vpop.xlane.xlu0 %1442
    %v1444 = vsub.f32 %v1438, %v1443
    %v1445 = vmul.f32 %v1444, 1.442695
    %v1446 = vpow.pop %v1445
    %v1447 = vsel %vm245, %v1446, 0.0
    %1448 = vadd.xlane.f32.xlu0 %v1447
    %v1449 = vpop.xlane.xlu0 %1448
    %v1450 = vrcp.pop %v1449
    %v1451 = vmul.f32 %v1446, %v1450
    %1452 = vrot.lane.b32.xlu0 %v234, 56
    %v1453 = vpop.permute.xlu0 %1452
    %v1456 = vsel %vm245, %v1451, 0
    %1458 = vmatprep.subr.mxu0 0.0
    %1459 = vmatpush1.msra.mxu0 0.0
    %1460 = vmatprep.subr.mxu0 0.0
    %1461 = vmatpush1.msra.mxu0 0.0
    %1462 = vmatprep.subr.mxu0 0.0
    %1463 = vmatpush1.msra.mxu0 0.0
    %1464 = vmatprep.subr.mxu0 0.0
    %1465 = vmatpush1.msra.mxu0 0.0
    %1466 = vmatprep.subr.mxu0 0.0
    %1467 = vmatpush1.msra.mxu0 0.0
    %1468 = vmatprep.subr.mxu0 0.0
    %1469 = vmatpush1.msra.mxu0 0.0
    %1470 = vmatprep.subr.mxu0 0.0
    %1471 = vmatpush1.msra.mxu0 0.0
    %1472 = vmatprep.subr.mxu0 0.0
    %1473 = vmatpush1.msra.mxu0 0.0
    %1474 = vmatprep.subr.mxu0 0.0
    %1475 = vmatpush1.msra.mxu0 0.0
    %1476 = vmatprep.subr.mxu0 0.0
    %1477 = vmatpush1.msra.mxu0 0.0
    %1478 = vmatprep.subr.mxu0 0.0
    %1479 = vmatpush1.msra.mxu0 0.0
    %1480 = vmatprep.subr.mxu0 0.0
    %1481 = vmatpush1.msra.mxu0 0.0
    %1482 = vmatprep.subr.mxu0 0.0
    %1483 = vmatpush1.msra.mxu0 0.0
    %1484 = vmatprep.subr.mxu0 0.0
    %1485 = vmatpush1.msra.mxu0 0.0
    %1486 = vmatprep.subr.mxu0 0.0
    %1487 = vmatpush1.msra.mxu0 0.0
    %1488 = vmatprep.subr.mxu0 0.0
    %1489 = vmatpush1.msra.mxu0 %v1453
    %1490 = vmatprep.subr.mxu0 0.0
    %1491 = vmatpush2.msra.mxu0 0.0
    %1492 = vmatprep.subr.mxu0 0.0
    %1493 = vmatpush2.msra.mxu0 0.0
    %1494 = vmatprep.subr.mxu0 0.0
    %1495 = vmatpush2.msra.mxu0 0.0
    %1496 = vmatprep.subr.mxu0 0.0
    %1497 = vmatpush2.msra.mxu0 0.0
    %1498 = vmatprep.subr.mxu0 0.0
    %1499 = vmatpush2.msra.mxu0 0.0
    %1500 = vmatprep.subr.mxu0 0.0
    %1501 = vmatpush2.msra.mxu0 0.0
    %1502 = vmatprep.subr.mxu0 0.0
    %1503 = vmatpush2.msra.mxu0 0.0
    %1504 = vmatprep.subr.mxu0 0.0
    %1505 = vmatpush2.msra.mxu0 0.0
    %1506 = vmatprep.subr.mxu0 0.0
    %1507 = vmatpush2.msra.mxu0 0.0
    %1508 = vmatprep.subr.mxu0 0.0
    %1509 = vmatpush2.msra.mxu0 0.0
    %1510 = vmatprep.subr.mxu0 0.0
    %1511 = vmatpush2.msra.mxu0 0.0
    %1512 = vmatprep.subr.mxu0 0.0
    %1513 = vmatpush2.msra.mxu0 0.0
    %1514 = vmatprep.subr.mxu0 0.0
    %1515 = vmatpush2.msra.mxu0 0.0
    %1516 = vmatprep.subr.mxu0 0.0
    %1517 = vmatpush2.msra.mxu0 0.0
    %1518 = vmatprep.subr.mxu0 0.0
    %1519 = vmatpush2.msra.mxu0 0.0
    %1520 = vmatprep.subr.mxu0 0.0
    %1521 = vmatpush2.msra.mxu0 0.0
    %1522 = vmatprep.mubr.f32.mxu0 0.0
    %1523 = vmatmul.mubr.f32.gmra.mxu0 %v1456
    %v1524 = vpop.f32.mrf.mxu0
    %v1525 = vadd.f32 0.0, %v1524
    %v1526 = vpop.f32.mrf.mxu0
    %1527 = vdwg.mxu0
    %v1529 = vsel %vm245, %v1525, 0
    %1531 = vmatprep.subr.mxu0 0.0
    %1532 = vmatpush1.msra.mxu0 0.0
    %1533 = vmatprep.subr.mxu0 0.0
    %1534 = vmatpush1.msra.mxu0 0.0
    %1535 = vmatprep.subr.mxu0 0.0
    %1536 = vmatpush1.msra.mxu0 0.0
    %1537 = vmatprep.subr.mxu0 0.0
    %1538 = vmatpush1.msra.mxu0 0.0
    %1539 = vmatprep.subr.mxu0 0.0
    %1540 = vmatpush1.msra.mxu0 0.0
    %1541 = vmatprep.subr.mxu0 0.0
    %1542 = vmatpush1.msra.mxu0 0.0
    %1543 = vmatprep.subr.mxu0 0.0
    %1544 = vmatpush1.msra.mxu0 0.0
    %1545 = vmatprep.subr.mxu0 0.0
    %1546 = vmatpush1.msra.mxu0 0.0
    %1547 = vmatprep.subr.mxu0 0.0
    %1548 = vmatpush1.msra.mxu0 0.0
    %1549 = vmatprep.subr.mxu0 0.0
    %1550 = vmatpush1.msra.mxu0 0.0
    %1551 = vmatprep.subr.mxu0 0.0
    %1552 = vmatpush1.msra.mxu0 0.0
    %1553 = vmatprep.subr.mxu0 0.0
    %1554 = vmatpush1.msra.mxu0 0.0
    %1555 = vmatprep.subr.mxu0 0.0
    %1556 = vmatpush1.msra.mxu0 0.0
    %1557 = vmatprep.subr.mxu0 0.0
    %1558 = vmatpush1.msra.mxu0 0.0
    %1559 = vmatprep.subr.mxu0 0.0
    %1560 = vmatpush1.msra.mxu0 0.0
    %1561 = vmatprep.subr.mxu0 0.0
    %1562 = vmatpush1.msra.mxu0 %v238
    %1563 = vmatprep.subr.mxu0 0.0
    %1564 = vmatpush2.msra.mxu0 0.0
    %1565 = vmatprep.subr.mxu0 0.0
    %1566 = vmatpush2.msra.mxu0 0.0
    %1567 = vmatprep.subr.mxu0 0.0
    %1568 = vmatpush2.msra.mxu0 0.0
    %1569 = vmatprep.subr.mxu0 0.0
    %1570 = vmatpush2.msra.mxu0 0.0
    %1571 = vmatprep.subr.mxu0 0.0
    %1572 = vmatpush2.msra.mxu0 0.0
    %1573 = vmatprep.subr.mxu0 0.0
    %1574 = vmatpush2.msra.mxu0 0.0
    %1575 = vmatprep.subr.mxu0 0.0
    %1576 = vmatpush2.msra.mxu0 0.0
    %1577 = vmatprep.subr.mxu0 0.0
    %1578 = vmatpush2.msra.mxu0 0.0
    %1579 = vmatprep.subr.mxu0 0.0
    %1580 = vmatpush2.msra.mxu0 0.0
    %1581 = vmatprep.subr.mxu0 0.0
    %1582 = vmatpush2.msra.mxu0 0.0
    %1583 = vmatprep.subr.mxu0 0.0
    %1584 = vmatpush2.msra.mxu0 0.0
    %1585 = vmatprep.subr.mxu0 0.0
    %1586 = vmatpush2.msra.mxu0 0.0
    %1587 = vmatprep.subr.mxu0 0.0
    %1588 = vmatpush2.msra.mxu0 0.0
    %1589 = vmatprep.subr.mxu0 0.0
    %1590 = vmatpush2.msra.mxu0 0.0
    %1591 = vmatprep.subr.mxu0 0.0
    %1592 = vmatpush2.msra.mxu0 0.0
    %1593 = vmatprep.subr.mxu0 0.0
    %1594 = vmatpush2.msra.mxu0 0.0
    %1595 = vmatprep.mubr.f32.mxu0 0.0
    %1596 = vmatmul.mubr.f32.gmra.mxu0 %v1529
    %v1597 = vpop.f32.mrf.mxu0
    %v1598 = vadd.f32 0.0, %v1597
    %v1599 = vpop.f32.mrf.mxu0
    %1600 = vdwg.mxu0
    %v1602 = vsel %vm245, %v1360, 0
    %1604 = vmatprep.subr.mxu0 0.0
    %1605 = vmatpush1.msra.mxu0 0.0
    %1606 = vmatprep.subr.mxu0 0.0
    %1607 = vmatpush1.msra.mxu0 0.0
    %1608 = vmatprep.subr.mxu0 0.0
    %1609 = vmatpush1.msra.mxu0 0.0
    %1610 = vmatprep.subr.mxu0 0.0
    %1611 = vmatpush1.msra.mxu0 0.0
    %1612 = vmatprep.subr.mxu0 0.0
    %1613 = vmatpush1.msra.mxu0 0.0
    %1614 = vmatprep.subr.mxu0 0.0
    %1615 = vmatpush1.msra.mxu0 0.0
    %1616 = vmatprep.subr.mxu0 0.0
    %1617 = vmatpush1.msra.mxu0 0.0
    %1618 = vmatprep.subr.mxu0 0.0
    %1619 = vmatpush1.msra.mxu0 0.0
    %1620 = vmatprep.subr.mxu0 0.0
    %1621 = vmatpush1.msra.mxu0 0.0
    %1622 = vmatprep.subr.mxu0 0.0
    %1623 = vmatpush1.msra.mxu0 0.0
    %1624 = vmatprep.subr.mxu0 0.0
    %1625 = vmatpush1.msra.mxu0 0.0
    %1626 = vmatprep.subr.mxu0 0.0
    %1627 = vmatpush1.msra.mxu0 0.0
    %1628 = vmatprep.subr.mxu0 0.0
    %1629 = vmatpush1.msra.mxu0 0.0
    %1630 = vmatprep.subr.mxu0 0.0
    %1631 = vmatpush1.msra.mxu0 0.0
    %1632 = vmatprep.subr.mxu0 0.0
    %1633 = vmatpush1.msra.mxu0 0.0
    %1634 = vmatprep.subr.mxu0 0.0
    %1635 = vmatpush1.msra.mxu0 %v237
    %1636 = vmatprep.subr.mxu0 0.0
    %1637 = vmatpush2.msra.mxu0 0.0
    %1638 = vmatprep.subr.mxu0 0.0
    %1639 = vmatpush2.msra.mxu0 0.0
    %1640 = vmatprep.subr.mxu0 0.0
    %1641 = vmatpush2.msra.mxu0 0.0
    %1642 = vmatprep.subr.mxu0 0.0
    %1643 = vmatpush2.msra.mxu0 0.0
    %1644 = vmatprep.subr.mxu0 0.0
    %1645 = vmatpush2.msra.mxu0 0.0
    %1646 = vmatprep.subr.mxu0 0.0
    %1647 = vmatpush2.msra.mxu0 0.0
    %1648 = vmatprep.subr.mxu0 0.0
    %1649 = vmatpush2.msra.mxu0 0.0
    %1650 = vmatprep.subr.mxu0 0.0
    %1651 = vmatpush2.msra.mxu0 0.0
    %1652 = vmatprep.subr.mxu0 0.0
    %1653 = vmatpush2.msra.mxu0 0.0
    %1654 = vmatprep.subr.mxu0 0.0
    %1655 = vmatpush2.msra.mxu0 0.0
    %1656 = vmatprep.subr.mxu0 0.0
    %1657 = vmatpush2.msra.mxu0 0.0
    %1658 = vmatprep.subr.mxu0 0.0
    %1659 = vmatpush2.msra.mxu0 0.0
    %1660 = vmatprep.subr.mxu0 0.0
    %1661 = vmatpush2.msra.mxu0 0.0
    %1662 = vmatprep.subr.mxu0 0.0
    %1663 = vmatpush2.msra.mxu0 0.0
    %1664 = vmatprep.subr.mxu0 0.0
    %1665 = vmatpush2.msra.mxu0 0.0
    %1666 = vmatprep.subr.mxu0 0.0
    %1667 = vmatpush2.msra.mxu0 0.0
    %1668 = vmatprep.mubr.f32.mxu0 0.0
    %1669 = vmatmul.mubr.f32.gmra.mxu0 %v1602
    %v1670 = vpop.f32.mrf.mxu0
    %v1671 = vadd.f32 %v1598, %v1670
    %v1672 = vpop.f32.mrf.mxu0
    %1673 = vdwg.mxu0
    %1674 = vrot.lane.b32.xlu0 %v1197, 112
    %v1675 = vpop.permute.xlu0 %1674
    %1676 = vrot.lane.b32.xlu0 %v234, 80
    %v1677 = vpop.permute.xlu0 %1676
    %v1678 = vsel %vm245, %v1675, 0
    %v1680 = vsel %vm245, %v1677, 0
    %1682 = vmatprep.subr.mxu0 0.0
    %1683 = vmatpush1.xpose.msra.mxu0 0.0
    %1684 = vmatprep.subr.mxu0 0.0
    %1685 = vmatpush1.xpose.msra.mxu0 0.0
    %1686 = vmatprep.subr.mxu0 0.0
    %1687 = vmatpush1.xpose.msra.mxu0 0.0
    %1688 = vmatprep.subr.mxu0 0.0
    %1689 = vmatpush1.xpose.msra.mxu0 0.0
    %1690 = vmatprep.subr.mxu0 0.0
    %1691 = vmatpush1.xpose.msra.mxu0 0.0
    %1692 = vmatprep.subr.mxu0 0.0
    %1693 = vmatpush1.xpose.msra.mxu0 0.0
    %1694 = vmatprep.subr.mxu0 0.0
    %1695 = vmatpush1.xpose.msra.mxu0 0.0
    %1696 = vmatprep.subr.mxu0 0.0
    %1697 = vmatpush1.xpose.msra.mxu0 0.0
    %1698 = vmatprep.subr.mxu0 0.0
    %1699 = vmatpush1.xpose.msra.mxu0 0.0
    %1700 = vmatprep.subr.mxu0 0.0
    %1701 = vmatpush1.xpose.msra.mxu0 0.0
    %1702 = vmatprep.subr.mxu0 0.0
    %1703 = vmatpush1.xpose.msra.mxu0 0.0
    %1704 = vmatprep.subr.mxu0 0.0
    %1705 = vmatpush1.xpose.msra.mxu0 0.0
    %1706 = vmatprep.subr.mxu0 0.0
    %1707 = vmatpush1.xpose.msra.mxu0 0.0
    %1708 = vmatprep.subr.mxu0 0.0
    %1709 = vmatpush1.xpose.msra.mxu0 0.0
    %1710 = vmatprep.subr.mxu0 0.0
    %1711 = vmatpush1.xpose.msra.mxu0 0.0
    %1712 = vmatprep.subr.mxu0 0.0
    %1713 = vmatpush1.xpose.msra.mxu0 %v1680
    %1714 = vmatprep.subr.mxu0 0.0
    %1715 = vmatpush2.xpose.msra.mxu0 0.0
    %1716 = vmatprep.subr.mxu0 0.0
    %1717 = vmatpush2.xpose.msra.mxu0 0.0
    %1718 = vmatprep.subr.mxu0 0.0
    %1719 = vmatpush2.xpose.msra.mxu0 0.0
    %1720 = vmatprep.subr.mxu0 0.0
    %1721 = vmatpush2.xpose.msra.mxu0 0.0
    %1722 = vmatprep.subr.mxu0 0.0
    %1723 = vmatpush2.xpose.msra.mxu0 0.0
    %1724 = vmatprep.subr.mxu0 0.0
    %1725 = vmatpush2.xpose.msra.mxu0 0.0
    %1726 = vmatprep.subr.mxu0 0.0
    %1727 = vmatpush2.xpose.msra.mxu0 0.0
    %1728 = vmatprep.subr.mxu0 0.0
    %1729 = vmatpush2.xpose.msra.mxu0 0.0
    %1730 = vmatprep.subr.mxu0 0.0
    %1731 = vmatpush2.xpose.msra.mxu0 0.0
    %1732 = vmatprep.subr.mxu0 0.0
    %1733 = vmatpush2.xpose.msra.mxu0 0.0
    %1734 = vmatprep.subr.mxu0 0.0
    %1735 = vmatpush2.xpose.msra.mxu0 0.0
    %1736 = vmatprep.subr.mxu0 0.0
    %1737 = vmatpush2.xpose.msra.mxu0 0.0
    %1738 = vmatprep.subr.mxu0 0.0
    %1739 = vmatpush2.xpose.msra.mxu0 0.0
    %1740 = vmatprep.subr.mxu0 0.0
    %1741 = vmatpush2.xpose.msra.mxu0 0.0
    %1742 = vmatprep.subr.mxu0 0.0
    %1743 = vmatpush2.xpose.msra.mxu0 0.0
    %1744 = vmatprep.subr.mxu0 0.0
    %1745 = vmatpush2.xpose.msra.mxu0 0.0
    %1746 = vmatprep.mubr.f32.mxu0 0.0
    %1747 = vmatmul.mubr.f32.gmra.mxu0 %v1678
    %v1748 = vpop.f32.mrf.mxu0
    %v1749 = vadd.f32 0.0, %v1748
    %v1750 = vpop.f32.mrf.mxu0
    %1751 = vdwg.mxu0
    %v1752 = vsel %vm245, %v1749, -inf
    %1753 = vmax.xlane.f32.xlu0 %v1752
    %v1754 = vpop.xlane.xlu0 %1753
    %v1755 = vsub.f32 %v1749, %v1754
    %v1756 = vmul.f32 %v1755, 1.442695
    %v1757 = vpow.pop %v1756
    %v1758 = vsel %vm245, %v1757, 0.0
    %1759 = vadd.xlane.f32.xlu0 %v1758
    %v1760 = vpop.xlane.xlu0 %1759
    %v1761 = vrcp.pop %v1760
    %v1762 = vmul.f32 %v1757, %v1761
    %1763 = vrot.lane.b32.xlu0 %v234, 48
    %v1764 = vpop.permute.xlu0 %1763
    %v1767 = vsel %vm245, %v1762, 0
    %1769 = vmatprep.subr.mxu0 0.0
    %1770 = vmatpush1.msra.mxu0 0.0
    %1771 = vmatprep.subr.mxu0 0.0
    %1772 = vmatpush1.msra.mxu0 0.0
    %1773 = vmatprep.subr.mxu0 0.0
    %1774 = vmatpush1.msra.mxu0 0.0
    %1775 = vmatprep.subr.mxu0 0.0
    %1776 = vmatpush1.msra.mxu0 0.0
    %1777 = vmatprep.subr.mxu0 0.0
    %1778 = vmatpush1.msra.mxu0 0.0
    %1779 = vmatprep.subr.mxu0 0.0
    %1780 = vmatpush1.msra.mxu0 0.0
    %1781 = vmatprep.subr.mxu0 0.0
    %1782 = vmatpush1.msra.mxu0 0.0
    %1783 = vmatprep.subr.mxu0 0.0
    %1784 = vmatpush1.msra.mxu0 0.0
    %1785 = vmatprep.subr.mxu0 0.0
    %1786 = vmatpush1.msra.mxu0 0.0
    %1787 = vmatprep.subr.mxu0 0.0
    %1788 = vmatpush1.msra.mxu0 0.0
    %1789 = vmatprep.subr.mxu0 0.0
    %1790 = vmatpush1.msra.mxu0 0.0
    %1791 = vmatprep.subr.mxu0 0.0
    %1792 = vmatpush1.msra.mxu0 0.0
    %1793 = vmatprep.subr.mxu0 0.0
    %1794 = vmatpush1.msra.mxu0 0.0
    %1795 = vmatprep.subr.mxu0 0.0
    %1796 = vmatpush1.msra.mxu0 0.0
    %1797 = vmatprep.subr.mxu0 0.0
    %1798 = vmatpush1.msra.mxu0 0.0
    %1799 = vmatprep.subr.mxu0 0.0
    %1800 = vmatpush1.msra.mxu0 %v1764
    %1801 = vmatprep.subr.mxu0 0.0
    %1802 = vmatpush2.msra.mxu0 0.0
    %1803 = vmatprep.subr.mxu0 0.0
    %1804 = vmatpush2.msra.mxu0 0.0
    %1805 = vmatprep.subr.mxu0 0.0
    %1806 = vmatpush2.msra.mxu0 0.0
    %1807 = vmatprep.subr.mxu0 0.0
    %1808 = vmatpush2.msra.mxu0 0.0
    %1809 = vmatprep.subr.mxu0 0.0
    %1810 = vmatpush2.msra.mxu0 0.0
    %1811 = vmatprep.subr.mxu0 0.0
    %1812 = vmatpush2.msra.mxu0 0.0
    %1813 = vmatprep.subr.mxu0 0.0
    %1814 = vmatpush2.msra.mxu0 0.0
    %1815 = vmatprep.subr.mxu0 0.0
    %1816 = vmatpush2.msra.mxu0 0.0
    %1817 = vmatprep.subr.mxu0 0.0
    %1818 = vmatpush2.msra.mxu0 0.0
    %1819 = vmatprep.subr.mxu0 0.0
    %1820 = vmatpush2.msra.mxu0 0.0
    %1821 = vmatprep.subr.mxu0 0.0
    %1822 = vmatpush2.msra.mxu0 0.0
    %1823 = vmatprep.subr.mxu0 0.0
    %1824 = vmatpush2.msra.mxu0 0.0
    %1825 = vmatprep.subr.mxu0 0.0
    %1826 = vmatpush2.msra.mxu0 0.0
    %1827 = vmatprep.subr.mxu0 0.0
    %1828 = vmatpush2.msra.mxu0 0.0
    %1829 = vmatprep.subr.mxu0 0.0
    %1830 = vmatpush2.msra.mxu0 0.0
    %1831 = vmatprep.subr.mxu0 0.0
    %1832 = vmatpush2.msra.mxu0 0.0
    %1833 = vmatprep.mubr.f32.mxu0 0.0
    %1834 = vmatmul.mubr.f32.gmra.mxu0 %v1767
    %v1835 = vpop.f32.mrf.mxu0
    %v1836 = vadd.f32 0.0, %v1835
    %v1837 = vpop.f32.mrf.mxu0
    %1838 = vdwg.mxu0
    %v1840 = vsel %vm245, %v1836, 0
    %1842 = vmatprep.subr.mxu0 0.0
    %1843 = vmatpush1.msra.mxu0 0.0
    %1844 = vmatprep.subr.mxu0 0.0
    %1845 = vmatpush1.msra.mxu0 0.0
    %1846 = vmatprep.subr.mxu0 0.0
    %1847 = vmatpush1.msra.mxu0 0.0
    %1848 = vmatprep.subr.mxu0 0.0
    %1849 = vmatpush1.msra.mxu0 0.0
    %1850 = vmatprep.subr.mxu0 0.0
    %1851 = vmatpush1.msra.mxu0 0.0
    %1852 = vmatprep.subr.mxu0 0.0
    %1853 = vmatpush1.msra.mxu0 0.0
    %1854 = vmatprep.subr.mxu0 0.0
    %1855 = vmatpush1.msra.mxu0 0.0
    %1856 = vmatprep.subr.mxu0 0.0
    %1857 = vmatpush1.msra.mxu0 0.0
    %1858 = vmatprep.subr.mxu0 0.0
    %1859 = vmatpush1.msra.mxu0 0.0
    %1860 = vmatprep.subr.mxu0 0.0
    %1861 = vmatpush1.msra.mxu0 0.0
    %1862 = vmatprep.subr.mxu0 0.0
    %1863 = vmatpush1.msra.mxu0 0.0
    %1864 = vmatprep.subr.mxu0 0.0
    %1865 = vmatpush1.msra.mxu0 0.0
    %1866 = vmatprep.subr.mxu0 0.0
    %1867 = vmatpush1.msra.mxu0 0.0
    %1868 = vmatprep.subr.mxu0 0.0
    %1869 = vmatpush1.msra.mxu0 0.0
    %1870 = vmatprep.subr.mxu0 0.0
    %1871 = vmatpush1.msra.mxu0 0.0
    %1872 = vmatprep.subr.mxu0 0.0
    %1873 = vmatpush1.msra.mxu0 %v239
    %1874 = vmatprep.subr.mxu0 0.0
    %1875 = vmatpush2.msra.mxu0 0.0
    %1876 = vmatprep.subr.mxu0 0.0
    %1877 = vmatpush2.msra.mxu0 0.0
    %1878 = vmatprep.subr.mxu0 0.0
    %1879 = vmatpush2.msra.mxu0 0.0
    %1880 = vmatprep.subr.mxu0 0.0
    %1881 = vmatpush2.msra.mxu0 0.0
    %1882 = vmatprep.subr.mxu0 0.0
    %1883 = vmatpush2.msra.mxu0 0.0
    %1884 = vmatprep.subr.mxu0 0.0
    %1885 = vmatpush2.msra.mxu0 0.0
    %1886 = vmatprep.subr.mxu0 0.0
    %1887 = vmatpush2.msra.mxu0 0.0
    %1888 = vmatprep.subr.mxu0 0.0
    %1889 = vmatpush2.msra.mxu0 0.0
    %1890 = vmatprep.subr.mxu0 0.0
    %1891 = vmatpush2.msra.mxu0 0.0
    %1892 = vmatprep.subr.mxu0 0.0
    %1893 = vmatpush2.msra.mxu0 0.0
    %1894 = vmatprep.subr.mxu0 0.0
    %1895 = vmatpush2.msra.mxu0 0.0
    %1896 = vmatprep.subr.mxu0 0.0
    %1897 = vmatpush2.msra.mxu0 0.0
    %1898 = vmatprep.subr.mxu0 0.0
    %1899 = vmatpush2.msra.mxu0 0.0
    %1900 = vmatprep.subr.mxu0 0.0
    %1901 = vmatpush2.msra.mxu0 0.0
    %1902 = vmatprep.subr.mxu0 0.0
    %1903 = vmatpush2.msra.mxu0 0.0
    %1904 = vmatprep.subr.mxu0 0.0
    %1905 = vmatpush2.msra.mxu0 0.0
    %1906 = vmatprep.mubr.f32.mxu0 0.0
    %1907 = vmatmul.mubr.f32.gmra.mxu0 %v1840
    %v1908 = vpop.f32.mrf.mxu0
    %v1909 = vadd.f32 0.0, %v1908
    %v1910 = vpop.f32.mrf.mxu0
    %1911 = vdwg.mxu0
    %v1912 = vadd.f32 %v1671, %v1909
    %1913 = vrot.lane.b32.xlu0 %v1197, 104
    %v1914 = vpop.permute.xlu0 %1913
    %1915 = vrot.lane.b32.xlu0 %v234, 72
    %v1916 = vpop.permute.xlu0 %1915
    %v1917 = vsel %vm245, %v1914, 0
    %v1919 = vsel %vm245, %v1916, 0
    %1921 = vmatprep.subr.mxu0 0.0
    %1922 = vmatpush1.xpose.msra.mxu0 0.0
    %1923 = vmatprep.subr.mxu0 0.0
    %1924 = vmatpush1.xpose.msra.mxu0 0.0
    %1925 = vmatprep.subr.mxu0 0.0
    %1926 = vmatpush1.xpose.msra.mxu0 0.0
    %1927 = vmatprep.subr.mxu0 0.0
    %1928 = vmatpush1.xpose.msra.mxu0 0.0
    %1929 = vmatprep.subr.mxu0 0.0
    %1930 = vmatpush1.xpose.msra.mxu0 0.0
    %1931 = vmatprep.subr.mxu0 0.0
    %1932 = vmatpush1.xpose.msra.mxu0 0.0
    %1933 = vmatprep.subr.mxu0 0.0
    %1934 = vmatpush1.xpose.msra.mxu0 0.0
    %1935 = vmatprep.subr.mxu0 0.0
    %1936 = vmatpush1.xpose.msra.mxu0 0.0
    %1937 = vmatprep.subr.mxu0 0.0
    %1938 = vmatpush1.xpose.msra.mxu0 0.0
    %1939 = vmatprep.subr.mxu0 0.0
    %1940 = vmatpush1.xpose.msra.mxu0 0.0
    %1941 = vmatprep.subr.mxu0 0.0
    %1942 = vmatpush1.xpose.msra.mxu0 0.0
    %1943 = vmatprep.subr.mxu0 0.0
    %1944 = vmatpush1.xpose.msra.mxu0 0.0
    %1945 = vmatprep.subr.mxu0 0.0
    %1946 = vmatpush1.xpose.msra.mxu0 0.0
    %1947 = vmatprep.subr.mxu0 0.0
    %1948 = vmatpush1.xpose.msra.mxu0 0.0
    %1949 = vmatprep.subr.mxu0 0.0
    %1950 = vmatpush1.xpose.msra.mxu0 0.0
    %1951 = vmatprep.subr.mxu0 0.0
    %1952 = vmatpush1.xpose.msra.mxu0 %v1919
    %1953 = vmatprep.subr.mxu0 0.0
    %1954 = vmatpush2.xpose.msra.mxu0 0.0
    %1955 = vmatprep.subr.mxu0 0.0
    %1956 = vmatpush2.xpose.msra.mxu0 0.0
    %1957 = vmatprep.subr.mxu0 0.0
    %1958 = vmatpush2.xpose.msra.mxu0 0.0
    %1959 = vmatprep.subr.mxu0 0.0
    %1960 = vmatpush2.xpose.msra.mxu0 0.0
    %1961 = vmatprep.subr.mxu0 0.0
    %1962 = vmatpush2.xpose.msra.mxu0 0.0
    %1963 = vmatprep.subr.mxu0 0.0
    %1964 = vmatpush2.xpose.msra.mxu0 0.0
    %1965 = vmatprep.subr.mxu0 0.0
    %1966 = vmatpush2.xpose.msra.mxu0 0.0
    %1967 = vmatprep.subr.mxu0 0.0
    %1968 = vmatpush2.xpose.msra.mxu0 0.0
    %1969 = vmatprep.subr.mxu0 0.0
    %1970 = vmatpush2.xpose.msra.mxu0 0.0
    %1971 = vmatprep.subr.mxu0 0.0
    %1972 = vmatpush2.xpose.msra.mxu0 0.0
    %1973 = vmatprep.subr.mxu0 0.0
    %1974 = vmatpush2.xpose.msra.mxu0 0.0
    %1975 = vmatprep.subr.mxu0 0.0
    %1976 = vmatpush2.xpose.msra.mxu0 0.0
    %1977 = vmatprep.subr.mxu0 0.0
    %1978 = vmatpush2.xpose.msra.mxu0 0.0
    %1979 = vmatprep.subr.mxu0 0.0
    %1980 = vmatpush2.xpose.msra.mxu0 0.0
    %1981 = vmatprep.subr.mxu0 0.0
    %1982 = vmatpush2.xpose.msra.mxu0 0.0
    %1983 = vmatprep.subr.mxu0 0.0
    %1984 = vmatpush2.xpose.msra.mxu0 0.0
    %1985 = vmatprep.mubr.f32.mxu0 0.0
    %1986 = vmatmul.mubr.f32.gmra.mxu0 %v1917
    %v1987 = vpop.f32.mrf.mxu0
    %v1988 = vadd.f32 0.0, %v1987
    %v1989 = vpop.f32.mrf.mxu0
    %1990 = vdwg.mxu0
    %v1991 = vsel %vm245, %v1988, -inf
    %1992 = vmax.xlane.f32.xlu0 %v1991
    %v1993 = vpop.xlane.xlu0 %1992
    %v1994 = vsub.f32 %v1988, %v1993
    %v1995 = vmul.f32 %v1994, 1.442695
    %v1996 = vpow.pop %v1995
    %v1997 = vsel %vm245, %v1996, 0.0
    %1998 = vadd.xlane.f32.xlu0 %v1997
    %v1999 = vpop.xlane.xlu0 %1998
    %v2000 = vrcp.pop %v1999
    %v2001 = vmul.f32 %v1996, %v2000
    %2002 = vrot.lane.b32.xlu0 %v234, 40
    %v2003 = vpop.permute.xlu0 %2002
    %v2006 = vsel %vm245, %v2001, 0
    %2008 = vmatprep.subr.mxu0 0.0
    %2009 = vmatpush1.msra.mxu0 0.0
    %2010 = vmatprep.subr.mxu0 0.0
    %2011 = vmatpush1.msra.mxu0 0.0
    %2012 = vmatprep.subr.mxu0 0.0
    %2013 = vmatpush1.msra.mxu0 0.0
    %2014 = vmatprep.subr.mxu0 0.0
    %2015 = vmatpush1.msra.mxu0 0.0
    %2016 = vmatprep.subr.mxu0 0.0
    %2017 = vmatpush1.msra.mxu0 0.0
    %2018 = vmatprep.subr.mxu0 0.0
    %2019 = vmatpush1.msra.mxu0 0.0
    %2020 = vmatprep.subr.mxu0 0.0
    %2021 = vmatpush1.msra.mxu0 0.0
    %2022 = vmatprep.subr.mxu0 0.0
    %2023 = vmatpush1.msra.mxu0 0.0
    %2024 = vmatprep.subr.mxu0 0.0
    %2025 = vmatpush1.msra.mxu0 0.0
    %2026 = vmatprep.subr.mxu0 0.0
    %2027 = vmatpush1.msra.mxu0 0.0
    %2028 = vmatprep.subr.mxu0 0.0
    %2029 = vmatpush1.msra.mxu0 0.0
    %2030 = vmatprep.subr.mxu0 0.0
    %2031 = vmatpush1.msra.mxu0 0.0
    %2032 = vmatprep.subr.mxu0 0.0
    %2033 = vmatpush1.msra.mxu0 0.0
    %2034 = vmatprep.subr.mxu0 0.0
    %2035 = vmatpush1.msra.mxu0 0.0
    %2036 = vmatprep.subr.mxu0 0.0
    %2037 = vmatpush1.msra.mxu0 0.0
    %2038 = vmatprep.subr.mxu0 0.0
    %2039 = vmatpush1.msra.mxu0 %v2003
    %2040 = vmatprep.subr.mxu0 0.0
    %2041 = vmatpush2.msra.mxu0 0.0
    %2042 = vmatprep.subr.mxu0 0.0
    %2043 = vmatpush2.msra.mxu0 0.0
    %2044 = vmatprep.subr.mxu0 0.0
    %2045 = vmatpush2.msra.mxu0 0.0
    %2046 = vmatprep.subr.mxu0 0.0
    %2047 = vmatpush2.msra.mxu0 0.0
    %2048 = vmatprep.subr.mxu0 0.0
    %2049 = vmatpush2.msra.mxu0 0.0
    %2050 = vmatprep.subr.mxu0 0.0
    %2051 = vmatpush2.msra.mxu0 0.0
    %2052 = vmatprep.subr.mxu0 0.0
    %2053 = vmatpush2.msra.mxu0 0.0
    %2054 = vmatprep.subr.mxu0 0.0
    %2055 = vmatpush2.msra.mxu0 0.0
    %2056 = vmatprep.subr.mxu0 0.0
    %2057 = vmatpush2.msra.mxu0 0.0
    %2058 = vmatprep.subr.mxu0 0.0
    %2059 = vmatpush2.msra.mxu0 0.0
    %2060 = vmatprep.subr.mxu0 0.0
    %2061 = vmatpush2.msra.mxu0 0.0
    %2062 = vmatprep.subr.mxu0 0.0
    %2063 = vmatpush2.msra.mxu0 0.0
    %2064 = vmatprep.subr.mxu0 0.0
    %2065 = vmatpush2.msra.mxu0 0.0
    %2066 = vmatprep.subr.mxu0 0.0
    %2067 = vmatpush2.msra.mxu0 0.0
    %2068 = vmatprep.subr.mxu0 0.0
    %2069 = vmatpush2.msra.mxu0 0.0
    %2070 = vmatprep.subr.mxu0 0.0
    %2071 = vmatpush2.msra.mxu0 0.0
    %2072 = vmatprep.mubr.f32.mxu0 0.0
    %2073 = vmatmul.mubr.f32.gmra.mxu0 %v2006
    %v2074 = vpop.f32.mrf.mxu0
    %v2075 = vadd.f32 0.0, %v2074
    %v2076 = vpop.f32.mrf.mxu0
    %2077 = vdwg.mxu0
    %v2079 = vsel %vm245, %v2075, 0
    %2081 = vmatprep.subr.mxu0 0.0
    %2082 = vmatpush1.msra.mxu0 0.0
    %2083 = vmatprep.subr.mxu0 0.0
    %2084 = vmatpush1.msra.mxu0 0.0
    %2085 = vmatprep.subr.mxu0 0.0
    %2086 = vmatpush1.msra.mxu0 0.0
    %2087 = vmatprep.subr.mxu0 0.0
    %2088 = vmatpush1.msra.mxu0 0.0
    %2089 = vmatprep.subr.mxu0 0.0
    %2090 = vmatpush1.msra.mxu0 0.0
    %2091 = vmatprep.subr.mxu0 0.0
    %2092 = vmatpush1.msra.mxu0 0.0
    %2093 = vmatprep.subr.mxu0 0.0
    %2094 = vmatpush1.msra.mxu0 0.0
    %2095 = vmatprep.subr.mxu0 0.0
    %2096 = vmatpush1.msra.mxu0 0.0
    %2097 = vmatprep.subr.mxu0 0.0
    %2098 = vmatpush1.msra.mxu0 0.0
    %2099 = vmatprep.subr.mxu0 0.0
    %2100 = vmatpush1.msra.mxu0 0.0
    %2101 = vmatprep.subr.mxu0 0.0
    %2102 = vmatpush1.msra.mxu0 0.0
    %2103 = vmatprep.subr.mxu0 0.0
    %2104 = vmatpush1.msra.mxu0 0.0
    %2105 = vmatprep.subr.mxu0 0.0
    %2106 = vmatpush1.msra.mxu0 0.0
    %2107 = vmatprep.subr.mxu0 0.0
    %2108 = vmatpush1.msra.mxu0 0.0
    %2109 = vmatprep.subr.mxu0 0.0
    %2110 = vmatpush1.msra.mxu0 0.0
    %2111 = vmatprep.subr.mxu0 0.0
    %2112 = vmatpush1.msra.mxu0 %v240
    %2113 = vmatprep.subr.mxu0 0.0
    %2114 = vmatpush2.msra.mxu0 0.0
    %2115 = vmatprep.subr.mxu0 0.0
    %2116 = vmatpush2.msra.mxu0 0.0
    %2117 = vmatprep.subr.mxu0 0.0
    %2118 = vmatpush2.msra.mxu0 0.0
    %2119 = vmatprep.subr.mxu0 0.0
    %2120 = vmatpush2.msra.mxu0 0.0
    %2121 = vmatprep.subr.mxu0 0.0
    %2122 = vmatpush2.msra.mxu0 0.0
    %2123 = vmatprep.subr.mxu0 0.0
    %2124 = vmatpush2.msra.mxu0 0.0
    %2125 = vmatprep.subr.mxu0 0.0
    %2126 = vmatpush2.msra.mxu0 0.0
    %2127 = vmatprep.subr.mxu0 0.0
    %2128 = vmatpush2.msra.mxu0 0.0
    %2129 = vmatprep.subr.mxu0 0.0
    %2130 = vmatpush2.msra.mxu0 0.0
    %2131 = vmatprep.subr.mxu0 0.0
    %2132 = vmatpush2.msra.mxu0 0.0
    %2133 = vmatprep.subr.mxu0 0.0
    %2134 = vmatpush2.msra.mxu0 0.0
    %2135 = vmatprep.subr.mxu0 0.0
    %2136 = vmatpush2.msra.mxu0 0.0
    %2137 = vmatprep.subr.mxu0 0.0
    %2138 = vmatpush2.msra.mxu0 0.0
    %2139 = vmatprep.subr.mxu0 0.0
    %2140 = vmatpush2.msra.mxu0 0.0
    %2141 = vmatprep.subr.mxu0 0.0
    %2142 = vmatpush2.msra.mxu0 0.0
    %2143 = vmatprep.subr.mxu0 0.0
    %2144 = vmatpush2.msra.mxu0 0.0
    %2145 = vmatprep.mubr.f32.mxu0 0.0
    %2146 = vmatmul.mubr.f32.gmra.mxu0 %v2079
    %v2147 = vpop.f32.mrf.mxu0
    %v2148 = vadd.f32 0.0, %v2147
    %v2149 = vpop.f32.mrf.mxu0
    %2150 = vdwg.mxu0
    %v2151 = vadd.f32 %v1912, %v2148
    %v2152 = vld [vmem:[%s5] sm:$0x1]
    %v2154 = vlaneseq
    %v2155 = vshrl.u32 %v2154, 7
    %v2156 = vsub.s32 0, %v2155
    %v2157 = vrot.slane %v2152, %v2156
    %v2159 = vadd.f32 %v1196, %v2157
    %v2160 = vadd.f32 %v2151, %v2157
    %v2161 = vadd.f32 %v140, %v2159
    %v2162 = vadd.f32 %v141, %v2160
    %v2163 = vld [vmem:[%s16] sm:$0x1]
    %v2164 = vld [vmem:[%s17] sm:$0x1]
    %v2165 = vsel %vm155, %v2161, 0.0
    %2166 = vadd.xlane.f32.xlu0 %v2165
    %v2167 = vpop.xlane.xlu0 %2166
    %v2168 = vsel %vm155, %v2162, 0.0
    %2169 = vadd.xlane.f32.xlu0 %v2168
    %v2170 = vpop.xlane.xlu0 %2169
    %v2171 = vrcp.pop 32.0
    %v2172 = vmul.f32 %v2167, %v2171
    %v2173 = vmul.f32 %v2170, %v2171
    %v2174 = vsub.f32 %v2161, %v2172
    %v2175 = vsub.f32 %v2162, %v2173
    %v2176 = vmul.f32 %v2174, %v2174
    %v2177 = vmul.f32 %v2175, %v2175
    %v2178 = vsel %vm155, %v2176, 0.0
    %2179 = vadd.xlane.f32.xlu0 %v2178
    %v2180 = vpop.xlane.xlu0 %2179
    %v2181 = vsel %vm155, %v2177, 0.0
    %2182 = vadd.xlane.f32.xlu0 %v2181
    %v2183 = vpop.xlane.xlu0 %2182
    %v2184 = vmul.f32 %v2180, %v2171
    %v2185 = vmul.f32 %v2183, %v2171
    %v2186 = vadd.f32 %v2184, 1e-05
    %v2187 = vadd.f32 %v2185, 1e-05
    %v2188 = vrsqrt.pop %v2186
    %v2189 = vrsqrt.pop %v2187
    %v2190 = vmul.f32 %v2174, %v2188
    %v2191 = vmul.f32 %v2175, %v2189
    %v2193 = vlaneseq
    %v2194 = vshrl.u32 %v2193, 7
    %v2195 = vsub.s32 0, %v2194
    %v2196 = vrot.slane %v2163, %v2195
    %v2198 = vmul.f32 %v2190, %v2196
    %v2199 = vmul.f32 %v2191, %v2196
    %v2201 = vlaneseq
    %v2202 = vshrl.u32 %v2201, 7
    %v2203 = vsub.s32 0, %v2202
    %v2204 = vrot.slane %v2164, %v2203
    %v2206 = vadd.f32 %v2198, %v2204
    %v2207 = vadd.f32 %v2199, %v2204
    %v2208 = vld [vmem:[%s6] sm:$0xff]
    %v2209 = vld [vmem:[%s6 + $0x8] sm:$0xff]
    %v2210 = vld [vmem:[%s6 + $0x10] sm:$0xff]
    %v2211 = vld [vmem:[%s6 + $0x18] sm:$0xff]
    %v2212 = vld [vmem:[%s7] sm:$0x1]
    %v2214 = vlaneseq
    %v2215 = vshrl.u32 %v2214, 7
    %v2216 = vsub.s32 0, %v2215
    %v2217 = vrot.slane %v2212, %v2216
    %v2220 = vsel %vm155, %v2206, 0
    %v2223 = vsel %vm155, %v2207, 0
    %2225 = vmatprep.subr.mxu0 0.0
    %2226 = vmatpush1.msra.mxu0 0.0
    %2227 = vmatprep.subr.mxu0 0.0
    %2228 = vmatpush1.msra.mxu0 0.0
    %2229 = vmatprep.subr.mxu0 0.0
    %2230 = vmatpush1.msra.mxu0 0.0
    %2231 = vmatprep.subr.mxu0 0.0
    %2232 = vmatpush1.msra.mxu0 0.0
    %2233 = vmatprep.subr.mxu0 0.0
    %2234 = vmatpush1.msra.mxu0 0.0
    %2235 = vmatprep.subr.mxu0 0.0
    %2236 = vmatpush1.msra.mxu0 0.0
    %2237 = vmatprep.subr.mxu0 0.0
    %2238 = vmatpush1.msra.mxu0 0.0
    %2239 = vmatprep.subr.mxu0 0.0
    %2240 = vmatpush1.msra.mxu0 0.0
    %2241 = vmatprep.subr.mxu0 0.0
    %2242 = vmatpush1.msra.mxu0 0.0
    %2243 = vmatprep.subr.mxu0 0.0
    %2244 = vmatpush1.msra.mxu0 0.0
    %2245 = vmatprep.subr.mxu0 0.0
    %2246 = vmatpush1.msra.mxu0 0.0
    %2247 = vmatprep.subr.mxu0 0.0
    %2248 = vmatpush1.msra.mxu0 0.0
    %2249 = vmatprep.subr.mxu0 0.0
    %2250 = vmatpush1.msra.mxu0 %v2211
    %2251 = vmatprep.subr.mxu0 0.0
    %2252 = vmatpush1.msra.mxu0 %v2210
    %2253 = vmatprep.subr.mxu0 0.0
    %2254 = vmatpush1.msra.mxu0 %v2209
    %2255 = vmatprep.subr.mxu0 0.0
    %2256 = vmatpush1.msra.mxu0 %v2208
    %2257 = vmatprep.subr.mxu0 0.0
    %2258 = vmatpush2.msra.mxu0 0.0
    %2259 = vmatprep.subr.mxu0 0.0
    %2260 = vmatpush2.msra.mxu0 0.0
    %2261 = vmatprep.subr.mxu0 0.0
    %2262 = vmatpush2.msra.mxu0 0.0
    %2263 = vmatprep.subr.mxu0 0.0
    %2264 = vmatpush2.msra.mxu0 0.0
    %2265 = vmatprep.subr.mxu0 0.0
    %2266 = vmatpush2.msra.mxu0 0.0
    %2267 = vmatprep.subr.mxu0 0.0
    %2268 = vmatpush2.msra.mxu0 0.0
    %2269 = vmatprep.subr.mxu0 0.0
    %2270 = vmatpush2.msra.mxu0 0.0
    %2271 = vmatprep.subr.mxu0 0.0
    %2272 = vmatpush2.msra.mxu0 0.0
    %2273 = vmatprep.subr.mxu0 0.0
    %2274 = vmatpush2.msra.mxu0 0.0
    %2275 = vmatprep.subr.mxu0 0.0
    %2276 = vmatpush2.msra.mxu0 0.0
    %2277 = vmatprep.subr.mxu0 0.0
    %2278 = vmatpush2.msra.mxu0 0.0
    %2279 = vmatprep.subr.mxu0 0.0
    %2280 = vmatpush2.msra.mxu0 0.0
    %2281 = vmatprep.subr.mxu0 0.0
    %2282 = vmatpush2.msra.mxu0 0.0
    %2283 = vmatprep.subr.mxu0 0.0
    %2284 = vmatpush2.msra.mxu0 0.0
    %2285 = vmatprep.subr.mxu0 0.0
    %2286 = vmatpush2.msra.mxu0 0.0
    %2287 = vmatprep.subr.mxu0 0.0
    %2288 = vmatpush2.msra.mxu0 0.0
    %2289 = vmatprep.mubr.f32.mxu0 0.0
    %2290 = vmatmul.mubr.f32.gmra.mxu0 %v2220
    %v2291 = vpop.f32.mrf.mxu0
    %v2292 = vadd.f32 %v2217, %v2291
    %v2293 = vpop.f32.mrf.mxu0
    %2294 = vmatprep.mubr.f32.mxu0 0.0
    %2295 = vmatmul.mubr.f32.gmra.mxu0 %v2223
    %v2296 = vpop.f32.mrf.mxu0
    %v2297 = vadd.f32 %v2217, %v2296
    %v2298 = vpop.f32.mrf.mxu0
    %2299 = vdwg.mxu0
    %v2300 = vld [vmem:[#allocation7] sm:$0xff]
    %v2301 = vld [vmem:[#allocation7 + $0x8] sm:$0xff]
    %v2302 = vld [vmem:[#allocation7 + $0x10] sm:$0xff]
    %v2303 = vld [vmem:[#allocation7 + $0x18] sm:$0xff]
    %v2304 = vld [vmem:[%s9] sm:$0x1]
    %v2306 = vlaneseq
    %v2307 = vshrl.u32 %v2306, 7
    %v2308 = vsub.s32 0, %v2307
    %v2309 = vrot.slane %v2304, %v2308
    %v2312 = vsel %vm155, %v142, 0
    %v2315 = vsel %vm155, %v143, 0
    %2317 = vmatprep.subr.mxu0 0.0
    %2318 = vmatpush1.msra.mxu0 0.0
    %2319 = vmatprep.subr.mxu0 0.0
    %2320 = vmatpush1.msra.mxu0 0.0
    %2321 = vmatprep.subr.mxu0 0.0
    %2322 = vmatpush1.msra.mxu0 0.0
    %2323 = vmatprep.subr.mxu0 0.0
    %2324 = vmatpush1.msra.mxu0 0.0
    %2325 = vmatprep.subr.mxu0 0.0
    %2326 = vmatpush1.msra.mxu0 0.0
    %2327 = vmatprep.subr.mxu0 0.0
    %2328 = vmatpush1.msra.mxu0 0.0
    %2329 = vmatprep.subr.mxu0 0.0
    %2330 = vmatpush1.msra.mxu0 0.0
    %2331 = vmatprep.subr.mxu0 0.0
    %2332 = vmatpush1.msra.mxu0 0.0
    %2333 = vmatprep.subr.mxu0 0.0
    %2334 = vmatpush1.msra.mxu0 0.0
    %2335 = vmatprep.subr.mxu0 0.0
    %2336 = vmatpush1.msra.mxu0 0.0
    %2337 = vmatprep.subr.mxu0 0.0
    %2338 = vmatpush1.msra.mxu0 0.0
    %2339 = vmatprep.subr.mxu0 0.0
    %2340 = vmatpush1.msra.mxu0 0.0
    %2341 = vmatprep.subr.mxu0 0.0
    %2342 = vmatpush1.msra.mxu0 %v2303
    %2343 = vmatprep.subr.mxu0 0.0
    %2344 = vmatpush1.msra.mxu0 %v2302
    %2345 = vmatprep.subr.mxu0 0.0
    %2346 = vmatpush1.msra.mxu0 %v2301
    %2347 = vmatprep.subr.mxu0 0.0
    %2348 = vmatpush1.msra.mxu0 %v2300
    %2349 = vmatprep.subr.mxu0 0.0
    %2350 = vmatpush2.msra.mxu0 0.0
    %2351 = vmatprep.subr.mxu0 0.0
    %2352 = vmatpush2.msra.mxu0 0.0
    %2353 = vmatprep.subr.mxu0 0.0
    %2354 = vmatpush2.msra.mxu0 0.0
    %2355 = vmatprep.subr.mxu0 0.0
    %2356 = vmatpush2.msra.mxu0 0.0
    %2357 = vmatprep.subr.mxu0 0.0
    %2358 = vmatpush2.msra.mxu0 0.0
    %2359 = vmatprep.subr.mxu0 0.0
    %2360 = vmatpush2.msra.mxu0 0.0
    %2361 = vmatprep.subr.mxu0 0.0
    %2362 = vmatpush2.msra.mxu0 0.0
    %2363 = vmatprep.subr.mxu0 0.0
    %2364 = vmatpush2.msra.mxu0 0.0
    %2365 = vmatprep.subr.mxu0 0.0
    %2366 = vmatpush2.msra.mxu0 0.0
    %2367 = vmatprep.subr.mxu0 0.0
    %2368 = vmatpush2.msra.mxu0 0.0
    %2369 = vmatprep.subr.mxu0 0.0
    %2370 = vmatpush2.msra.mxu0 0.0
    %2371 = vmatprep.subr.mxu0 0.0
    %2372 = vmatpush2.msra.mxu0 0.0
    %2373 = vmatprep.subr.mxu0 0.0
    %2374 = vmatpush2.msra.mxu0 0.0
    %2375 = vmatprep.subr.mxu0 0.0
    %2376 = vmatpush2.msra.mxu0 0.0
    %2377 = vmatprep.subr.mxu0 0.0
    %2378 = vmatpush2.msra.mxu0 0.0
    %2379 = vmatprep.subr.mxu0 0.0
    %2380 = vmatpush2.msra.mxu0 0.0
    %2381 = vmatprep.mubr.f32.mxu0 0.0
    %2382 = vmatmul.mubr.f32.gmra.mxu0 %v2312
    %v2383 = vpop.f32.mrf.mxu0
    %v2384 = vadd.f32 %v2309, %v2383
    %v2385 = vpop.f32.mrf.mxu0
    %2386 = vmatprep.mubr.f32.mxu0 0.0
    %2387 = vmatmul.mubr.f32.gmra.mxu0 %v2315
    %v2388 = vpop.f32.mrf.mxu0
    %v2389 = vadd.f32 %v2309, %v2388
    %v2390 = vpop.f32.mrf.mxu0
    %2391 = vdwg.mxu0
    %v2392 = vld [vmem:[#allocation8] sm:$0xff]
    %v2393 = vld [vmem:[#allocation8 + $0x8] sm:$0xff]
    %v2394 = vld [vmem:[#allocation8 + $0x10] sm:$0xff]
    %v2395 = vld [vmem:[#allocation8 + $0x18] sm:$0xff]
    %v2396 = vmul.f32 %v2292, 0.35355338
    %v2398 = vsel %vm245, %v2396, 0
    %v2401 = vsel %vm245, %v2384, 0
    %2403 = vmatprep.subr.mxu0 0.0
    %2404 = vmatpush1.xpose.msra.mxu0 0.0
    %2405 = vmatprep.subr.mxu0 0.0
    %2406 = vmatpush1.xpose.msra.mxu0 0.0
    %2407 = vmatprep.subr.mxu0 0.0
    %2408 = vmatpush1.xpose.msra.mxu0 0.0
    %2409 = vmatprep.subr.mxu0 0.0
    %2410 = vmatpush1.xpose.msra.mxu0 0.0
    %2411 = vmatprep.subr.mxu0 0.0
    %2412 = vmatpush1.xpose.msra.mxu0 0.0
    %2413 = vmatprep.subr.mxu0 0.0
    %2414 = vmatpush1.xpose.msra.mxu0 0.0
    %2415 = vmatprep.subr.mxu0 0.0
    %2416 = vmatpush1.xpose.msra.mxu0 0.0
    %2417 = vmatprep.subr.mxu0 0.0
    %2418 = vmatpush1.xpose.msra.mxu0 0.0
    %2419 = vmatprep.subr.mxu0 0.0
    %2420 = vmatpush1.xpose.msra.mxu0 0.0
    %2421 = vmatprep.subr.mxu0 0.0
    %2422 = vmatpush1.xpose.msra.mxu0 0.0
    %2423 = vmatprep.subr.mxu0 0.0
    %2424 = vmatpush1.xpose.msra.mxu0 0.0
    %2425 = vmatprep.subr.mxu0 0.0
    %2426 = vmatpush1.xpose.msra.mxu0 0.0
    %2427 = vmatprep.subr.mxu0 0.0
    %2428 = vmatpush1.xpose.msra.mxu0 0.0
    %2429 = vmatprep.subr.mxu0 0.0
    %2430 = vmatpush1.xpose.msra.mxu0 0.0
    %2431 = vmatprep.subr.mxu0 0.0
    %2432 = vmatpush1.xpose.msra.mxu0 0.0
    %2433 = vmatprep.subr.mxu0 0.0
    %2434 = vmatpush1.xpose.msra.mxu0 %v2401
    %2435 = vmatprep.subr.mxu0 0.0
    %2436 = vmatpush2.xpose.msra.mxu0 0.0
    %2437 = vmatprep.subr.mxu0 0.0
    %2438 = vmatpush2.xpose.msra.mxu0 0.0
    %2439 = vmatprep.subr.mxu0 0.0
    %2440 = vmatpush2.xpose.msra.mxu0 0.0
    %2441 = vmatprep.subr.mxu0 0.0
    %2442 = vmatpush2.xpose.msra.mxu0 0.0
    %2443 = vmatprep.subr.mxu0 0.0
    %2444 = vmatpush2.xpose.msra.mxu0 0.0
    %2445 = vmatprep.subr.mxu0 0.0
    %2446 = vmatpush2.xpose.msra.mxu0 0.0
    %2447 = vmatprep.subr.mxu0 0.0
    %2448 = vmatpush2.xpose.msra.mxu0 0.0
    %2449 = vmatprep.subr.mxu0 0.0
    %2450 = vmatpush2.xpose.msra.mxu0 0.0
    %2451 = vmatprep.subr.mxu0 0.0
    %2452 = vmatpush2.xpose.msra.mxu0 0.0
    %2453 = vmatprep.subr.mxu0 0.0
    %2454 = vmatpush2.xpose.msra.mxu0 0.0
    %2455 = vmatprep.subr.mxu0 0.0
    %2456 = vmatpush2.xpose.msra.mxu0 0.0
    %2457 = vmatprep.subr.mxu0 0.0
    %2458 = vmatpush2.xpose.msra.mxu0 0.0
    %2459 = vmatprep.subr.mxu0 0.0
    %2460 = vmatpush2.xpose.msra.mxu0 0.0
    %2461 = vmatprep.subr.mxu0 0.0
    %2462 = vmatpush2.xpose.msra.mxu0 0.0
    %2463 = vmatprep.subr.mxu0 0.0
    %2464 = vmatpush2.xpose.msra.mxu0 0.0
    %2465 = vmatprep.subr.mxu0 0.0
    %2466 = vmatpush2.xpose.msra.mxu0 0.0
    %2467 = vmatprep.mubr.f32.mxu0 0.0
    %2468 = vmatmul.mubr.f32.gmra.mxu0 %v2398
    %v2469 = vpop.f32.mrf.mxu0
    %v2470 = vadd.f32 0.0, %v2469
    %v2471 = vpop.f32.mrf.mxu0
    %2472 = vdwg.mxu0
    %v2473 = vsel %vm245, %v2470, -inf
    %2474 = vmax.xlane.f32.xlu0 %v2473
    %v2475 = vpop.xlane.xlu0 %2474
    %v2476 = vsub.f32 %v2470, %v2475
    %v2477 = vmul.f32 %v2476, 1.442695
    %v2478 = vpow.pop %v2477
    %v2479 = vsel %vm245, %v2478, 0.0
    %2480 = vadd.xlane.f32.xlu0 %v2479
    %v2481 = vpop.xlane.xlu0 %2480
    %v2482 = vrcp.pop %v2481
    %v2483 = vmul.f32 %v2478, %v2482
    %2484 = vrot.lane.b32.xlu0 %v2384, 96
    %v2485 = vpop.permute.xlu0 %2484
    %v2488 = vsel %vm245, %v2483, 0
    %2490 = vmatprep.subr.mxu0 0.0
    %2491 = vmatpush1.msra.mxu0 0.0
    %2492 = vmatprep.subr.mxu0 0.0
    %2493 = vmatpush1.msra.mxu0 0.0
    %2494 = vmatprep.subr.mxu0 0.0
    %2495 = vmatpush1.msra.mxu0 0.0
    %2496 = vmatprep.subr.mxu0 0.0
    %2497 = vmatpush1.msra.mxu0 0.0
    %2498 = vmatprep.subr.mxu0 0.0
    %2499 = vmatpush1.msra.mxu0 0.0
    %2500 = vmatprep.subr.mxu0 0.0
    %2501 = vmatpush1.msra.mxu0 0.0
    %2502 = vmatprep.subr.mxu0 0.0
    %2503 = vmatpush1.msra.mxu0 0.0
    %2504 = vmatprep.subr.mxu0 0.0
    %2505 = vmatpush1.msra.mxu0 0.0
    %2506 = vmatprep.subr.mxu0 0.0
    %2507 = vmatpush1.msra.mxu0 0.0
    %2508 = vmatprep.subr.mxu0 0.0
    %2509 = vmatpush1.msra.mxu0 0.0
    %2510 = vmatprep.subr.mxu0 0.0
    %2511 = vmatpush1.msra.mxu0 0.0
    %2512 = vmatprep.subr.mxu0 0.0
    %2513 = vmatpush1.msra.mxu0 0.0
    %2514 = vmatprep.subr.mxu0 0.0
    %2515 = vmatpush1.msra.mxu0 0.0
    %2516 = vmatprep.subr.mxu0 0.0
    %2517 = vmatpush1.msra.mxu0 0.0
    %2518 = vmatprep.subr.mxu0 0.0
    %2519 = vmatpush1.msra.mxu0 0.0
    %2520 = vmatprep.subr.mxu0 0.0
    %2521 = vmatpush1.msra.mxu0 %v2485
    %2522 = vmatprep.subr.mxu0 0.0
    %2523 = vmatpush2.msra.mxu0 0.0
    %2524 = vmatprep.subr.mxu0 0.0
    %2525 = vmatpush2.msra.mxu0 0.0
    %2526 = vmatprep.subr.mxu0 0.0
    %2527 = vmatpush2.msra.mxu0 0.0
    %2528 = vmatprep.subr.mxu0 0.0
    %2529 = vmatpush2.msra.mxu0 0.0
    %2530 = vmatprep.subr.mxu0 0.0
    %2531 = vmatpush2.msra.mxu0 0.0
    %2532 = vmatprep.subr.mxu0 0.0
    %2533 = vmatpush2.msra.mxu0 0.0
    %2534 = vmatprep.subr.mxu0 0.0
    %2535 = vmatpush2.msra.mxu0 0.0
    %2536 = vmatprep.subr.mxu0 0.0
    %2537 = vmatpush2.msra.mxu0 0.0
    %2538 = vmatprep.subr.mxu0 0.0
    %2539 = vmatpush2.msra.mxu0 0.0
    %2540 = vmatprep.subr.mxu0 0.0
    %2541 = vmatpush2.msra.mxu0 0.0
    %2542 = vmatprep.subr.mxu0 0.0
    %2543 = vmatpush2.msra.mxu0 0.0
    %2544 = vmatprep.subr.mxu0 0.0
    %2545 = vmatpush2.msra.mxu0 0.0
    %2546 = vmatprep.subr.mxu0 0.0
    %2547 = vmatpush2.msra.mxu0 0.0
    %2548 = vmatprep.subr.mxu0 0.0
    %2549 = vmatpush2.msra.mxu0 0.0
    %2550 = vmatprep.subr.mxu0 0.0
    %2551 = vmatpush2.msra.mxu0 0.0
    %2552 = vmatprep.subr.mxu0 0.0
    %2553 = vmatpush2.msra.mxu0 0.0
    %2554 = vmatprep.mubr.f32.mxu0 0.0
    %2555 = vmatmul.mubr.f32.gmra.mxu0 %v2488
    %v2556 = vpop.f32.mrf.mxu0
    %v2557 = vadd.f32 0.0, %v2556
    %v2558 = vpop.f32.mrf.mxu0
    %2559 = vdwg.mxu0
    %2560 = vrot.lane.b32.xlu0 %v2396, 120
    %v2561 = vpop.permute.xlu0 %2560
    %2562 = vrot.lane.b32.xlu0 %v2384, 120
    %v2563 = vpop.permute.xlu0 %2562
    %v2564 = vsel %vm245, %v2561, 0
    %v2566 = vsel %vm245, %v2563, 0
    %2568 = vmatprep.subr.mxu0 0.0
    %2569 = vmatpush1.xpose.msra.mxu0 0.0
    %2570 = vmatprep.subr.mxu0 0.0
    %2571 = vmatpush1.xpose.msra.mxu0 0.0
    %2572 = vmatprep.subr.mxu0 0.0
    %2573 = vmatpush1.xpose.msra.mxu0 0.0
    %2574 = vmatprep.subr.mxu0 0.0
    %2575 = vmatpush1.xpose.msra.mxu0 0.0
    %2576 = vmatprep.subr.mxu0 0.0
    %2577 = vmatpush1.xpose.msra.mxu0 0.0
    %2578 = vmatprep.subr.mxu0 0.0
    %2579 = vmatpush1.xpose.msra.mxu0 0.0
    %2580 = vmatprep.subr.mxu0 0.0
    %2581 = vmatpush1.xpose.msra.mxu0 0.0
    %2582 = vmatprep.subr.mxu0 0.0
    %2583 = vmatpush1.xpose.msra.mxu0 0.0
    %2584 = vmatprep.subr.mxu0 0.0
    %2585 = vmatpush1.xpose.msra.mxu0 0.0
    %2586 = vmatprep.subr.mxu0 0.0
    %2587 = vmatpush1.xpose.msra.mxu0 0.0
    %2588 = vmatprep.subr.mxu0 0.0
    %2589 = vmatpush1.xpose.msra.mxu0 0.0
    %2590 = vmatprep.subr.mxu0 0.0
    %2591 = vmatpush1.xpose.msra.mxu0 0.0
    %2592 = vmatprep.subr.mxu0 0.0
    %2593 = vmatpush1.xpose.msra.mxu0 0.0
    %2594 = vmatprep.subr.mxu0 0.0
    %2595 = vmatpush1.xpose.msra.mxu0 0.0
    %2596 = vmatprep.subr.mxu0 0.0
    %2597 = vmatpush1.xpose.msra.mxu0 0.0
    %2598 = vmatprep.subr.mxu0 0.0
    %2599 = vmatpush1.xpose.msra.mxu0 %v2566
    %2600 = vmatprep.subr.mxu0 0.0
    %2601 = vmatpush2.xpose.msra.mxu0 0.0
    %2602 = vmatprep.subr.mxu0 0.0
    %2603 = vmatpush2.xpose.msra.mxu0 0.0
    %2604 = vmatprep.subr.mxu0 0.0
    %2605 = vmatpush2.xpose.msra.mxu0 0.0
    %2606 = vmatprep.subr.mxu0 0.0
    %2607 = vmatpush2.xpose.msra.mxu0 0.0
    %2608 = vmatprep.subr.mxu0 0.0
    %2609 = vmatpush2.xpose.msra.mxu0 0.0
    %2610 = vmatprep.subr.mxu0 0.0
    %2611 = vmatpush2.xpose.msra.mxu0 0.0
    %2612 = vmatprep.subr.mxu0 0.0
    %2613 = vmatpush2.xpose.msra.mxu0 0.0
    %2614 = vmatprep.subr.mxu0 0.0
    %2615 = vmatpush2.xpose.msra.mxu0 0.0
    %2616 = vmatprep.subr.mxu0 0.0
    %2617 = vmatpush2.xpose.msra.mxu0 0.0
    %2618 = vmatprep.subr.mxu0 0.0
    %2619 = vmatpush2.xpose.msra.mxu0 0.0
    %2620 = vmatprep.subr.mxu0 0.0
    %2621 = vmatpush2.xpose.msra.mxu0 0.0
    %2622 = vmatprep.subr.mxu0 0.0
    %2623 = vmatpush2.xpose.msra.mxu0 0.0
    %2624 = vmatprep.subr.mxu0 0.0
    %2625 = vmatpush2.xpose.msra.mxu0 0.0
    %2626 = vmatprep.subr.mxu0 0.0
    %2627 = vmatpush2.xpose.msra.mxu0 0.0
    %2628 = vmatprep.subr.mxu0 0.0
    %2629 = vmatpush2.xpose.msra.mxu0 0.0
    %2630 = vmatprep.subr.mxu0 0.0
    %2631 = vmatpush2.xpose.msra.mxu0 0.0
    %2632 = vmatprep.mubr.f32.mxu0 0.0
    %2633 = vmatmul.mubr.f32.gmra.mxu0 %v2564
    %v2634 = vpop.f32.mrf.mxu0
    %v2635 = vadd.f32 0.0, %v2634
    %v2636 = vpop.f32.mrf.mxu0
    %2637 = vdwg.mxu0
    %v2638 = vsel %vm245, %v2635, -inf
    %2639 = vmax.xlane.f32.xlu0 %v2638
    %v2640 = vpop.xlane.xlu0 %2639
    %v2641 = vsub.f32 %v2635, %v2640
    %v2642 = vmul.f32 %v2641, 1.442695
    %v2643 = vpow.pop %v2642
    %v2644 = vsel %vm245, %v2643, 0.0
    %2645 = vadd.xlane.f32.xlu0 %v2644
    %v2646 = vpop.xlane.xlu0 %2645
    %v2647 = vrcp.pop %v2646
    %v2648 = vmul.f32 %v2643, %v2647
    %2649 = vrot.lane.b32.xlu0 %v2384, 88
    %v2650 = vpop.permute.xlu0 %2649
    %v2653 = vsel %vm245, %v2648, 0
    %2655 = vmatprep.subr.mxu0 0.0
    %2656 = vmatpush1.msra.mxu0 0.0
    %2657 = vmatprep.subr.mxu0 0.0
    %2658 = vmatpush1.msra.mxu0 0.0
    %2659 = vmatprep.subr.mxu0 0.0
    %2660 = vmatpush1.msra.mxu0 0.0
    %2661 = vmatprep.subr.mxu0 0.0
    %2662 = vmatpush1.msra.mxu0 0.0
    %2663 = vmatprep.subr.mxu0 0.0
    %2664 = vmatpush1.msra.mxu0 0.0
    %2665 = vmatprep.subr.mxu0 0.0
    %2666 = vmatpush1.msra.mxu0 0.0
    %2667 = vmatprep.subr.mxu0 0.0
    %2668 = vmatpush1.msra.mxu0 0.0
    %2669 = vmatprep.subr.mxu0 0.0
    %2670 = vmatpush1.msra.mxu0 0.0
    %2671 = vmatprep.subr.mxu0 0.0
    %2672 = vmatpush1.msra.mxu0 0.0
    %2673 = vmatprep.subr.mxu0 0.0
    %2674 = vmatpush1.msra.mxu0 0.0
    %2675 = vmatprep.subr.mxu0 0.0
    %2676 = vmatpush1.msra.mxu0 0.0
    %2677 = vmatprep.subr.mxu0 0.0
    %2678 = vmatpush1.msra.mxu0 0.0
    %2679 = vmatprep.subr.mxu0 0.0
    %2680 = vmatpush1.msra.mxu0 0.0
    %2681 = vmatprep.subr.mxu0 0.0
    %2682 = vmatpush1.msra.mxu0 0.0
    %2683 = vmatprep.subr.mxu0 0.0
    %2684 = vmatpush1.msra.mxu0 0.0
    %2685 = vmatprep.subr.mxu0 0.0
    %2686 = vmatpush1.msra.mxu0 %v2650
    %2687 = vmatprep.subr.mxu0 0.0
    %2688 = vmatpush2.msra.mxu0 0.0
    %2689 = vmatprep.subr.mxu0 0.0
    %2690 = vmatpush2.msra.mxu0 0.0
    %2691 = vmatprep.subr.mxu0 0.0
    %2692 = vmatpush2.msra.mxu0 0.0
    %2693 = vmatprep.subr.mxu0 0.0
    %2694 = vmatpush2.msra.mxu0 0.0
    %2695 = vmatprep.subr.mxu0 0.0
    %2696 = vmatpush2.msra.mxu0 0.0
    %2697 = vmatprep.subr.mxu0 0.0
    %2698 = vmatpush2.msra.mxu0 0.0
    %2699 = vmatprep.subr.mxu0 0.0
    %2700 = vmatpush2.msra.mxu0 0.0
    %2701 = vmatprep.subr.mxu0 0.0
    %2702 = vmatpush2.msra.mxu0 0.0
    %2703 = vmatprep.subr.mxu0 0.0
    %2704 = vmatpush2.msra.mxu0 0.0
    %2705 = vmatprep.subr.mxu0 0.0
    %2706 = vmatpush2.msra.mxu0 0.0
    %2707 = vmatprep.subr.mxu0 0.0
    %2708 = vmatpush2.msra.mxu0 0.0
    %2709 = vmatprep.subr.mxu0 0.0
    %2710 = vmatpush2.msra.mxu0 0.0
    %2711 = vmatprep.subr.mxu0 0.0
    %2712 = vmatpush2.msra.mxu0 0.0
    %2713 = vmatprep.subr.mxu0 0.0
    %2714 = vmatpush2.msra.mxu0 0.0
    %2715 = vmatprep.subr.mxu0 0.0
    %2716 = vmatpush2.msra.mxu0 0.0
    %2717 = vmatprep.subr.mxu0 0.0
    %2718 = vmatpush2.msra.mxu0 0.0
    %2719 = vmatprep.mubr.f32.mxu0 0.0
    %2720 = vmatmul.mubr.f32.gmra.mxu0 %v2653
    %v2721 = vpop.f32.mrf.mxu0
    %v2722 = vadd.f32 0.0, %v2721
    %v2723 = vpop.f32.mrf.mxu0
    %2724 = vdwg.mxu0
    %v2726 = vsel %vm245, %v2722, 0
    %2728 = vmatprep.subr.mxu0 0.0
    %2729 = vmatpush1.msra.mxu0 0.0
    %2730 = vmatprep.subr.mxu0 0.0
    %2731 = vmatpush1.msra.mxu0 0.0
    %2732 = vmatprep.subr.mxu0 0.0
    %2733 = vmatpush1.msra.mxu0 0.0
    %2734 = vmatprep.subr.mxu0 0.0
    %2735 = vmatpush1.msra.mxu0 0.0
    %2736 = vmatprep.subr.mxu0 0.0
    %2737 = vmatpush1.msra.mxu0 0.0
    %2738 = vmatprep.subr.mxu0 0.0
    %2739 = vmatpush1.msra.mxu0 0.0
    %2740 = vmatprep.subr.mxu0 0.0
    %2741 = vmatpush1.msra.mxu0 0.0
    %2742 = vmatprep.subr.mxu0 0.0
    %2743 = vmatpush1.msra.mxu0 0.0
    %2744 = vmatprep.subr.mxu0 0.0
    %2745 = vmatpush1.msra.mxu0 0.0
    %2746 = vmatprep.subr.mxu0 0.0
    %2747 = vmatpush1.msra.mxu0 0.0
    %2748 = vmatprep.subr.mxu0 0.0
    %2749 = vmatpush1.msra.mxu0 0.0
    %2750 = vmatprep.subr.mxu0 0.0
    %2751 = vmatpush1.msra.mxu0 0.0
    %2752 = vmatprep.subr.mxu0 0.0
    %2753 = vmatpush1.msra.mxu0 0.0
    %2754 = vmatprep.subr.mxu0 0.0
    %2755 = vmatpush1.msra.mxu0 0.0
    %2756 = vmatprep.subr.mxu0 0.0
    %2757 = vmatpush1.msra.mxu0 0.0
    %2758 = vmatprep.subr.mxu0 0.0
    %2759 = vmatpush1.msra.mxu0 %v2393
    %2760 = vmatprep.subr.mxu0 0.0
    %2761 = vmatpush2.msra.mxu0 0.0
    %2762 = vmatprep.subr.mxu0 0.0
    %2763 = vmatpush2.msra.mxu0 0.0
    %2764 = vmatprep.subr.mxu0 0.0
    %2765 = vmatpush2.msra.mxu0 0.0
    %2766 = vmatprep.subr.mxu0 0.0
    %2767 = vmatpush2.msra.mxu0 0.0
    %2768 = vmatprep.subr.mxu0 0.0
    %2769 = vmatpush2.msra.mxu0 0.0
    %2770 = vmatprep.subr.mxu0 0.0
    %2771 = vmatpush2.msra.mxu0 0.0
    %2772 = vmatprep.subr.mxu0 0.0
    %2773 = vmatpush2.msra.mxu0 0.0
    %2774 = vmatprep.subr.mxu0 0.0
    %2775 = vmatpush2.msra.mxu0 0.0
    %2776 = vmatprep.subr.mxu0 0.0
    %2777 = vmatpush2.msra.mxu0 0.0
    %2778 = vmatprep.subr.mxu0 0.0
    %2779 = vmatpush2.msra.mxu0 0.0
    %2780 = vmatprep.subr.mxu0 0.0
    %2781 = vmatpush2.msra.mxu0 0.0
    %2782 = vmatprep.subr.mxu0 0.0
    %2783 = vmatpush2.msra.mxu0 0.0
    %2784 = vmatprep.subr.mxu0 0.0
    %2785 = vmatpush2.msra.mxu0 0.0
    %2786 = vmatprep.subr.mxu0 0.0
    %2787 = vmatpush2.msra.mxu0 0.0
    %2788 = vmatprep.subr.mxu0 0.0
    %2789 = vmatpush2.msra.mxu0 0.0
    %2790 = vmatprep.subr.mxu0 0.0
    %2791 = vmatpush2.msra.mxu0 0.0
    %2792 = vmatprep.mubr.f32.mxu0 0.0
    %2793 = vmatmul.mubr.f32.gmra.mxu0 %v2726
    %v2794 = vpop.f32.mrf.mxu0
    %v2795 = vadd.f32 0.0, %v2794
    %v2796 = vpop.f32.mrf.mxu0
    %2797 = vdwg.mxu0
    %v2799 = vsel %vm245, %v2557, 0
    %2801 = vmatprep.subr.mxu0 0.0
    %2802 = vmatpush1.msra.mxu0 0.0
    %2803 = vmatprep.subr.mxu0 0.0
    %2804 = vmatpush1.msra.mxu0 0.0
    %2805 = vmatprep.subr.mxu0 0.0
    %2806 = vmatpush1.msra.mxu0 0.0
    %2807 = vmatprep.subr.mxu0 0.0
    %2808 = vmatpush1.msra.mxu0 0.0
    %2809 = vmatprep.subr.mxu0 0.0
    %2810 = vmatpush1.msra.mxu0 0.0
    %2811 = vmatprep.subr.mxu0 0.0
    %2812 = vmatpush1.msra.mxu0 0.0
    %2813 = vmatprep.subr.mxu0 0.0
    %2814 = vmatpush1.msra.mxu0 0.0
    %2815 = vmatprep.subr.mxu0 0.0
    %2816 = vmatpush1.msra.mxu0 0.0
    %2817 = vmatprep.subr.mxu0 0.0
    %2818 = vmatpush1.msra.mxu0 0.0
    %2819 = vmatprep.subr.mxu0 0.0
    %2820 = vmatpush1.msra.mxu0 0.0
    %2821 = vmatprep.subr.mxu0 0.0
    %2822 = vmatpush1.msra.mxu0 0.0
    %2823 = vmatprep.subr.mxu0 0.0
    %2824 = vmatpush1.msra.mxu0 0.0
    %2825 = vmatprep.subr.mxu0 0.0
    %2826 = vmatpush1.msra.mxu0 0.0
    %2827 = vmatprep.subr.mxu0 0.0
    %2828 = vmatpush1.msra.mxu0 0.0
    %2829 = vmatprep.subr.mxu0 0.0
    %2830 = vmatpush1.msra.mxu0 0.0
    %2831 = vmatprep.subr.mxu0 0.0
    %2832 = vmatpush1.msra.mxu0 %v2392
    %2833 = vmatprep.subr.mxu0 0.0
    %2834 = vmatpush2.msra.mxu0 0.0
    %2835 = vmatprep.subr.mxu0 0.0
    %2836 = vmatpush2.msra.mxu0 0.0
    %2837 = vmatprep.subr.mxu0 0.0
    %2838 = vmatpush2.msra.mxu0 0.0
    %2839 = vmatprep.subr.mxu0 0.0
    %2840 = vmatpush2.msra.mxu0 0.0
    %2841 = vmatprep.subr.mxu0 0.0
    %2842 = vmatpush2.msra.mxu0 0.0
    %2843 = vmatprep.subr.mxu0 0.0
    %2844 = vmatpush2.msra.mxu0 0.0
    %2845 = vmatprep.subr.mxu0 0.0
    %2846 = vmatpush2.msra.mxu0 0.0
    %2847 = vmatprep.subr.mxu0 0.0
    %2848 = vmatpush2.msra.mxu0 0.0
    %2849 = vmatprep.subr.mxu0 0.0
    %2850 = vmatpush2.msra.mxu0 0.0
    %2851 = vmatprep.subr.mxu0 0.0
    %2852 = vmatpush2.msra.mxu0 0.0
    %2853 = vmatprep.subr.mxu0 0.0
    %2854 = vmatpush2.msra.mxu0 0.0
    %2855 = vmatprep.subr.mxu0 0.0
    %2856 = vmatpush2.msra.mxu0 0.0
    %2857 = vmatprep.subr.mxu0 0.0
    %2858 = vmatpush2.msra.mxu0 0.0
    %2859 = vmatprep.subr.mxu0 0.0
    %2860 = vmatpush2.msra.mxu0 0.0
    %2861 = vmatprep.subr.mxu0 0.0
    %2862 = vmatpush2.msra.mxu0 0.0
    %2863 = vmatprep.subr.mxu0 0.0
    %2864 = vmatpush2.msra.mxu0 0.0
    %2865 = vmatprep.mubr.f32.mxu0 0.0
    %2866 = vmatmul.mubr.f32.gmra.mxu0 %v2799
    %v2867 = vpop.f32.mrf.mxu0
    %v2868 = vadd.f32 %v2795, %v2867
    %v2869 = vpop.f32.mrf.mxu0
    %2870 = vdwg.mxu0
    %2871 = vrot.lane.b32.xlu0 %v2396, 112
    %v2872 = vpop.permute.xlu0 %2871
    %2873 = vrot.lane.b32.xlu0 %v2384, 112
    %v2874 = vpop.permute.xlu0 %2873
    %v2875 = vsel %vm245, %v2872, 0
    %v2877 = vsel %vm245, %v2874, 0
    %2879 = vmatprep.subr.mxu0 0.0
    %2880 = vmatpush1.xpose.msra.mxu0 0.0
    %2881 = vmatprep.subr.mxu0 0.0
    %2882 = vmatpush1.xpose.msra.mxu0 0.0
    %2883 = vmatprep.subr.mxu0 0.0
    %2884 = vmatpush1.xpose.msra.mxu0 0.0
    %2885 = vmatprep.subr.mxu0 0.0
    %2886 = vmatpush1.xpose.msra.mxu0 0.0
    %2887 = vmatprep.subr.mxu0 0.0
    %2888 = vmatpush1.xpose.msra.mxu0 0.0
    %2889 = vmatprep.subr.mxu0 0.0
    %2890 = vmatpush1.xpose.msra.mxu0 0.0
    %2891 = vmatprep.subr.mxu0 0.0
    %2892 = vmatpush1.xpose.msra.mxu0 0.0
    %2893 = vmatprep.subr.mxu0 0.0
    %2894 = vmatpush1.xpose.msra.mxu0 0.0
    %2895 = vmatprep.subr.mxu0 0.0
    %2896 = vmatpush1.xpose.msra.mxu0 0.0
    %2897 = vmatprep.subr.mxu0 0.0
    %2898 = vmatpush1.xpose.msra.mxu0 0.0
    %2899 = vmatprep.subr.mxu0 0.0
    %2900 = vmatpush1.xpose.msra.mxu0 0.0
    %2901 = vmatprep.subr.mxu0 0.0
    %2902 = vmatpush1.xpose.msra.mxu0 0.0
    %2903 = vmatprep.subr.mxu0 0.0
    %2904 = vmatpush1.xpose.msra.mxu0 0.0
    %2905 = vmatprep.subr.mxu0 0.0
    %2906 = vmatpush1.xpose.msra.mxu0 0.0
    %2907 = vmatprep.subr.mxu0 0.0
    %2908 = vmatpush1.xpose.msra.mxu0 0.0
    %2909 = vmatprep.subr.mxu0 0.0
    %2910 = vmatpush1.xpose.msra.mxu0 %v2877
    %2911 = vmatprep.subr.mxu0 0.0
    %2912 = vmatpush2.xpose.msra.mxu0 0.0
    %2913 = vmatprep.subr.mxu0 0.0
    %2914 = vmatpush2.xpose.msra.mxu0 0.0
    %2915 = vmatprep.subr.mxu0 0.0
    %2916 = vmatpush2.xpose.msra.mxu0 0.0
    %2917 = vmatprep.subr.mxu0 0.0
    %2918 = vmatpush2.xpose.msra.mxu0 0.0
    %2919 = vmatprep.subr.mxu0 0.0
    %2920 = vmatpush2.xpose.msra.mxu0 0.0
    %2921 = vmatprep.subr.mxu0 0.0
    %2922 = vmatpush2.xpose.msra.mxu0 0.0
    %2923 = vmatprep.subr.mxu0 0.0
    %2924 = vmatpush2.xpose.msra.mxu0 0.0
    %2925 = vmatprep.subr.mxu0 0.0
    %2926 = vmatpush2.xpose.msra.mxu0 0.0
    %2927 = vmatprep.subr.mxu0 0.0
    %2928 = vmatpush2.xpose.msra.mxu0 0.0
    %2929 = vmatprep.subr.mxu0 0.0
    %2930 = vmatpush2.xpose.msra.mxu0 0.0
    %2931 = vmatprep.subr.mxu0 0.0
    %2932 = vmatpush2.xpose.msra.mxu0 0.0
    %2933 = vmatprep.subr.mxu0 0.0
    %2934 = vmatpush2.xpose.msra.mxu0 0.0
    %2935 = vmatprep.subr.mxu0 0.0
    %2936 = vmatpush2.xpose.msra.mxu0 0.0
    %2937 = vmatprep.subr.mxu0 0.0
    %2938 = vmatpush2.xpose.msra.mxu0 0.0
    %2939 = vmatprep.subr.mxu0 0.0
    %2940 = vmatpush2.xpose.msra.mxu0 0.0
    %2941 = vmatprep.subr.mxu0 0.0
    %2942 = vmatpush2.xpose.msra.mxu0 0.0
    %2943 = vmatprep.mubr.f32.mxu0 0.0
    %2944 = vmatmul.mubr.f32.gmra.mxu0 %v2875
    %v2945 = vpop.f32.mrf.mxu0
    %v2946 = vadd.f32 0.0, %v2945
    %v2947 = vpop.f32.mrf.mxu0
    %2948 = vdwg.mxu0
    %v2949 = vsel %vm245, %v2946, -inf
    %2950 = vmax.xlane.f32.xlu0 %v2949
    %v2951 = vpop.xlane.xlu0 %2950
    %v2952 = vsub.f32 %v2946, %v2951
    %v2953 = vmul.f32 %v2952, 1.442695
    %v2954 = vpow.pop %v2953
    %v2955 = vsel %vm245, %v2954, 0.0
    %2956 = vadd.xlane.f32.xlu0 %v2955
    %v2957 = vpop.xlane.xlu0 %2956
    %v2958 = vrcp.pop %v2957
    %v2959 = vmul.f32 %v2954, %v2958
    %2960 = vrot.lane.b32.xlu0 %v2384, 80
    %v2961 = vpop.permute.xlu0 %2960
    %v2964 = vsel %vm245, %v2959, 0
    %2966 = vmatprep.subr.mxu0 0.0
    %2967 = vmatpush1.msra.mxu0 0.0
    %2968 = vmatprep.subr.mxu0 0.0
    %2969 = vmatpush1.msra.mxu0 0.0
    %2970 = vmatprep.subr.mxu0 0.0
    %2971 = vmatpush1.msra.mxu0 0.0
    %2972 = vmatprep.subr.mxu0 0.0
    %2973 = vmatpush1.msra.mxu0 0.0
    %2974 = vmatprep.subr.mxu0 0.0
    %2975 = vmatpush1.msra.mxu0 0.0
    %2976 = vmatprep.subr.mxu0 0.0
    %2977 = vmatpush1.msra.mxu0 0.0
    %2978 = vmatprep.subr.mxu0 0.0
    %2979 = vmatpush1.msra.mxu0 0.0
    %2980 = vmatprep.subr.mxu0 0.0
    %2981 = vmatpush1.msra.mxu0 0.0
    %2982 = vmatprep.subr.mxu0 0.0
    %2983 = vmatpush1.msra.mxu0 0.0
    %2984 = vmatprep.subr.mxu0 0.0
    %2985 = vmatpush1.msra.mxu0 0.0
    %2986 = vmatprep.subr.mxu0 0.0
    %2987 = vmatpush1.msra.mxu0 0.0
    %2988 = vmatprep.subr.mxu0 0.0
    %2989 = vmatpush1.msra.mxu0 0.0
    %2990 = vmatprep.subr.mxu0 0.0
    %2991 = vmatpush1.msra.mxu0 0.0
    %2992 = vmatprep.subr.mxu0 0.0
    %2993 = vmatpush1.msra.mxu0 0.0
    %2994 = vmatprep.subr.mxu0 0.0
    %2995 = vmatpush1.msra.mxu0 0.0
    %2996 = vmatprep.subr.mxu0 0.0
    %2997 = vmatpush1.msra.mxu0 %v2961
    %2998 = vmatprep.subr.mxu0 0.0
    %2999 = vmatpush2.msra.mxu0 0.0
    %3000 = vmatprep.subr.mxu0 0.0
    %3001 = vmatpush2.msra.mxu0 0.0
    %3002 = vmatprep.subr.mxu0 0.0
    %3003 = vmatpush2.msra.mxu0 0.0
    %3004 = vmatprep.subr.mxu0 0.0
    %3005 = vmatpush2.msra.mxu0 0.0
    %3006 = vmatprep.subr.mxu0 0.0
    %3007 = vmatpush2.msra.mxu0 0.0
    %3008 = vmatprep.subr.mxu0 0.0
    %3009 = vmatpush2.msra.mxu0 0.0
    %3010 = vmatprep.subr.mxu0 0.0
    %3011 = vmatpush2.msra.mxu0 0.0
    %3012 = vmatprep.subr.mxu0 0.0
    %3013 = vmatpush2.msra.mxu0 0.0
    %3014 = vmatprep.subr.mxu0 0.0
    %3015 = vmatpush2.msra.mxu0 0.0
    %3016 = vmatprep.subr.mxu0 0.0
    %3017 = vmatpush2.msra.mxu0 0.0
    %3018 = vmatprep.subr.mxu0 0.0
    %3019 = vmatpush2.msra.mxu0 0.0
    %3020 = vmatprep.subr.mxu0 0.0
    %3021 = vmatpush2.msra.mxu0 0.0
    %3022 = vmatprep.subr.mxu0 0.0
    %3023 = vmatpush2.msra.mxu0 0.0
    %3024 = vmatprep.subr.mxu0 0.0
    %3025 = vmatpush2.msra.mxu0 0.0
    %3026 = vmatprep.subr.mxu0 0.0
    %3027 = vmatpush2.msra.mxu0 0.0
    %3028 = vmatprep.subr.mxu0 0.0
    %3029 = vmatpush2.msra.mxu0 0.0
    %3030 = vmatprep.mubr.f32.mxu0 0.0
    %3031 = vmatmul.mubr.f32.gmra.mxu0 %v2964
    %v3032 = vpop.f32.mrf.mxu0
    %v3033 = vadd.f32 0.0, %v3032
    %v3034 = vpop.f32.mrf.mxu0
    %3035 = vdwg.mxu0
    %v3037 = vsel %vm245, %v3033, 0
    %3039 = vmatprep.subr.mxu0 0.0
    %3040 = vmatpush1.msra.mxu0 0.0
    %3041 = vmatprep.subr.mxu0 0.0
    %3042 = vmatpush1.msra.mxu0 0.0
    %3043 = vmatprep.subr.mxu0 0.0
    %3044 = vmatpush1.msra.mxu0 0.0
    %3045 = vmatprep.subr.mxu0 0.0
    %3046 = vmatpush1.msra.mxu0 0.0
    %3047 = vmatprep.subr.mxu0 0.0
    %3048 = vmatpush1.msra.mxu0 0.0
    %3049 = vmatprep.subr.mxu0 0.0
    %3050 = vmatpush1.msra.mxu0 0.0
    %3051 = vmatprep.subr.mxu0 0.0
    %3052 = vmatpush1.msra.mxu0 0.0
    %3053 = vmatprep.subr.mxu0 0.0
    %3054 = vmatpush1.msra.mxu0 0.0
    %3055 = vmatprep.subr.mxu0 0.0
    %3056 = vmatpush1.msra.mxu0 0.0
    %3057 = vmatprep.subr.mxu0 0.0
    %3058 = vmatpush1.msra.mxu0 0.0
    %3059 = vmatprep.subr.mxu0 0.0
    %3060 = vmatpush1.msra.mxu0 0.0
    %3061 = vmatprep.subr.mxu0 0.0
    %3062 = vmatpush1.msra.mxu0 0.0
    %3063 = vmatprep.subr.mxu0 0.0
    %3064 = vmatpush1.msra.mxu0 0.0
    %3065 = vmatprep.subr.mxu0 0.0
    %3066 = vmatpush1.msra.mxu0 0.0
    %3067 = vmatprep.subr.mxu0 0.0
    %3068 = vmatpush1.msra.mxu0 0.0
    %3069 = vmatprep.subr.mxu0 0.0
    %3070 = vmatpush1.msra.mxu0 %v2394
    %3071 = vmatprep.subr.mxu0 0.0
    %3072 = vmatpush2.msra.mxu0 0.0
    %3073 = vmatprep.subr.mxu0 0.0
    %3074 = vmatpush2.msra.mxu0 0.0
    %3075 = vmatprep.subr.mxu0 0.0
    %3076 = vmatpush2.msra.mxu0 0.0
    %3077 = vmatprep.subr.mxu0 0.0
    %3078 = vmatpush2.msra.mxu0 0.0
    %3079 = vmatprep.subr.mxu0 0.0
    %3080 = vmatpush2.msra.mxu0 0.0
    %3081 = vmatprep.subr.mxu0 0.0
    %3082 = vmatpush2.msra.mxu0 0.0
    %3083 = vmatprep.subr.mxu0 0.0
    %3084 = vmatpush2.msra.mxu0 0.0
    %3085 = vmatprep.subr.mxu0 0.0
    %3086 = vmatpush2.msra.mxu0 0.0
    %3087 = vmatprep.subr.mxu0 0.0
    %3088 = vmatpush2.msra.mxu0 0.0
    %3089 = vmatprep.subr.mxu0 0.0
    %3090 = vmatpush2.msra.mxu0 0.0
    %3091 = vmatprep.subr.mxu0 0.0
    %3092 = vmatpush2.msra.mxu0 0.0
    %3093 = vmatprep.subr.mxu0 0.0
    %3094 = vmatpush2.msra.mxu0 0.0
    %3095 = vmatprep.subr.mxu0 0.0
    %3096 = vmatpush2.msra.mxu0 0.0
    %3097 = vmatprep.subr.mxu0 0.0
    %3098 = vmatpush2.msra.mxu0 0.0
    %3099 = vmatprep.subr.mxu0 0.0
    %3100 = vmatpush2.msra.mxu0 0.0
    %3101 = vmatprep.subr.mxu0 0.0
    %3102 = vmatpush2.msra.mxu0 0.0
    %3103 = vmatprep.mubr.f32.mxu0 0.0
    %3104 = vmatmul.mubr.f32.gmra.mxu0 %v3037
    %v3105 = vpop.f32.mrf.mxu0
    %v3106 = vadd.f32 0.0, %v3105
    %v3107 = vpop.f32.mrf.mxu0
    %3108 = vdwg.mxu0
    %v3109 = vadd.f32 %v2868, %v3106
    %3110 = vrot.lane.b32.xlu0 %v2396, 104
    %v3111 = vpop.permute.xlu0 %3110
    %3112 = vrot.lane.b32.xlu0 %v2384, 104
    %v3113 = vpop.permute.xlu0 %3112
    %v3114 = vsel %vm245, %v3111, 0
    %v3116 = vsel %vm245, %v3113, 0
    %3118 = vmatprep.subr.mxu0 0.0
    %3119 = vmatpush1.xpose.msra.mxu0 0.0
    %3120 = vmatprep.subr.mxu0 0.0
    %3121 = vmatpush1.xpose.msra.mxu0 0.0
    %3122 = vmatprep.subr.mxu0 0.0
    %3123 = vmatpush1.xpose.msra.mxu0 0.0
    %3124 = vmatprep.subr.mxu0 0.0
    %3125 = vmatpush1.xpose.msra.mxu0 0.0
    %3126 = vmatprep.subr.mxu0 0.0
    %3127 = vmatpush1.xpose.msra.mxu0 0.0
    %3128 = vmatprep.subr.mxu0 0.0
    %3129 = vmatpush1.xpose.msra.mxu0 0.0
    %3130 = vmatprep.subr.mxu0 0.0
    %3131 = vmatpush1.xpose.msra.mxu0 0.0
    %3132 = vmatprep.subr.mxu0 0.0
    %3133 = vmatpush1.xpose.msra.mxu0 0.0
    %3134 = vmatprep.subr.mxu0 0.0
    %3135 = vmatpush1.xpose.msra.mxu0 0.0
    %3136 = vmatprep.subr.mxu0 0.0
    %3137 = vmatpush1.xpose.msra.mxu0 0.0
    %3138 = vmatprep.subr.mxu0 0.0
    %3139 = vmatpush1.xpose.msra.mxu0 0.0
    %3140 = vmatprep.subr.mxu0 0.0
    %3141 = vmatpush1.xpose.msra.mxu0 0.0
    %3142 = vmatprep.subr.mxu0 0.0
    %3143 = vmatpush1.xpose.msra.mxu0 0.0
    %3144 = vmatprep.subr.mxu0 0.0
    %3145 = vmatpush1.xpose.msra.mxu0 0.0
    %3146 = vmatprep.subr.mxu0 0.0
    %3147 = vmatpush1.xpose.msra.mxu0 0.0
    %3148 = vmatprep.subr.mxu0 0.0
    %3149 = vmatpush1.xpose.msra.mxu0 %v3116
    %3150 = vmatprep.subr.mxu0 0.0
    %3151 = vmatpush2.xpose.msra.mxu0 0.0
    %3152 = vmatprep.subr.mxu0 0.0
    %3153 = vmatpush2.xpose.msra.mxu0 0.0
    %3154 = vmatprep.subr.mxu0 0.0
    %3155 = vmatpush2.xpose.msra.mxu0 0.0
    %3156 = vmatprep.subr.mxu0 0.0
    %3157 = vmatpush2.xpose.msra.mxu0 0.0
    %3158 = vmatprep.subr.mxu0 0.0
    %3159 = vmatpush2.xpose.msra.mxu0 0.0
    %3160 = vmatprep.subr.mxu0 0.0
    %3161 = vmatpush2.xpose.msra.mxu0 0.0
    %3162 = vmatprep.subr.mxu0 0.0
    %3163 = vmatpush2.xpose.msra.mxu0 0.0
    %3164 = vmatprep.subr.mxu0 0.0
    %3165 = vmatpush2.xpose.msra.mxu0 0.0
    %3166 = vmatprep.subr.mxu0 0.0
    %3167 = vmatpush2.xpose.msra.mxu0 0.0
    %3168 = vmatprep.subr.mxu0 0.0
    %3169 = vmatpush2.xpose.msra.mxu0 0.0
    %3170 = vmatprep.subr.mxu0 0.0
    %3171 = vmatpush2.xpose.msra.mxu0 0.0
    %3172 = vmatprep.subr.mxu0 0.0
    %3173 = vmatpush2.xpose.msra.mxu0 0.0
    %3174 = vmatprep.subr.mxu0 0.0
    %3175 = vmatpush2.xpose.msra.mxu0 0.0
    %3176 = vmatprep.subr.mxu0 0.0
    %3177 = vmatpush2.xpose.msra.mxu0 0.0
    %3178 = vmatprep.subr.mxu0 0.0
    %3179 = vmatpush2.xpose.msra.mxu0 0.0
    %3180 = vmatprep.subr.mxu0 0.0
    %3181 = vmatpush2.xpose.msra.mxu0 0.0
    %3182 = vmatprep.mubr.f32.mxu0 0.0
    %3183 = vmatmul.mubr.f32.gmra.mxu0 %v3114
    %v3184 = vpop.f32.mrf.mxu0
    %v3185 = vadd.f32 0.0, %v3184
    %v3186 = vpop.f32.mrf.mxu0
    %3187 = vdwg.mxu0
    %v3188 = vsel %vm245, %v3185, -inf
    %3189 = vmax.xlane.f32.xlu0 %v3188
    %v3190 = vpop.xlane.xlu0 %3189
    %v3191 = vsub.f32 %v3185, %v3190
    %v3192 = vmul.f32 %v3191, 1.442695
    %v3193 = vpow.pop %v3192
    %v3194 = vsel %vm245, %v3193, 0.0
    %3195 = vadd.xlane.f32.xlu0 %v3194
    %v3196 = vpop.xlane.xlu0 %3195
    %v3197 = vrcp.pop %v3196
    %v3198 = vmul.f32 %v3193, %v3197
    %3199 = vrot.lane.b32.xlu0 %v2384, 72
    %v3200 = vpop.permute.xlu0 %3199
    %v3203 = vsel %vm245, %v3198, 0
    %3205 = vmatprep.subr.mxu0 0.0
    %3206 = vmatpush1.msra.mxu0 0.0
    %3207 = vmatprep.subr.mxu0 0.0
    %3208 = vmatpush1.msra.mxu0 0.0
    %3209 = vmatprep.subr.mxu0 0.0
    %3210 = vmatpush1.msra.mxu0 0.0
    %3211 = vmatprep.subr.mxu0 0.0
    %3212 = vmatpush1.msra.mxu0 0.0
    %3213 = vmatprep.subr.mxu0 0.0
    %3214 = vmatpush1.msra.mxu0 0.0
    %3215 = vmatprep.subr.mxu0 0.0
    %3216 = vmatpush1.msra.mxu0 0.0
    %3217 = vmatprep.subr.mxu0 0.0
    %3218 = vmatpush1.msra.mxu0 0.0
    %3219 = vmatprep.subr.mxu0 0.0
    %3220 = vmatpush1.msra.mxu0 0.0
    %3221 = vmatprep.subr.mxu0 0.0
    %3222 = vmatpush1.msra.mxu0 0.0
    %3223 = vmatprep.subr.mxu0 0.0
    %3224 = vmatpush1.msra.mxu0 0.0
    %3225 = vmatprep.subr.mxu0 0.0
    %3226 = vmatpush1.msra.mxu0 0.0
    %3227 = vmatprep.subr.mxu0 0.0
    %3228 = vmatpush1.msra.mxu0 0.0
    %3229 = vmatprep.subr.mxu0 0.0
    %3230 = vmatpush1.msra.mxu0 0.0
    %3231 = vmatprep.subr.mxu0 0.0
    %3232 = vmatpush1.msra.mxu0 0.0
    %3233 = vmatprep.subr.mxu0 0.0
    %3234 = vmatpush1.msra.mxu0 0.0
    %3235 = vmatprep.subr.mxu0 0.0
    %3236 = vmatpush1.msra.mxu0 %v3200
    %3237 = vmatprep.subr.mxu0 0.0
    %3238 = vmatpush2.msra.mxu0 0.0
    %3239 = vmatprep.subr.mxu0 0.0
    %3240 = vmatpush2.msra.mxu0 0.0
    %3241 = vmatprep.subr.mxu0 0.0
    %3242 = vmatpush2.msra.mxu0 0.0
    %3243 = vmatprep.subr.mxu0 0.0
    %3244 = vmatpush2.msra.mxu0 0.0
    %3245 = vmatprep.subr.mxu0 0.0
    %3246 = vmatpush2.msra.mxu0 0.0
    %3247 = vmatprep.subr.mxu0 0.0
    %3248 = vmatpush2.msra.mxu0 0.0
    %3249 = vmatprep.subr.mxu0 0.0
    %3250 = vmatpush2.msra.mxu0 0.0
    %3251 = vmatprep.subr.mxu0 0.0
    %3252 = vmatpush2.msra.mxu0 0.0
    %3253 = vmatprep.subr.mxu0 0.0
    %3254 = vmatpush2.msra.mxu0 0.0
    %3255 = vmatprep.subr.mxu0 0.0
    %3256 = vmatpush2.msra.mxu0 0.0
    %3257 = vmatprep.subr.mxu0 0.0
    %3258 = vmatpush2.msra.mxu0 0.0
    %3259 = vmatprep.subr.mxu0 0.0
    %3260 = vmatpush2.msra.mxu0 0.0
    %3261 = vmatprep.subr.mxu0 0.0
    %3262 = vmatpush2.msra.mxu0 0.0
    %3263 = vmatprep.subr.mxu0 0.0
    %3264 = vmatpush2.msra.mxu0 0.0
    %3265 = vmatprep.subr.mxu0 0.0
    %3266 = vmatpush2.msra.mxu0 0.0
    %3267 = vmatprep.subr.mxu0 0.0
    %3268 = vmatpush2.msra.mxu0 0.0
    %3269 = vmatprep.mubr.f32.mxu0 0.0
    %3270 = vmatmul.mubr.f32.gmra.mxu0 %v3203
    %v3271 = vpop.f32.mrf.mxu0
    %v3272 = vadd.f32 0.0, %v3271
    %v3273 = vpop.f32.mrf.mxu0
    %3274 = vdwg.mxu0
    %v3276 = vsel %vm245, %v3272, 0
    %3278 = vmatprep.subr.mxu0 0.0
    %3279 = vmatpush1.msra.mxu0 0.0
    %3280 = vmatprep.subr.mxu0 0.0
    %3281 = vmatpush1.msra.mxu0 0.0
    %3282 = vmatprep.subr.mxu0 0.0
    %3283 = vmatpush1.msra.mxu0 0.0
    %3284 = vmatprep.subr.mxu0 0.0
    %3285 = vmatpush1.msra.mxu0 0.0
    %3286 = vmatprep.subr.mxu0 0.0
    %3287 = vmatpush1.msra.mxu0 0.0
    %3288 = vmatprep.subr.mxu0 0.0
    %3289 = vmatpush1.msra.mxu0 0.0
    %3290 = vmatprep.subr.mxu0 0.0
    %3291 = vmatpush1.msra.mxu0 0.0
    %3292 = vmatprep.subr.mxu0 0.0
    %3293 = vmatpush1.msra.mxu0 0.0
    %3294 = vmatprep.subr.mxu0 0.0
    %3295 = vmatpush1.msra.mxu0 0.0
    %3296 = vmatprep.subr.mxu0 0.0
    %3297 = vmatpush1.msra.mxu0 0.0
    %3298 = vmatprep.subr.mxu0 0.0
    %3299 = vmatpush1.msra.mxu0 0.0
    %3300 = vmatprep.subr.mxu0 0.0
    %3301 = vmatpush1.msra.mxu0 0.0
    %3302 = vmatprep.subr.mxu0 0.0
    %3303 = vmatpush1.msra.mxu0 0.0
    %3304 = vmatprep.subr.mxu0 0.0
    %3305 = vmatpush1.msra.mxu0 0.0
    %3306 = vmatprep.subr.mxu0 0.0
    %3307 = vmatpush1.msra.mxu0 0.0
    %3308 = vmatprep.subr.mxu0 0.0
    %3309 = vmatpush1.msra.mxu0 %v2395
    %3310 = vmatprep.subr.mxu0 0.0
    %3311 = vmatpush2.msra.mxu0 0.0
    %3312 = vmatprep.subr.mxu0 0.0
    %3313 = vmatpush2.msra.mxu0 0.0
    %3314 = vmatprep.subr.mxu0 0.0
    %3315 = vmatpush2.msra.mxu0 0.0
    %3316 = vmatprep.subr.mxu0 0.0
    %3317 = vmatpush2.msra.mxu0 0.0
    %3318 = vmatprep.subr.mxu0 0.0
    %3319 = vmatpush2.msra.mxu0 0.0
    %3320 = vmatprep.subr.mxu0 0.0
    %3321 = vmatpush2.msra.mxu0 0.0
    %3322 = vmatprep.subr.mxu0 0.0
    %3323 = vmatpush2.msra.mxu0 0.0
    %3324 = vmatprep.subr.mxu0 0.0
    %3325 = vmatpush2.msra.mxu0 0.0
    %3326 = vmatprep.subr.mxu0 0.0
    %3327 = vmatpush2.msra.mxu0 0.0
    %3328 = vmatprep.subr.mxu0 0.0
    %3329 = vmatpush2.msra.mxu0 0.0
    %3330 = vmatprep.subr.mxu0 0.0
    %3331 = vmatpush2.msra.mxu0 0.0
    %3332 = vmatprep.subr.mxu0 0.0
    %3333 = vmatpush2.msra.mxu0 0.0
    %3334 = vmatprep.subr.mxu0 0.0
    %3335 = vmatpush2.msra.mxu0 0.0
    %3336 = vmatprep.subr.mxu0 0.0
    %3337 = vmatpush2.msra.mxu0 0.0
    %3338 = vmatprep.subr.mxu0 0.0
    %3339 = vmatpush2.msra.mxu0 0.0
    %3340 = vmatprep.subr.mxu0 0.0
    %3341 = vmatpush2.msra.mxu0 0.0
    %3342 = vmatprep.mubr.f32.mxu0 0.0
    %3343 = vmatmul.mubr.f32.gmra.mxu0 %v3276
    %v3344 = vpop.f32.mrf.mxu0
    %v3345 = vadd.f32 0.0, %v3344
    %v3346 = vpop.f32.mrf.mxu0
    %3347 = vdwg.mxu0
    %v3348 = vadd.f32 %v3109, %v3345
    %v3349 = vmul.f32 %v2297, 0.35355338
    %v3351 = vsel %vm245, %v3349, 0
    %v3354 = vsel %vm245, %v2389, 0
    %3356 = vmatprep.subr.mxu0 0.0
    %3357 = vmatpush1.xpose.msra.mxu0 0.0
    %3358 = vmatprep.subr.mxu0 0.0
    %3359 = vmatpush1.xpose.msra.mxu0 0.0
    %3360 = vmatprep.subr.mxu0 0.0
    %3361 = vmatpush1.xpose.msra.mxu0 0.0
    %3362 = vmatprep.subr.mxu0 0.0
    %3363 = vmatpush1.xpose.msra.mxu0 0.0
    %3364 = vmatprep.subr.mxu0 0.0
    %3365 = vmatpush1.xpose.msra.mxu0 0.0
    %3366 = vmatprep.subr.mxu0 0.0
    %3367 = vmatpush1.xpose.msra.mxu0 0.0
    %3368 = vmatprep.subr.mxu0 0.0
    %3369 = vmatpush1.xpose.msra.mxu0 0.0
    %3370 = vmatprep.subr.mxu0 0.0
    %3371 = vmatpush1.xpose.msra.mxu0 0.0
    %3372 = vmatprep.subr.mxu0 0.0
    %3373 = vmatpush1.xpose.msra.mxu0 0.0
    %3374 = vmatprep.subr.mxu0 0.0
    %3375 = vmatpush1.xpose.msra.mxu0 0.0
    %3376 = vmatprep.subr.mxu0 0.0
    %3377 = vmatpush1.xpose.msra.mxu0 0.0
    %3378 = vmatprep.subr.mxu0 0.0
    %3379 = vmatpush1.xpose.msra.mxu0 0.0
    %3380 = vmatprep.subr.mxu0 0.0
    %3381 = vmatpush1.xpose.msra.mxu0 0.0
    %3382 = vmatprep.subr.mxu0 0.0
    %3383 = vmatpush1.xpose.msra.mxu0 0.0
    %3384 = vmatprep.subr.mxu0 0.0
    %3385 = vmatpush1.xpose.msra.mxu0 0.0
    %3386 = vmatprep.subr.mxu0 0.0
    %3387 = vmatpush1.xpose.msra.mxu0 %v3354
    %3388 = vmatprep.subr.mxu0 0.0
    %3389 = vmatpush2.xpose.msra.mxu0 0.0
    %3390 = vmatprep.subr.mxu0 0.0
    %3391 = vmatpush2.xpose.msra.mxu0 0.0
    %3392 = vmatprep.subr.mxu0 0.0
    %3393 = vmatpush2.xpose.msra.mxu0 0.0
    %3394 = vmatprep.subr.mxu0 0.0
    %3395 = vmatpush2.xpose.msra.mxu0 0.0
    %3396 = vmatprep.subr.mxu0 0.0
    %3397 = vmatpush2.xpose.msra.mxu0 0.0
    %3398 = vmatprep.subr.mxu0 0.0
    %3399 = vmatpush2.xpose.msra.mxu0 0.0
    %3400 = vmatprep.subr.mxu0 0.0
    %3401 = vmatpush2.xpose.msra.mxu0 0.0
    %3402 = vmatprep.subr.mxu0 0.0
    %3403 = vmatpush2.xpose.msra.mxu0 0.0
    %3404 = vmatprep.subr.mxu0 0.0
    %3405 = vmatpush2.xpose.msra.mxu0 0.0
    %3406 = vmatprep.subr.mxu0 0.0
    %3407 = vmatpush2.xpose.msra.mxu0 0.0
    %3408 = vmatprep.subr.mxu0 0.0
    %3409 = vmatpush2.xpose.msra.mxu0 0.0
    %3410 = vmatprep.subr.mxu0 0.0
    %3411 = vmatpush2.xpose.msra.mxu0 0.0
    %3412 = vmatprep.subr.mxu0 0.0
    %3413 = vmatpush2.xpose.msra.mxu0 0.0
    %3414 = vmatprep.subr.mxu0 0.0
    %3415 = vmatpush2.xpose.msra.mxu0 0.0
    %3416 = vmatprep.subr.mxu0 0.0
    %3417 = vmatpush2.xpose.msra.mxu0 0.0
    %3418 = vmatprep.subr.mxu0 0.0
    %3419 = vmatpush2.xpose.msra.mxu0 0.0
    %3420 = vmatprep.mubr.f32.mxu0 0.0
    %3421 = vmatmul.mubr.f32.gmra.mxu0 %v3351
    %v3422 = vpop.f32.mrf.mxu0
    %v3423 = vadd.f32 0.0, %v3422
    %v3424 = vpop.f32.mrf.mxu0
    %3425 = vdwg.mxu0
    %v3426 = vsel %vm245, %v3423, -inf
    %3427 = vmax.xlane.f32.xlu0 %v3426
    %v3428 = vpop.xlane.xlu0 %3427
    %v3429 = vsub.f32 %v3423, %v3428
    %v3430 = vmul.f32 %v3429, 1.442695
    %v3431 = vpow.pop %v3430
    %v3432 = vsel %vm245, %v3431, 0.0
    %3433 = vadd.xlane.f32.xlu0 %v3432
    %v3434 = vpop.xlane.xlu0 %3433
    %v3435 = vrcp.pop %v3434
    %v3436 = vmul.f32 %v3431, %v3435
    %3437 = vrot.lane.b32.xlu0 %v2389, 96
    %v3438 = vpop.permute.xlu0 %3437
    %v3441 = vsel %vm245, %v3436, 0
    %3443 = vmatprep.subr.mxu0 0.0
    %3444 = vmatpush1.msra.mxu0 0.0
    %3445 = vmatprep.subr.mxu0 0.0
    %3446 = vmatpush1.msra.mxu0 0.0
    %3447 = vmatprep.subr.mxu0 0.0
    %3448 = vmatpush1.msra.mxu0 0.0
    %3449 = vmatprep.subr.mxu0 0.0
    %3450 = vmatpush1.msra.mxu0 0.0
    %3451 = vmatprep.subr.mxu0 0.0
    %3452 = vmatpush1.msra.mxu0 0.0
    %3453 = vmatprep.subr.mxu0 0.0
    %3454 = vmatpush1.msra.mxu0 0.0
    %3455 = vmatprep.subr.mxu0 0.0
    %3456 = vmatpush1.msra.mxu0 0.0
    %3457 = vmatprep.subr.mxu0 0.0
    %3458 = vmatpush1.msra.mxu0 0.0
    %3459 = vmatprep.subr.mxu0 0.0
    %3460 = vmatpush1.msra.mxu0 0.0
    %3461 = vmatprep.subr.mxu0 0.0
    %3462 = vmatpush1.msra.mxu0 0.0
    %3463 = vmatprep.subr.mxu0 0.0
    %3464 = vmatpush1.msra.mxu0 0.0
    %3465 = vmatprep.subr.mxu0 0.0
    %3466 = vmatpush1.msra.mxu0 0.0
    %3467 = vmatprep.subr.mxu0 0.0
    %3468 = vmatpush1.msra.mxu0 0.0
    %3469 = vmatprep.subr.mxu0 0.0
    %3470 = vmatpush1.msra.mxu0 0.0
    %3471 = vmatprep.subr.mxu0 0.0
    %3472 = vmatpush1.msra.mxu0 0.0
    %3473 = vmatprep.subr.mxu0 0.0
    %3474 = vmatpush1.msra.mxu0 %v3438
    %3475 = vmatprep.subr.mxu0 0.0
    %3476 = vmatpush2.msra.mxu0 0.0
    %3477 = vmatprep.subr.mxu0 0.0
    %3478 = vmatpush2.msra.mxu0 0.0
    %3479 = vmatprep.subr.mxu0 0.0
    %3480 = vmatpush2.msra.mxu0 0.0
    %3481 = vmatprep.subr.mxu0 0.0
    %3482 = vmatpush2.msra.mxu0 0.0
    %3483 = vmatprep.subr.mxu0 0.0
    %3484 = vmatpush2.msra.mxu0 0.0
    %3485 = vmatprep.subr.mxu0 0.0
    %3486 = vmatpush2.msra.mxu0 0.0
    %3487 = vmatprep.subr.mxu0 0.0
    %3488 = vmatpush2.msra.mxu0 0.0
    %3489 = vmatprep.subr.mxu0 0.0
    %3490 = vmatpush2.msra.mxu0 0.0
    %3491 = vmatprep.subr.mxu0 0.0
    %3492 = vmatpush2.msra.mxu0 0.0
    %3493 = vmatprep.subr.mxu0 0.0
    %3494 = vmatpush2.msra.mxu0 0.0
    %3495 = vmatprep.subr.mxu0 0.0
    %3496 = vmatpush2.msra.mxu0 0.0
    %3497 = vmatprep.subr.mxu0 0.0
    %3498 = vmatpush2.msra.mxu0 0.0
    %3499 = vmatprep.subr.mxu0 0.0
    %3500 = vmatpush2.msra.mxu0 0.0
    %3501 = vmatprep.subr.mxu0 0.0
    %3502 = vmatpush2.msra.mxu0 0.0
    %3503 = vmatprep.subr.mxu0 0.0
    %3504 = vmatpush2.msra.mxu0 0.0
    %3505 = vmatprep.subr.mxu0 0.0
    %3506 = vmatpush2.msra.mxu0 0.0
    %3507 = vmatprep.mubr.f32.mxu0 0.0
    %3508 = vmatmul.mubr.f32.gmra.mxu0 %v3441
    %v3509 = vpop.f32.mrf.mxu0
    %v3510 = vadd.f32 0.0, %v3509
    %v3511 = vpop.f32.mrf.mxu0
    %3512 = vdwg.mxu0
    %3513 = vrot.lane.b32.xlu0 %v3349, 120
    %v3514 = vpop.permute.xlu0 %3513
    %3515 = vrot.lane.b32.xlu0 %v2389, 120
    %v3516 = vpop.permute.xlu0 %3515
    %v3517 = vsel %vm245, %v3514, 0
    %v3519 = vsel %vm245, %v3516, 0
    %3521 = vmatprep.subr.mxu0 0.0
    %3522 = vmatpush1.xpose.msra.mxu0 0.0
    %3523 = vmatprep.subr.mxu0 0.0
    %3524 = vmatpush1.xpose.msra.mxu0 0.0
    %3525 = vmatprep.subr.mxu0 0.0
    %3526 = vmatpush1.xpose.msra.mxu0 0.0
    %3527 = vmatprep.subr.mxu0 0.0
    %3528 = vmatpush1.xpose.msra.mxu0 0.0
    %3529 = vmatprep.subr.mxu0 0.0
    %3530 = vmatpush1.xpose.msra.mxu0 0.0
    %3531 = vmatprep.subr.mxu0 0.0
    %3532 = vmatpush1.xpose.msra.mxu0 0.0
    %3533 = vmatprep.subr.mxu0 0.0
    %3534 = vmatpush1.xpose.msra.mxu0 0.0
    %3535 = vmatprep.subr.mxu0 0.0
    %3536 = vmatpush1.xpose.msra.mxu0 0.0
    %3537 = vmatprep.subr.mxu0 0.0
    %3538 = vmatpush1.xpose.msra.mxu0 0.0
    %3539 = vmatprep.subr.mxu0 0.0
    %3540 = vmatpush1.xpose.msra.mxu0 0.0
    %3541 = vmatprep.subr.mxu0 0.0
    %3542 = vmatpush1.xpose.msra.mxu0 0.0
    %3543 = vmatprep.subr.mxu0 0.0
    %3544 = vmatpush1.xpose.msra.mxu0 0.0
    %3545 = vmatprep.subr.mxu0 0.0
    %3546 = vmatpush1.xpose.msra.mxu0 0.0
    %3547 = vmatprep.subr.mxu0 0.0
    %3548 = vmatpush1.xpose.msra.mxu0 0.0
    %3549 = vmatprep.subr.mxu0 0.0
    %3550 = vmatpush1.xpose.msra.mxu0 0.0
    %3551 = vmatprep.subr.mxu0 0.0
    %3552 = vmatpush1.xpose.msra.mxu0 %v3519
    %3553 = vmatprep.subr.mxu0 0.0
    %3554 = vmatpush2.xpose.msra.mxu0 0.0
    %3555 = vmatprep.subr.mxu0 0.0
    %3556 = vmatpush2.xpose.msra.mxu0 0.0
    %3557 = vmatprep.subr.mxu0 0.0
    %3558 = vmatpush2.xpose.msra.mxu0 0.0
    %3559 = vmatprep.subr.mxu0 0.0
    %3560 = vmatpush2.xpose.msra.mxu0 0.0
    %3561 = vmatprep.subr.mxu0 0.0
    %3562 = vmatpush2.xpose.msra.mxu0 0.0
    %3563 = vmatprep.subr.mxu0 0.0
    %3564 = vmatpush2.xpose.msra.mxu0 0.0
    %3565 = vmatprep.subr.mxu0 0.0
    %3566 = vmatpush2.xpose.msra.mxu0 0.0
    %3567 = vmatprep.subr.mxu0 0.0
    %3568 = vmatpush2.xpose.msra.mxu0 0.0
    %3569 = vmatprep.subr.mxu0 0.0
    %3570 = vmatpush2.xpose.msra.mxu0 0.0
    %3571 = vmatprep.subr.mxu0 0.0
    %3572 = vmatpush2.xpose.msra.mxu0 0.0
    %3573 = vmatprep.subr.mxu0 0.0
    %3574 = vmatpush2.xpose.msra.mxu0 0.0
    %3575 = vmatprep.subr.mxu0 0.0
    %3576 = vmatpush2.xpose.msra.mxu0 0.0
    %3577 = vmatprep.subr.mxu0 0.0
    %3578 = vmatpush2.xpose.msra.mxu0 0.0
    %3579 = vmatprep.subr.mxu0 0.0
    %3580 = vmatpush2.xpose.msra.mxu0 0.0
    %3581 = vmatprep.subr.mxu0 0.0
    %3582 = vmatpush2.xpose.msra.mxu0 0.0
    %3583 = vmatprep.subr.mxu0 0.0
    %3584 = vmatpush2.xpose.msra.mxu0 0.0
    %3585 = vmatprep.mubr.f32.mxu0 0.0
    %3586 = vmatmul.mubr.f32.gmra.mxu0 %v3517
    %v3587 = vpop.f32.mrf.mxu0
    %v3588 = vadd.f32 0.0, %v3587
    %v3589 = vpop.f32.mrf.mxu0
    %3590 = vdwg.mxu0
    %v3591 = vsel %vm245, %v3588, -inf
    %3592 = vmax.xlane.f32.xlu0 %v3591
    %v3593 = vpop.xlane.xlu0 %3592
    %v3594 = vsub.f32 %v3588, %v3593
    %v3595 = vmul.f32 %v3594, 1.442695
    %v3596 = vpow.pop %v3595
    %v3597 = vsel %vm245, %v3596, 0.0
    %3598 = vadd.xlane.f32.xlu0 %v3597
    %v3599 = vpop.xlane.xlu0 %3598
    %v3600 = vrcp.pop %v3599
    %v3601 = vmul.f32 %v3596, %v3600
    %3602 = vrot.lane.b32.xlu0 %v2389, 88
    %v3603 = vpop.permute.xlu0 %3602
    %v3606 = vsel %vm245, %v3601, 0
    %3608 = vmatprep.subr.mxu0 0.0
    %3609 = vmatpush1.msra.mxu0 0.0
    %3610 = vmatprep.subr.mxu0 0.0
    %3611 = vmatpush1.msra.mxu0 0.0
    %3612 = vmatprep.subr.mxu0 0.0
    %3613 = vmatpush1.msra.mxu0 0.0
    %3614 = vmatprep.subr.mxu0 0.0
    %3615 = vmatpush1.msra.mxu0 0.0
    %3616 = vmatprep.subr.mxu0 0.0
    %3617 = vmatpush1.msra.mxu0 0.0
    %3618 = vmatprep.subr.mxu0 0.0
    %3619 = vmatpush1.msra.mxu0 0.0
    %3620 = vmatprep.subr.mxu0 0.0
    %3621 = vmatpush1.msra.mxu0 0.0
    %3622 = vmatprep.subr.mxu0 0.0
    %3623 = vmatpush1.msra.mxu0 0.0
    %3624 = vmatprep.subr.mxu0 0.0
    %3625 = vmatpush1.msra.mxu0 0.0
    %3626 = vmatprep.subr.mxu0 0.0
    %3627 = vmatpush1.msra.mxu0 0.0
    %3628 = vmatprep.subr.mxu0 0.0
    %3629 = vmatpush1.msra.mxu0 0.0
    %3630 = vmatprep.subr.mxu0 0.0
    %3631 = vmatpush1.msra.mxu0 0.0
    %3632 = vmatprep.subr.mxu0 0.0
    %3633 = vmatpush1.msra.mxu0 0.0
    %3634 = vmatprep.subr.mxu0 0.0
    %3635 = vmatpush1.msra.mxu0 0.0
    %3636 = vmatprep.subr.mxu0 0.0
    %3637 = vmatpush1.msra.mxu0 0.0
    %3638 = vmatprep.subr.mxu0 0.0
    %3639 = vmatpush1.msra.mxu0 %v3603
    %3640 = vmatprep.subr.mxu0 0.0
    %3641 = vmatpush2.msra.mxu0 0.0
    %3642 = vmatprep.subr.mxu0 0.0
    %3643 = vmatpush2.msra.mxu0 0.0
    %3644 = vmatprep.subr.mxu0 0.0
    %3645 = vmatpush2.msra.mxu0 0.0
    %3646 = vmatprep.subr.mxu0 0.0
    %3647 = vmatpush2.msra.mxu0 0.0
    %3648 = vmatprep.subr.mxu0 0.0
    %3649 = vmatpush2.msra.mxu0 0.0
    %3650 = vmatprep.subr.mxu0 0.0
    %3651 = vmatpush2.msra.mxu0 0.0
    %3652 = vmatprep.subr.mxu0 0.0
    %3653 = vmatpush2.msra.mxu0 0.0
    %3654 = vmatprep.subr.mxu0 0.0
    %3655 = vmatpush2.msra.mxu0 0.0
    %3656 = vmatprep.subr.mxu0 0.0
    %3657 = vmatpush2.msra.mxu0 0.0
    %3658 = vmatprep.subr.mxu0 0.0
    %3659 = vmatpush2.msra.mxu0 0.0
    %3660 = vmatprep.subr.mxu0 0.0
    %3661 = vmatpush2.msra.mxu0 0.0
    %3662 = vmatprep.subr.mxu0 0.0
    %3663 = vmatpush2.msra.mxu0 0.0
    %3664 = vmatprep.subr.mxu0 0.0
    %3665 = vmatpush2.msra.mxu0 0.0
    %3666 = vmatprep.subr.mxu0 0.0
    %3667 = vmatpush2.msra.mxu0 0.0
    %3668 = vmatprep.subr.mxu0 0.0
    %3669 = vmatpush2.msra.mxu0 0.0
    %3670 = vmatprep.subr.mxu0 0.0
    %3671 = vmatpush2.msra.mxu0 0.0
    %3672 = vmatprep.mubr.f32.mxu0 0.0
    %3673 = vmatmul.mubr.f32.gmra.mxu0 %v3606
    %v3674 = vpop.f32.mrf.mxu0
    %v3675 = vadd.f32 0.0, %v3674
    %v3676 = vpop.f32.mrf.mxu0
    %3677 = vdwg.mxu0
    %v3679 = vsel %vm245, %v3675, 0
    %3681 = vmatprep.subr.mxu0 0.0
    %3682 = vmatpush1.msra.mxu0 0.0
    %3683 = vmatprep.subr.mxu0 0.0
    %3684 = vmatpush1.msra.mxu0 0.0
    %3685 = vmatprep.subr.mxu0 0.0
    %3686 = vmatpush1.msra.mxu0 0.0
    %3687 = vmatprep.subr.mxu0 0.0
    %3688 = vmatpush1.msra.mxu0 0.0
    %3689 = vmatprep.subr.mxu0 0.0
    %3690 = vmatpush1.msra.mxu0 0.0
    %3691 = vmatprep.subr.mxu0 0.0
    %3692 = vmatpush1.msra.mxu0 0.0
    %3693 = vmatprep.subr.mxu0 0.0
    %3694 = vmatpush1.msra.mxu0 0.0
    %3695 = vmatprep.subr.mxu0 0.0
    %3696 = vmatpush1.msra.mxu0 0.0
    %3697 = vmatprep.subr.mxu0 0.0
    %3698 = vmatpush1.msra.mxu0 0.0
    %3699 = vmatprep.subr.mxu0 0.0
    %3700 = vmatpush1.msra.mxu0 0.0
    %3701 = vmatprep.subr.mxu0 0.0
    %3702 = vmatpush1.msra.mxu0 0.0
    %3703 = vmatprep.subr.mxu0 0.0
    %3704 = vmatpush1.msra.mxu0 0.0
    %3705 = vmatprep.subr.mxu0 0.0
    %3706 = vmatpush1.msra.mxu0 0.0
    %3707 = vmatprep.subr.mxu0 0.0
    %3708 = vmatpush1.msra.mxu0 0.0
    %3709 = vmatprep.subr.mxu0 0.0
    %3710 = vmatpush1.msra.mxu0 0.0
    %3711 = vmatprep.subr.mxu0 0.0
    %3712 = vmatpush1.msra.mxu0 %v2393
    %3713 = vmatprep.subr.mxu0 0.0
    %3714 = vmatpush2.msra.mxu0 0.0
    %3715 = vmatprep.subr.mxu0 0.0
    %3716 = vmatpush2.msra.mxu0 0.0
    %3717 = vmatprep.subr.mxu0 0.0
    %3718 = vmatpush2.msra.mxu0 0.0
    %3719 = vmatprep.subr.mxu0 0.0
    %3720 = vmatpush2.msra.mxu0 0.0
    %3721 = vmatprep.subr.mxu0 0.0
    %3722 = vmatpush2.msra.mxu0 0.0
    %3723 = vmatprep.subr.mxu0 0.0
    %3724 = vmatpush2.msra.mxu0 0.0
    %3725 = vmatprep.subr.mxu0 0.0
    %3726 = vmatpush2.msra.mxu0 0.0
    %3727 = vmatprep.subr.mxu0 0.0
    %3728 = vmatpush2.msra.mxu0 0.0
    %3729 = vmatprep.subr.mxu0 0.0
    %3730 = vmatpush2.msra.mxu0 0.0
    %3731 = vmatprep.subr.mxu0 0.0
    %3732 = vmatpush2.msra.mxu0 0.0
    %3733 = vmatprep.subr.mxu0 0.0
    %3734 = vmatpush2.msra.mxu0 0.0
    %3735 = vmatprep.subr.mxu0 0.0
    %3736 = vmatpush2.msra.mxu0 0.0
    %3737 = vmatprep.subr.mxu0 0.0
    %3738 = vmatpush2.msra.mxu0 0.0
    %3739 = vmatprep.subr.mxu0 0.0
    %3740 = vmatpush2.msra.mxu0 0.0
    %3741 = vmatprep.subr.mxu0 0.0
    %3742 = vmatpush2.msra.mxu0 0.0
    %3743 = vmatprep.subr.mxu0 0.0
    %3744 = vmatpush2.msra.mxu0 0.0
    %3745 = vmatprep.mubr.f32.mxu0 0.0
    %3746 = vmatmul.mubr.f32.gmra.mxu0 %v3679
    %v3747 = vpop.f32.mrf.mxu0
    %v3748 = vadd.f32 0.0, %v3747
    %v3749 = vpop.f32.mrf.mxu0
    %3750 = vdwg.mxu0
    %v3752 = vsel %vm245, %v3510, 0
    %3754 = vmatprep.subr.mxu0 0.0
    %3755 = vmatpush1.msra.mxu0 0.0
    %3756 = vmatprep.subr.mxu0 0.0
    %3757 = vmatpush1.msra.mxu0 0.0
    %3758 = vmatprep.subr.mxu0 0.0
    %3759 = vmatpush1.msra.mxu0 0.0
    %3760 = vmatprep.subr.mxu0 0.0
    %3761 = vmatpush1.msra.mxu0 0.0
    %3762 = vmatprep.subr.mxu0 0.0
    %3763 = vmatpush1.msra.mxu0 0.0
    %3764 = vmatprep.subr.mxu0 0.0
    %3765 = vmatpush1.msra.mxu0 0.0
    %3766 = vmatprep.subr.mxu0 0.0
    %3767 = vmatpush1.msra.mxu0 0.0
    %3768 = vmatprep.subr.mxu0 0.0
    %3769 = vmatpush1.msra.mxu0 0.0
    %3770 = vmatprep.subr.mxu0 0.0
    %3771 = vmatpush1.msra.mxu0 0.0
    %3772 = vmatprep.subr.mxu0 0.0
    %3773 = vmatpush1.msra.mxu0 0.0
    %3774 = vmatprep.subr.mxu0 0.0
    %3775 = vmatpush1.msra.mxu0 0.0
    %3776 = vmatprep.subr.mxu0 0.0
    %3777 = vmatpush1.msra.mxu0 0.0
    %3778 = vmatprep.subr.mxu0 0.0
    %3779 = vmatpush1.msra.mxu0 0.0
    %3780 = vmatprep.subr.mxu0 0.0
    %3781 = vmatpush1.msra.mxu0 0.0
    %3782 = vmatprep.subr.mxu0 0.0
    %3783 = vmatpush1.msra.mxu0 0.0
    %3784 = vmatprep.subr.mxu0 0.0
    %3785 = vmatpush1.msra.mxu0 %v2392
    %3786 = vmatprep.subr.mxu0 0.0
    %3787 = vmatpush2.msra.mxu0 0.0
    %3788 = vmatprep.subr.mxu0 0.0
    %3789 = vmatpush2.msra.mxu0 0.0
    %3790 = vmatprep.subr.mxu0 0.0
    %3791 = vmatpush2.msra.mxu0 0.0
    %3792 = vmatprep.subr.mxu0 0.0
    %3793 = vmatpush2.msra.mxu0 0.0
    %3794 = vmatprep.subr.mxu0 0.0
    %3795 = vmatpush2.msra.mxu0 0.0
    %3796 = vmatprep.subr.mxu0 0.0
    %3797 = vmatpush2.msra.mxu0 0.0
    %3798 = vmatprep.subr.mxu0 0.0
    %3799 = vmatpush2.msra.mxu0 0.0
    %3800 = vmatprep.subr.mxu0 0.0
    %3801 = vmatpush2.msra.mxu0 0.0
    %3802 = vmatprep.subr.mxu0 0.0
    %3803 = vmatpush2.msra.mxu0 0.0
    %3804 = vmatprep.subr.mxu0 0.0
    %3805 = vmatpush2.msra.mxu0 0.0
    %3806 = vmatprep.subr.mxu0 0.0
    %3807 = vmatpush2.msra.mxu0 0.0
    %3808 = vmatprep.subr.mxu0 0.0
    %3809 = vmatpush2.msra.mxu0 0.0
    %3810 = vmatprep.subr.mxu0 0.0
    %3811 = vmatpush2.msra.mxu0 0.0
    %3812 = vmatprep.subr.mxu0 0.0
    %3813 = vmatpush2.msra.mxu0 0.0
    %3814 = vmatprep.subr.mxu0 0.0
    %3815 = vmatpush2.msra.mxu0 0.0
    %3816 = vmatprep.subr.mxu0 0.0
    %3817 = vmatpush2.msra.mxu0 0.0
    %3818 = vmatprep.mubr.f32.mxu0 0.0
    %3819 = vmatmul.mubr.f32.gmra.mxu0 %v3752
    %v3820 = vpop.f32.mrf.mxu0
    %v3821 = vadd.f32 %v3748, %v3820
    %v3822 = vpop.f32.mrf.mxu0
    %3823 = vdwg.mxu0
    %3824 = vrot.lane.b32.xlu0 %v3349, 112
    %v3825 = vpop.permute.xlu0 %3824
    %3826 = vrot.lane.b32.xlu0 %v2389, 112
    %v3827 = vpop.permute.xlu0 %3826
    %v3828 = vsel %vm245, %v3825, 0
    %v3830 = vsel %vm245, %v3827, 0
    %3832 = vmatprep.subr.mxu0 0.0
    %3833 = vmatpush1.xpose.msra.mxu0 0.0
    %3834 = vmatprep.subr.mxu0 0.0
    %3835 = vmatpush1.xpose.msra.mxu0 0.0
    %3836 = vmatprep.subr.mxu0 0.0
    %3837 = vmatpush1.xpose.msra.mxu0 0.0
    %3838 = vmatprep.subr.mxu0 0.0
    %3839 = vmatpush1.xpose.msra.mxu0 0.0
    %3840 = vmatprep.subr.mxu0 0.0
    %3841 = vmatpush1.xpose.msra.mxu0 0.0
    %3842 = vmatprep.subr.mxu0 0.0
    %3843 = vmatpush1.xpose.msra.mxu0 0.0
    %3844 = vmatprep.subr.mxu0 0.0
    %3845 = vmatpush1.xpose.msra.mxu0 0.0
    %3846 = vmatprep.subr.mxu0 0.0
    %3847 = vmatpush1.xpose.msra.mxu0 0.0
    %3848 = vmatprep.subr.mxu0 0.0
    %3849 = vmatpush1.xpose.msra.mxu0 0.0
    %3850 = vmatprep.subr.mxu0 0.0
    %3851 = vmatpush1.xpose.msra.mxu0 0.0
    %3852 = vmatprep.subr.mxu0 0.0
    %3853 = vmatpush1.xpose.msra.mxu0 0.0
    %3854 = vmatprep.subr.mxu0 0.0
    %3855 = vmatpush1.xpose.msra.mxu0 0.0
    %3856 = vmatprep.subr.mxu0 0.0
    %3857 = vmatpush1.xpose.msra.mxu0 0.0
    %3858 = vmatprep.subr.mxu0 0.0
    %3859 = vmatpush1.xpose.msra.mxu0 0.0
    %3860 = vmatprep.subr.mxu0 0.0
    %3861 = vmatpush1.xpose.msra.mxu0 0.0
    %3862 = vmatprep.subr.mxu0 0.0
    %3863 = vmatpush1.xpose.msra.mxu0 %v3830
    %3864 = vmatprep.subr.mxu0 0.0
    %3865 = vmatpush2.xpose.msra.mxu0 0.0
    %3866 = vmatprep.subr.mxu0 0.0
    %3867 = vmatpush2.xpose.msra.mxu0 0.0
    %3868 = vmatprep.subr.mxu0 0.0
    %3869 = vmatpush2.xpose.msra.mxu0 0.0
    %3870 = vmatprep.subr.mxu0 0.0
    %3871 = vmatpush2.xpose.msra.mxu0 0.0
    %3872 = vmatprep.subr.mxu0 0.0
    %3873 = vmatpush2.xpose.msra.mxu0 0.0
    %3874 = vmatprep.subr.mxu0 0.0
    %3875 = vmatpush2.xpose.msra.mxu0 0.0
    %3876 = vmatprep.subr.mxu0 0.0
    %3877 = vmatpush2.xpose.msra.mxu0 0.0
    %3878 = vmatprep.subr.mxu0 0.0
    %3879 = vmatpush2.xpose.msra.mxu0 0.0
    %3880 = vmatprep.subr.mxu0 0.0
    %3881 = vmatpush2.xpose.msra.mxu0 0.0
    %3882 = vmatprep.subr.mxu0 0.0
    %3883 = vmatpush2.xpose.msra.mxu0 0.0
    %3884 = vmatprep.subr.mxu0 0.0
    %3885 = vmatpush2.xpose.msra.mxu0 0.0
    %3886 = vmatprep.subr.mxu0 0.0
    %3887 = vmatpush2.xpose.msra.mxu0 0.0
    %3888 = vmatprep.subr.mxu0 0.0
    %3889 = vmatpush2.xpose.msra.mxu0 0.0
    %3890 = vmatprep.subr.mxu0 0.0
    %3891 = vmatpush2.xpose.msra.mxu0 0.0
    %3892 = vmatprep.subr.mxu0 0.0
    %3893 = vmatpush2.xpose.msra.mxu0 0.0
    %3894 = vmatprep.subr.mxu0 0.0
    %3895 = vmatpush2.xpose.msra.mxu0 0.0
    %3896 = vmatprep.mubr.f32.mxu0 0.0
    %3897 = vmatmul.mubr.f32.gmra.mxu0 %v3828
    %v3898 = vpop.f32.mrf.mxu0
    %v3899 = vadd.f32 0.0, %v3898
    %v3900 = vpop.f32.mrf.mxu0
    %3901 = vdwg.mxu0
    %v3902 = vsel %vm245, %v3899, -inf
    %3903 = vmax.xlane.f32.xlu0 %v3902
    %v3904 = vpop.xlane.xlu0 %3903
    %v3905 = vsub.f32 %v3899, %v3904
    %v3906 = vmul.f32 %v3905, 1.442695
    %v3907 = vpow.pop %v3906
    %v3908 = vsel %vm245, %v3907, 0.0
    %3909 = vadd.xlane.f32.xlu0 %v3908
    %v3910 = vpop.xlane.xlu0 %3909
    %v3911 = vrcp.pop %v3910
    %v3912 = vmul.f32 %v3907, %v3911
    %3913 = vrot.lane.b32.xlu0 %v2389, 80
    %v3914 = vpop.permute.xlu0 %3913
    %v3917 = vsel %vm245, %v3912, 0
    %3919 = vmatprep.subr.mxu0 0.0
    %3920 = vmatpush1.msra.mxu0 0.0
    %3921 = vmatprep.subr.mxu0 0.0
    %3922 = vmatpush1.msra.mxu0 0.0
    %3923 = vmatprep.subr.mxu0 0.0
    %3924 = vmatpush1.msra.mxu0 0.0
    %3925 = vmatprep.subr.mxu0 0.0
    %3926 = vmatpush1.msra.mxu0 0.0
    %3927 = vmatprep.subr.mxu0 0.0
    %3928 = vmatpush1.msra.mxu0 0.0
    %3929 = vmatprep.subr.mxu0 0.0
    %3930 = vmatpush1.msra.mxu0 0.0
    %3931 = vmatprep.subr.mxu0 0.0
    %3932 = vmatpush1.msra.mxu0 0.0
    %3933 = vmatprep.subr.mxu0 0.0
    %3934 = vmatpush1.msra.mxu0 0.0
    %3935 = vmatprep.subr.mxu0 0.0
    %3936 = vmatpush1.msra.mxu0 0.0
    %3937 = vmatprep.subr.mxu0 0.0
    %3938 = vmatpush1.msra.mxu0 0.0
    %3939 = vmatprep.subr.mxu0 0.0
    %3940 = vmatpush1.msra.mxu0 0.0
    %3941 = vmatprep.subr.mxu0 0.0
    %3942 = vmatpush1.msra.mxu0 0.0
    %3943 = vmatprep.subr.mxu0 0.0
    %3944 = vmatpush1.msra.mxu0 0.0
    %3945 = vmatprep.subr.mxu0 0.0
    %3946 = vmatpush1.msra.mxu0 0.0
    %3947 = vmatprep.subr.mxu0 0.0
    %3948 = vmatpush1.msra.mxu0 0.0
    %3949 = vmatprep.subr.mxu0 0.0
    %3950 = vmatpush1.msra.mxu0 %v3914
    %3951 = vmatprep.subr.mxu0 0.0
    %3952 = vmatpush2.msra.mxu0 0.0
    %3953 = vmatprep.subr.mxu0 0.0
    %3954 = vmatpush2.msra.mxu0 0.0
    %3955 = vmatprep.subr.mxu0 0.0
    %3956 = vmatpush2.msra.mxu0 0.0
    %3957 = vmatprep.subr.mxu0 0.0
    %3958 = vmatpush2.msra.mxu0 0.0
    %3959 = vmatprep.subr.mxu0 0.0
    %3960 = vmatpush2.msra.mxu0 0.0
    %3961 = vmatprep.subr.mxu0 0.0
    %3962 = vmatpush2.msra.mxu0 0.0
    %3963 = vmatprep.subr.mxu0 0.0
    %3964 = vmatpush2.msra.mxu0 0.0
    %3965 = vmatprep.subr.mxu0 0.0
    %3966 = vmatpush2.msra.mxu0 0.0
    %3967 = vmatprep.subr.mxu0 0.0
    %3968 = vmatpush2.msra.mxu0 0.0
    %3969 = vmatprep.subr.mxu0 0.0
    %3970 = vmatpush2.msra.mxu0 0.0
    %3971 = vmatprep.subr.mxu0 0.0
    %3972 = vmatpush2.msra.mxu0 0.0
    %3973 = vmatprep.subr.mxu0 0.0
    %3974 = vmatpush2.msra.mxu0 0.0
    %3975 = vmatprep.subr.mxu0 0.0
    %3976 = vmatpush2.msra.mxu0 0.0
    %3977 = vmatprep.subr.mxu0 0.0
    %3978 = vmatpush2.msra.mxu0 0.0
    %3979 = vmatprep.subr.mxu0 0.0
    %3980 = vmatpush2.msra.mxu0 0.0
    %3981 = vmatprep.subr.mxu0 0.0
    %3982 = vmatpush2.msra.mxu0 0.0
    %3983 = vmatprep.mubr.f32.mxu0 0.0
    %3984 = vmatmul.mubr.f32.gmra.mxu0 %v3917
    %v3985 = vpop.f32.mrf.mxu0
    %v3986 = vadd.f32 0.0, %v3985
    %v3987 = vpop.f32.mrf.mxu0
    %3988 = vdwg.mxu0
    %v3990 = vsel %vm245, %v3986, 0
    %3992 = vmatprep.subr.mxu0 0.0
    %3993 = vmatpush1.msra.mxu0 0.0
    %3994 = vmatprep.subr.mxu0 0.0
    %3995 = vmatpush1.msra.mxu0 0.0
    %3996 = vmatprep.subr.mxu0 0.0
    %3997 = vmatpush1.msra.mxu0 0.0
    %3998 = vmatprep.subr.mxu0 0.0
    %3999 = vmatpush1.msra.mxu0 0.0
    %4000 = vmatprep.subr.mxu0 0.0
    %4001 = vmatpush1.msra.mxu0 0.0
    %4002 = vmatprep.subr.mxu0 0.0
    %4003 = vmatpush1.msra.mxu0 0.0
    %4004 = vmatprep.subr.mxu0 0.0
    %4005 = vmatpush1.msra.mxu0 0.0
    %4006 = vmatprep.subr.mxu0 0.0
    %4007 = vmatpush1.msra.mxu0 0.0
    %4008 = vmatprep.subr.mxu0 0.0
    %4009 = vmatpush1.msra.mxu0 0.0
    %4010 = vmatprep.subr.mxu0 0.0
    %4011 = vmatpush1.msra.mxu0 0.0
    %4012 = vmatprep.subr.mxu0 0.0
    %4013 = vmatpush1.msra.mxu0 0.0
    %4014 = vmatprep.subr.mxu0 0.0
    %4015 = vmatpush1.msra.mxu0 0.0
    %4016 = vmatprep.subr.mxu0 0.0
    %4017 = vmatpush1.msra.mxu0 0.0
    %4018 = vmatprep.subr.mxu0 0.0
    %4019 = vmatpush1.msra.mxu0 0.0
    %4020 = vmatprep.subr.mxu0 0.0
    %4021 = vmatpush1.msra.mxu0 0.0
    %4022 = vmatprep.subr.mxu0 0.0
    %4023 = vmatpush1.msra.mxu0 %v2394
    %4024 = vmatprep.subr.mxu0 0.0
    %4025 = vmatpush2.msra.mxu0 0.0
    %4026 = vmatprep.subr.mxu0 0.0
    %4027 = vmatpush2.msra.mxu0 0.0
    %4028 = vmatprep.subr.mxu0 0.0
    %4029 = vmatpush2.msra.mxu0 0.0
    %4030 = vmatprep.subr.mxu0 0.0
    %4031 = vmatpush2.msra.mxu0 0.0
    %4032 = vmatprep.subr.mxu0 0.0
    %4033 = vmatpush2.msra.mxu0 0.0
    %4034 = vmatprep.subr.mxu0 0.0
    %4035 = vmatpush2.msra.mxu0 0.0
    %4036 = vmatprep.subr.mxu0 0.0
    %4037 = vmatpush2.msra.mxu0 0.0
    %4038 = vmatprep.subr.mxu0 0.0
    %4039 = vmatpush2.msra.mxu0 0.0
    %4040 = vmatprep.subr.mxu0 0.0
    %4041 = vmatpush2.msra.mxu0 0.0
    %4042 = vmatprep.subr.mxu0 0.0
    %4043 = vmatpush2.msra.mxu0 0.0
    %4044 = vmatprep.subr.mxu0 0.0
    %4045 = vmatpush2.msra.mxu0 0.0
    %4046 = vmatprep.subr.mxu0 0.0
    %4047 = vmatpush2.msra.mxu0 0.0
    %4048 = vmatprep.subr.mxu0 0.0
    %4049 = vmatpush2.msra.mxu0 0.0
    %4050 = vmatprep.subr.mxu0 0.0
    %4051 = vmatpush2.msra.mxu0 0.0
    %4052 = vmatprep.subr.mxu0 0.0
    %4053 = vmatpush2.msra.mxu0 0.0
    %4054 = vmatprep.subr.mxu0 0.0
    %4055 = vmatpush2.msra.mxu0 0.0
    %4056 = vmatprep.mubr.f32.mxu0 0.0
    %4057 = vmatmul.mubr.f32.gmra.mxu0 %v3990
    %v4058 = vpop.f32.mrf.mxu0
    %v4059 = vadd.f32 0.0, %v4058
    %v4060 = vpop.f32.mrf.mxu0
    %4061 = vdwg.mxu0
    %v4062 = vadd.f32 %v3821, %v4059
    %4063 = vrot.lane.b32.xlu0 %v3349, 104
    %v4064 = vpop.permute.xlu0 %4063
    %4065 = vrot.lane.b32.xlu0 %v2389, 104
    %v4066 = vpop.permute.xlu0 %4065
    %v4067 = vsel %vm245, %v4064, 0
    %v4069 = vsel %vm245, %v4066, 0
    %4071 = vmatprep.subr.mxu0 0.0
    %4072 = vmatpush1.xpose.msra.mxu0 0.0
    %4073 = vmatprep.subr.mxu0 0.0
    %4074 = vmatpush1.xpose.msra.mxu0 0.0
    %4075 = vmatprep.subr.mxu0 0.0
    %4076 = vmatpush1.xpose.msra.mxu0 0.0
    %4077 = vmatprep.subr.mxu0 0.0
    %4078 = vmatpush1.xpose.msra.mxu0 0.0
    %4079 = vmatprep.subr.mxu0 0.0
    %4080 = vmatpush1.xpose.msra.mxu0 0.0
    %4081 = vmatprep.subr.mxu0 0.0
    %4082 = vmatpush1.xpose.msra.mxu0 0.0
    %4083 = vmatprep.subr.mxu0 0.0
    %4084 = vmatpush1.xpose.msra.mxu0 0.0
    %4085 = vmatprep.subr.mxu0 0.0
    %4086 = vmatpush1.xpose.msra.mxu0 0.0
    %4087 = vmatprep.subr.mxu0 0.0
    %4088 = vmatpush1.xpose.msra.mxu0 0.0
    %4089 = vmatprep.subr.mxu0 0.0
    %4090 = vmatpush1.xpose.msra.mxu0 0.0
    %4091 = vmatprep.subr.mxu0 0.0
    %4092 = vmatpush1.xpose.msra.mxu0 0.0
    %4093 = vmatprep.subr.mxu0 0.0
    %4094 = vmatpush1.xpose.msra.mxu0 0.0
    %4095 = vmatprep.subr.mxu0 0.0
    %4096 = vmatpush1.xpose.msra.mxu0 0.0
    %4097 = vmatprep.subr.mxu0 0.0
    %4098 = vmatpush1.xpose.msra.mxu0 0.0
    %4099 = vmatprep.subr.mxu0 0.0
    %4100 = vmatpush1.xpose.msra.mxu0 0.0
    %4101 = vmatprep.subr.mxu0 0.0
    %4102 = vmatpush1.xpose.msra.mxu0 %v4069
    %4103 = vmatprep.subr.mxu0 0.0
    %4104 = vmatpush2.xpose.msra.mxu0 0.0
    %4105 = vmatprep.subr.mxu0 0.0
    %4106 = vmatpush2.xpose.msra.mxu0 0.0
    %4107 = vmatprep.subr.mxu0 0.0
    %4108 = vmatpush2.xpose.msra.mxu0 0.0
    %4109 = vmatprep.subr.mxu0 0.0
    %4110 = vmatpush2.xpose.msra.mxu0 0.0
    %4111 = vmatprep.subr.mxu0 0.0
    %4112 = vmatpush2.xpose.msra.mxu0 0.0
    %4113 = vmatprep.subr.mxu0 0.0
    %4114 = vmatpush2.xpose.msra.mxu0 0.0
    %4115 = vmatprep.subr.mxu0 0.0
    %4116 = vmatpush2.xpose.msra.mxu0 0.0
    %4117 = vmatprep.subr.mxu0 0.0
    %4118 = vmatpush2.xpose.msra.mxu0 0.0
    %4119 = vmatprep.subr.mxu0 0.0
    %4120 = vmatpush2.xpose.msra.mxu0 0.0
    %4121 = vmatprep.subr.mxu0 0.0
    %4122 = vmatpush2.xpose.msra.mxu0 0.0
    %4123 = vmatprep.subr.mxu0 0.0
    %4124 = vmatpush2.xpose.msra.mxu0 0.0
    %4125 = vmatprep.subr.mxu0 0.0
    %4126 = vmatpush2.xpose.msra.mxu0 0.0
    %4127 = vmatprep.subr.mxu0 0.0
    %4128 = vmatpush2.xpose.msra.mxu0 0.0
    %4129 = vmatprep.subr.mxu0 0.0
    %4130 = vmatpush2.xpose.msra.mxu0 0.0
    %4131 = vmatprep.subr.mxu0 0.0
    %4132 = vmatpush2.xpose.msra.mxu0 0.0
    %4133 = vmatprep.subr.mxu0 0.0
    %4134 = vmatpush2.xpose.msra.mxu0 0.0
    %4135 = vmatprep.mubr.f32.mxu0 0.0
    %4136 = vmatmul.mubr.f32.gmra.mxu0 %v4067
    %v4137 = vpop.f32.mrf.mxu0
    %v4138 = vadd.f32 0.0, %v4137
    %v4139 = vpop.f32.mrf.mxu0
    %4140 = vdwg.mxu0
    %v4141 = vsel %vm245, %v4138, -inf
    %4142 = vmax.xlane.f32.xlu0 %v4141
    %v4143 = vpop.xlane.xlu0 %4142
    %v4144 = vsub.f32 %v4138, %v4143
    %v4145 = vmul.f32 %v4144, 1.442695
    %v4146 = vpow.pop %v4145
    %v4147 = vsel %vm245, %v4146, 0.0
    %4148 = vadd.xlane.f32.xlu0 %v4147
    %v4149 = vpop.xlane.xlu0 %4148
    %v4150 = vrcp.pop %v4149
    %v4151 = vmul.f32 %v4146, %v4150
    %4152 = vrot.lane.b32.xlu0 %v2389, 72
    %v4153 = vpop.permute.xlu0 %4152
    %v4156 = vsel %vm245, %v4151, 0
    %4158 = vmatprep.subr.mxu0 0.0
    %4159 = vmatpush1.msra.mxu0 0.0
    %4160 = vmatprep.subr.mxu0 0.0
    %4161 = vmatpush1.msra.mxu0 0.0
    %4162 = vmatprep.subr.mxu0 0.0
    %4163 = vmatpush1.msra.mxu0 0.0
    %4164 = vmatprep.subr.mxu0 0.0
    %4165 = vmatpush1.msra.mxu0 0.0
    %4166 = vmatprep.subr.mxu0 0.0
    %4167 = vmatpush1.msra.mxu0 0.0
    %4168 = vmatprep.subr.mxu0 0.0
    %4169 = vmatpush1.msra.mxu0 0.0
    %4170 = vmatprep.subr.mxu0 0.0
    %4171 = vmatpush1.msra.mxu0 0.0
    %4172 = vmatprep.subr.mxu0 0.0
    %4173 = vmatpush1.msra.mxu0 0.0
    %4174 = vmatprep.subr.mxu0 0.0
    %4175 = vmatpush1.msra.mxu0 0.0
    %4176 = vmatprep.subr.mxu0 0.0
    %4177 = vmatpush1.msra.mxu0 0.0
    %4178 = vmatprep.subr.mxu0 0.0
    %4179 = vmatpush1.msra.mxu0 0.0
    %4180 = vmatprep.subr.mxu0 0.0
    %4181 = vmatpush1.msra.mxu0 0.0
    %4182 = vmatprep.subr.mxu0 0.0
    %4183 = vmatpush1.msra.mxu0 0.0
    %4184 = vmatprep.subr.mxu0 0.0
    %4185 = vmatpush1.msra.mxu0 0.0
    %4186 = vmatprep.subr.mxu0 0.0
    %4187 = vmatpush1.msra.mxu0 0.0
    %4188 = vmatprep.subr.mxu0 0.0
    %4189 = vmatpush1.msra.mxu0 %v4153
    %4190 = vmatprep.subr.mxu0 0.0
    %4191 = vmatpush2.msra.mxu0 0.0
    %4192 = vmatprep.subr.mxu0 0.0
    %4193 = vmatpush2.msra.mxu0 0.0
    %4194 = vmatprep.subr.mxu0 0.0
    %4195 = vmatpush2.msra.mxu0 0.0
    %4196 = vmatprep.subr.mxu0 0.0
    %4197 = vmatpush2.msra.mxu0 0.0
    %4198 = vmatprep.subr.mxu0 0.0
    %4199 = vmatpush2.msra.mxu0 0.0
    %4200 = vmatprep.subr.mxu0 0.0
    %4201 = vmatpush2.msra.mxu0 0.0
    %4202 = vmatprep.subr.mxu0 0.0
    %4203 = vmatpush2.msra.mxu0 0.0
    %4204 = vmatprep.subr.mxu0 0.0
    %4205 = vmatpush2.msra.mxu0 0.0
    %4206 = vmatprep.subr.mxu0 0.0
    %4207 = vmatpush2.msra.mxu0 0.0
    %4208 = vmatprep.subr.mxu0 0.0
    %4209 = vmatpush2.msra.mxu0 0.0
    %4210 = vmatprep.subr.mxu0 0.0
    %4211 = vmatpush2.msra.mxu0 0.0
    %4212 = vmatprep.subr.mxu0 0.0
    %4213 = vmatpush2.msra.mxu0 0.0
    %4214 = vmatprep.subr.mxu0 0.0
    %4215 = vmatpush2.msra.mxu0 0.0
    %4216 = vmatprep.subr.mxu0 0.0
    %4217 = vmatpush2.msra.mxu0 0.0
    %4218 = vmatprep.subr.mxu0 0.0
    %4219 = vmatpush2.msra.mxu0 0.0
    %4220 = vmatprep.subr.mxu0 0.0
    %4221 = vmatpush2.msra.mxu0 0.0
    %4222 = vmatprep.mubr.f32.mxu0 0.0
    %4223 = vmatmul.mubr.f32.gmra.mxu0 %v4156
    %v4224 = vpop.f32.mrf.mxu0
    %v4225 = vadd.f32 0.0, %v4224
    %v4226 = vpop.f32.mrf.mxu0
    %4227 = vdwg.mxu0
    %v4229 = vsel %vm245, %v4225, 0
    %4231 = vmatprep.subr.mxu0 0.0
    %4232 = vmatpush1.msra.mxu0 0.0
    %4233 = vmatprep.subr.mxu0 0.0
    %4234 = vmatpush1.msra.mxu0 0.0
    %4235 = vmatprep.subr.mxu0 0.0
    %4236 = vmatpush1.msra.mxu0 0.0
    %4237 = vmatprep.subr.mxu0 0.0
    %4238 = vmatpush1.msra.mxu0 0.0
    %4239 = vmatprep.subr.mxu0 0.0
    %4240 = vmatpush1.msra.mxu0 0.0
    %4241 = vmatprep.subr.mxu0 0.0
    %4242 = vmatpush1.msra.mxu0 0.0
    %4243 = vmatprep.subr.mxu0 0.0
    %4244 = vmatpush1.msra.mxu0 0.0
    %4245 = vmatprep.subr.mxu0 0.0
    %4246 = vmatpush1.msra.mxu0 0.0
    %4247 = vmatprep.subr.mxu0 0.0
    %4248 = vmatpush1.msra.mxu0 0.0
    %4249 = vmatprep.subr.mxu0 0.0
    %4250 = vmatpush1.msra.mxu0 0.0
    %4251 = vmatprep.subr.mxu0 0.0
    %4252 = vmatpush1.msra.mxu0 0.0
    %4253 = vmatprep.subr.mxu0 0.0
    %4254 = vmatpush1.msra.mxu0 0.0
    %4255 = vmatprep.subr.mxu0 0.0
    %4256 = vmatpush1.msra.mxu0 0.0
    %4257 = vmatprep.subr.mxu0 0.0
    %4258 = vmatpush1.msra.mxu0 0.0
    %4259 = vmatprep.subr.mxu0 0.0
    %4260 = vmatpush1.msra.mxu0 0.0
    %4261 = vmatprep.subr.mxu0 0.0
    %4262 = vmatpush1.msra.mxu0 %v2395
    %4263 = vmatprep.subr.mxu0 0.0
    %4264 = vmatpush2.msra.mxu0 0.0
    %4265 = vmatprep.subr.mxu0 0.0
    %4266 = vmatpush2.msra.mxu0 0.0
    %4267 = vmatprep.subr.mxu0 0.0
    %4268 = vmatpush2.msra.mxu0 0.0
    %4269 = vmatprep.subr.mxu0 0.0
    %4270 = vmatpush2.msra.mxu0 0.0
    %4271 = vmatprep.subr.mxu0 0.0
    %4272 = vmatpush2.msra.mxu0 0.0
    %4273 = vmatprep.subr.mxu0 0.0
    %4274 = vmatpush2.msra.mxu0 0.0
    %4275 = vmatprep.subr.mxu0 0.0
    %4276 = vmatpush2.msra.mxu0 0.0
    %4277 = vmatprep.subr.mxu0 0.0
    %4278 = vmatpush2.msra.mxu0 0.0
    %4279 = vmatprep.subr.mxu0 0.0
    %4280 = vmatpush2.msra.mxu0 0.0
    %4281 = vmatprep.subr.mxu0 0.0
    %4282 = vmatpush2.msra.mxu0 0.0
    %4283 = vmatprep.subr.mxu0 0.0
    %4284 = vmatpush2.msra.mxu0 0.0
    %4285 = vmatprep.subr.mxu0 0.0
    %4286 = vmatpush2.msra.mxu0 0.0
    %4287 = vmatprep.subr.mxu0 0.0
    %4288 = vmatpush2.msra.mxu0 0.0
    %4289 = vmatprep.subr.mxu0 0.0
    %4290 = vmatpush2.msra.mxu0 0.0
    %4291 = vmatprep.subr.mxu0 0.0
    %4292 = vmatpush2.msra.mxu0 0.0
    %4293 = vmatprep.subr.mxu0 0.0
    %4294 = vmatpush2.msra.mxu0 0.0
    %4295 = vmatprep.mubr.f32.mxu0 0.0
    %4296 = vmatmul.mubr.f32.gmra.mxu0 %v4229
    %v4297 = vpop.f32.mrf.mxu0
    %v4298 = vadd.f32 0.0, %v4297
    %v4299 = vpop.f32.mrf.mxu0
    %4300 = vdwg.mxu0
    %v4301 = vadd.f32 %v4062, %v4298
    %v4302 = vld [vmem:[%s11] sm:$0x1]
    %v4304 = vlaneseq
    %v4305 = vshrl.u32 %v4304, 7
    %v4306 = vsub.s32 0, %v4305
    %v4307 = vrot.slane %v4302, %v4306
    %v4309 = vadd.f32 %v3348, %v4307
    %v4310 = vadd.f32 %v4301, %v4307
    %v4311 = vadd.f32 %v2206, %v4309
    %v4312 = vadd.f32 %v2207, %v4310
    %v4313 = vld [vmem:[%s18] sm:$0x1]
    %v4314 = vld [vmem:[%s19] sm:$0x1]
    %v4315 = vsel %vm155, %v4311, 0.0
    %4316 = vadd.xlane.f32.xlu0 %v4315
    %v4317 = vpop.xlane.xlu0 %4316
    %v4318 = vsel %vm155, %v4312, 0.0
    %4319 = vadd.xlane.f32.xlu0 %v4318
    %v4320 = vpop.xlane.xlu0 %4319
    %v4321 = vmul.f32 %v4317, %v2171
    %v4322 = vmul.f32 %v4320, %v2171
    %v4323 = vsub.f32 %v4311, %v4321
    %v4324 = vsub.f32 %v4312, %v4322
    %v4325 = vmul.f32 %v4323, %v4323
    %v4326 = vmul.f32 %v4324, %v4324
    %v4327 = vsel %vm155, %v4325, 0.0
    %4328 = vadd.xlane.f32.xlu0 %v4327
    %v4329 = vpop.xlane.xlu0 %4328
    %v4330 = vsel %vm155, %v4326, 0.0
    %4331 = vadd.xlane.f32.xlu0 %v4330
    %v4332 = vpop.xlane.xlu0 %4331
    %v4333 = vmul.f32 %v4329, %v2171
    %v4334 = vmul.f32 %v4332, %v2171
    %v4335 = vadd.f32 %v4333, 1e-05
    %v4336 = vadd.f32 %v4334, 1e-05
    %v4337 = vrsqrt.pop %v4335
    %v4338 = vrsqrt.pop %v4336
    %v4339 = vmul.f32 %v4323, %v4337
    %v4340 = vmul.f32 %v4324, %v4338
    %v4342 = vlaneseq
    %v4343 = vshrl.u32 %v4342, 7
    %v4344 = vsub.s32 0, %v4343
    %v4345 = vrot.slane %v4313, %v4344
    %v4347 = vmul.f32 %v4339, %v4345
    %v4348 = vmul.f32 %v4340, %v4345
    %v4350 = vlaneseq
    %v4351 = vshrl.u32 %v4350, 7
    %v4352 = vsub.s32 0, %v4351
    %v4353 = vrot.slane %v4314, %v4352
    %v4355 = vadd.f32 %v4347, %v4353
    %v4356 = vadd.f32 %v4348, %v4353
    %v4357 = vld [vmem:[#allocation10] sm:$0xff]
    %v4358 = vld [vmem:[#allocation10 + $0x8] sm:$0xff]
    %v4359 = vld [vmem:[#allocation10 + $0x10] sm:$0xff]
    %v4360 = vld [vmem:[#allocation10 + $0x18] sm:$0xff]
    %v4361 = vld [vmem:[%s13] sm:$0x1]
    %v4363 = vlaneseq
    %v4364 = vshrl.u32 %v4363, 7
    %v4365 = vsub.s32 0, %v4364
    %v4366 = vrot.slane %v4361, %v4365
    %v4369 = vsel %vm155, %v4355, 0
    %v4372 = vsel %vm155, %v4356, 0
    %4374 = vmatprep.subr.mxu0 0.0
    %4375 = vmatpush1.msra.mxu0 0.0
    %4376 = vmatprep.subr.mxu0 0.0
    %4377 = vmatpush1.msra.mxu0 0.0
    %4378 = vmatprep.subr.mxu0 0.0
    %4379 = vmatpush1.msra.mxu0 0.0
    %4380 = vmatprep.subr.mxu0 0.0
    %4381 = vmatpush1.msra.mxu0 0.0
    %4382 = vmatprep.subr.mxu0 0.0
    %4383 = vmatpush1.msra.mxu0 0.0
    %4384 = vmatprep.subr.mxu0 0.0
    %4385 = vmatpush1.msra.mxu0 0.0
    %4386 = vmatprep.subr.mxu0 0.0
    %4387 = vmatpush1.msra.mxu0 0.0
    %4388 = vmatprep.subr.mxu0 0.0
    %4389 = vmatpush1.msra.mxu0 0.0
    %4390 = vmatprep.subr.mxu0 0.0
    %4391 = vmatpush1.msra.mxu0 0.0
    %4392 = vmatprep.subr.mxu0 0.0
    %4393 = vmatpush1.msra.mxu0 0.0
    %4394 = vmatprep.subr.mxu0 0.0
    %4395 = vmatpush1.msra.mxu0 0.0
    %4396 = vmatprep.subr.mxu0 0.0
    %4397 = vmatpush1.msra.mxu0 0.0
    %4398 = vmatprep.subr.mxu0 0.0
    %4399 = vmatpush1.msra.mxu0 %v4360
    %4400 = vmatprep.subr.mxu0 0.0
    %4401 = vmatpush1.msra.mxu0 %v4359
    %4402 = vmatprep.subr.mxu0 0.0
    %4403 = vmatpush1.msra.mxu0 %v4358
    %4404 = vmatprep.subr.mxu0 0.0
    %4405 = vmatpush1.msra.mxu0 %v4357
    %4406 = vmatprep.subr.mxu0 0.0
    %4407 = vmatpush2.msra.mxu0 0.0
    %4408 = vmatprep.subr.mxu0 0.0
    %4409 = vmatpush2.msra.mxu0 0.0
    %4410 = vmatprep.subr.mxu0 0.0
    %4411 = vmatpush2.msra.mxu0 0.0
    %4412 = vmatprep.subr.mxu0 0.0
    %4413 = vmatpush2.msra.mxu0 0.0
    %4414 = vmatprep.subr.mxu0 0.0
    %4415 = vmatpush2.msra.mxu0 0.0
    %4416 = vmatprep.subr.mxu0 0.0
    %4417 = vmatpush2.msra.mxu0 0.0
    %4418 = vmatprep.subr.mxu0 0.0
    %4419 = vmatpush2.msra.mxu0 0.0
    %4420 = vmatprep.subr.mxu0 0.0
    %4421 = vmatpush2.msra.mxu0 0.0
    %4422 = vmatprep.subr.mxu0 0.0
    %4423 = vmatpush2.msra.mxu0 0.0
    %4424 = vmatprep.subr.mxu0 0.0
    %4425 = vmatpush2.msra.mxu0 0.0
    %4426 = vmatprep.subr.mxu0 0.0
    %4427 = vmatpush2.msra.mxu0 0.0
    %4428 = vmatprep.subr.mxu0 0.0
    %4429 = vmatpush2.msra.mxu0 0.0
    %4430 = vmatprep.subr.mxu0 0.0
    %4431 = vmatpush2.msra.mxu0 0.0
    %4432 = vmatprep.subr.mxu0 0.0
    %4433 = vmatpush2.msra.mxu0 0.0
    %4434 = vmatprep.subr.mxu0 0.0
    %4435 = vmatpush2.msra.mxu0 0.0
    %4436 = vmatprep.subr.mxu0 0.0
    %4437 = vmatpush2.msra.mxu0 0.0
    %4438 = vmatprep.mubr.f32.mxu0 0.0
    %4439 = vmatmul.mubr.f32.gmra.mxu0 %v4369
    %v4440 = vpop.f32.mrf.mxu0
    %v4441 = vadd.f32 %v4366, %v4440
    %v4442 = vpop.f32.mrf.mxu0
    %4443 = vmatprep.mubr.f32.mxu0 0.0
    %4444 = vmatmul.mubr.f32.gmra.mxu0 %v4372
    %v4445 = vpop.f32.mrf.mxu0
    %v4446 = vadd.f32 %v4366, %v4445
    %v4447 = vpop.f32.mrf.mxu0
    %4448 = vdwg.mxu0
    %v4449 = vmax.f32 %v4441, 0.0
    %v4450 = vmax.f32 %v4446, 0.0
    %v4451 = vld [vmem:[%s14] sm:$0xff]
    %v4452 = vld [vmem:[%s14 + $0x8] sm:$0xff]
    %v4453 = vld [vmem:[%s14 + $0x10] sm:$0xff]
    %v4454 = vld [vmem:[%s14 + $0x18] sm:$0xff]
    %v4455 = vld [vmem:[%s14 + $0x20] sm:$0xff]
    %v4456 = vld [vmem:[%s14 + $0x28] sm:$0xff]
    %v4457 = vld [vmem:[%s14 + $0x30] sm:$0xff]
    %v4458 = vld [vmem:[%s14 + $0x38] sm:$0xff]
    %v4459 = vld [vmem:[%s15] sm:$0x1]
    %v4461 = vlaneseq
    %v4462 = vshrl.u32 %v4461, 7
    %v4463 = vsub.s32 0, %v4462
    %v4464 = vrot.slane %v4459, %v4463
    %vm4466 = vcmask 523264
    %v4468 = vsel %vm4466, %v4449, 0
    %v4471 = vsel %vm4466, %v4450, 0
    %4473 = vmatprep.subr.mxu0 0.0
    %4474 = vmatpush1.msra.mxu0 0.0
    %4475 = vmatprep.subr.mxu0 0.0
    %4476 = vmatpush1.msra.mxu0 0.0
    %4477 = vmatprep.subr.mxu0 0.0
    %4478 = vmatpush1.msra.mxu0 0.0
    %4479 = vmatprep.subr.mxu0 0.0
    %4480 = vmatpush1.msra.mxu0 0.0
    %4481 = vmatprep.subr.mxu0 0.0
    %4482 = vmatpush1.msra.mxu0 0.0
    %4483 = vmatprep.subr.mxu0 0.0
    %4484 = vmatpush1.msra.mxu0 0.0
    %4485 = vmatprep.subr.mxu0 0.0
    %4486 = vmatpush1.msra.mxu0 0.0
    %4487 = vmatprep.subr.mxu0 0.0
    %4488 = vmatpush1.msra.mxu0 0.0
    %4489 = vmatprep.subr.mxu0 0.0
    %4490 = vmatpush1.msra.mxu0 %v4458
    %4491 = vmatprep.subr.mxu0 0.0
    %4492 = vmatpush1.msra.mxu0 %v4457
    %4493 = vmatprep.subr.mxu0 0.0
    %4494 = vmatpush1.msra.mxu0 %v4456
    %4495 = vmatprep.subr.mxu0 0.0
    %4496 = vmatpush1.msra.mxu0 %v4455
    %4497 = vmatprep.subr.mxu0 0.0
    %4498 = vmatpush1.msra.mxu0 %v4454
    %4499 = vmatprep.subr.mxu0 0.0
    %4500 = vmatpush1.msra.mxu0 %v4453
    %4501 = vmatprep.subr.mxu0 0.0
    %4502 = vmatpush1.msra.mxu0 %v4452
    %4503 = vmatprep.subr.mxu0 0.0
    %4504 = vmatpush1.msra.mxu0 %v4451
    %4505 = vmatprep.subr.mxu0 0.0
    %4506 = vmatpush2.msra.mxu0 0.0
    %4507 = vmatprep.subr.mxu0 0.0
    %4508 = vmatpush2.msra.mxu0 0.0
    %4509 = vmatprep.subr.mxu0 0.0
    %4510 = vmatpush2.msra.mxu0 0.0
    %4511 = vmatprep.subr.mxu0 0.0
    %4512 = vmatpush2.msra.mxu0 0.0
    %4513 = vmatprep.subr.mxu0 0.0
    %4514 = vmatpush2.msra.mxu0 0.0
    %4515 = vmatprep.subr.mxu0 0.0
    %4516 = vmatpush2.msra.mxu0 0.0
    %4517 = vmatprep.subr.mxu0 0.0
    %4518 = vmatpush2.msra.mxu0 0.0
    %4519 = vmatprep.subr.mxu0 0.0
    %4520 = vmatpush2.msra.mxu0 0.0
    %4521 = vmatprep.subr.mxu0 0.0
    %4522 = vmatpush2.msra.mxu0 0.0
    %4523 = vmatprep.subr.mxu0 0.0
    %4524 = vmatpush2.msra.mxu0 0.0
    %4525 = vmatprep.subr.mxu0 0.0
    %4526 = vmatpush2.msra.mxu0 0.0
    %4527 = vmatprep.subr.mxu0 0.0
    %4528 = vmatpush2.msra.mxu0 0.0
    %4529 = vmatprep.subr.mxu0 0.0
    %4530 = vmatpush2.msra.mxu0 0.0
    %4531 = vmatprep.subr.mxu0 0.0
    %4532 = vmatpush2.msra.mxu0 0.0
    %4533 = vmatprep.subr.mxu0 0.0
    %4534 = vmatpush2.msra.mxu0 0.0
    %4535 = vmatprep.subr.mxu0 0.0
    %4536 = vmatpush2.msra.mxu0 0.0
    %4537 = vmatprep.mubr.f32.mxu0 0.0
    %4538 = vmatmul.mubr.f32.gmra.mxu0 %v4468
    %v4539 = vpop.f32.mrf.mxu0
    %v4540 = vadd.f32 %v4464, %v4539
    %v4541 = vpop.f32.mrf.mxu0
    %4542 = vmatprep.mubr.f32.mxu0 0.0
    %4543 = vmatmul.mubr.f32.gmra.mxu0 %v4471
    %v4544 = vpop.f32.mrf.mxu0
    %v4545 = vadd.f32 %v4464, %v4544
    %v4546 = vpop.f32.mrf.mxu0
    %4547 = vdwg.mxu0
    %v4548 = vadd.f32 %v4355, %v4540
    %v4549 = vadd.f32 %v4356, %v4545
    %v4550 = vld [vmem:[%s20] sm:$0x1]
    %v4551 = vld [vmem:[%s21] sm:$0x1]
    %v4552 = vsel %vm155, %v4548, 0.0
    %4553 = vadd.xlane.f32.xlu0 %v4552
    %v4554 = vpop.xlane.xlu0 %4553
    %v4555 = vsel %vm155, %v4549, 0.0
    %4556 = vadd.xlane.f32.xlu0 %v4555
    %v4557 = vpop.xlane.xlu0 %4556
    %v4558 = vmul.f32 %v4554, %v2171
    %v4559 = vmul.f32 %v4557, %v2171
    %v4560 = vsub.f32 %v4548, %v4558
    %v4561 = vsub.f32 %v4549, %v4559
    %v4562 = vmul.f32 %v4560, %v4560
    %v4563 = vmul.f32 %v4561, %v4561
    %v4564 = vsel %vm155, %v4562, 0.0
    %4565 = vadd.xlane.f32.xlu0 %v4564
    %v4566 = vpop.xlane.xlu0 %4565
    %v4567 = vsel %vm155, %v4563, 0.0
    %4568 = vadd.xlane.f32.xlu0 %v4567
    %v4569 = vpop.xlane.xlu0 %4568
    %v4570 = vmul.f32 %v4566, %v2171
    %v4571 = vmul.f32 %v4569, %v2171
    %v4572 = vadd.f32 %v4570, 1e-05
    %v4573 = vadd.f32 %v4571, 1e-05
    %v4574 = vrsqrt.pop %v4572
    %v4575 = vrsqrt.pop %v4573
    %v4576 = vmul.f32 %v4560, %v4574
    %v4577 = vmul.f32 %v4561, %v4575
    %v4579 = vlaneseq
    %v4580 = vshrl.u32 %v4579, 7
    %v4581 = vsub.s32 0, %v4580
    %v4582 = vrot.slane %v4550, %v4581
    %v4584 = vmul.f32 %v4576, %v4582
    %v4585 = vmul.f32 %v4577, %v4582
    %v4587 = vlaneseq
    %v4588 = vshrl.u32 %v4587, 7
    %v4589 = vsub.s32 0, %v4588
    %v4590 = vrot.slane %v4551, %v4589
    %v4592 = vadd.f32 %v4584, %v4590
    %v4593 = vadd.f32 %v4585, %v4590
    %4594 = vst.msk [vmem:[#allocation11] sm:$0xff] %vm155, %v4592
    %4595 = vst.msk [vmem:[#allocation11 + $0x8] sm:$0xff] %vm155, %v4593
    // Predicated region
    $region110: #{tpu_custom_call.1} parent=1 // pred_check
      _
    $region111: #{tpu_custom_call.1} parent=1 // pred_check_branch
      %4597 = sbr.rel (0) target = $region113
    $region112: #{tpu_custom_call.1} parent=1 // pred_region
      %s4599 = ssub.s32 256, 256
      %4600 = vsyncadd [#allocation4], %s4599
      %s4601 = sshll.u32 [#allocation11], 4
      %s4602 = int_to_ptr.vmem [resolvable:$true] %s4601
      %4607 = dma.vmem_to_hbm [thread:$0]  %s4602, 256, %s22, [#allocation4], 128, 128, 8
    $region113: #{tpu_custom_call.1} parent=1 // pred_fallthru
      _
    // Predicated region
    $region114: #{tpu_custom_call.1} parent=1 // pred_check
      _
    $region115: #{tpu_custom_call.1} parent=1 // pred_check_branch
      %4609 = sbr.rel (0) target = $region117
    $region116: #{tpu_custom_call.1} parent=1 // pred_region
      %4610 = dma.done [#allocation4], 256
    $region117: #{tpu_custom_call.1} parent=1 // pred_fallthru
      _
    %4611 = vsyncpa [#allocation3], 1
    %4612 = vsyncpa [#allocation6], 1
    %4613 = vsyncpa [#allocation9], 1
    %4614 = vsyncpa [#allocation4], 1

</llo_original>
